<compile_context>
chip_gen: v7x
topology: tpu7x:2x2x1
jax: 0.10.0
libtpu: 0.0.40
codegen_flags: <defaults>
</compile_context>

<pallas_src>
import jax
import jax.numpy as jnp
from jax.experimental import pallas as pl
from jax.experimental.pallas import tpu as pltpu


def _round_up(x, m):
    return (x + m - 1) // m * m


# ---------------------------------------------------------------------------
# Kernels
# ---------------------------------------------------------------------------
def _conv1_pool_kernel(p_ref, w_ref, b_ref, o_ref):
    # p_ref: [4, TM, 32] bf16  pool-offset-grouped im2col patches (K=25 -> 32)
    # w_ref: [32, 8]    bf16  conv1 weights (6 out channels padded to 8)
    # b_ref: [1, 8]     f32   bias
    # o_ref: [TM, 8]    bf16  pooled conv1 output, rows = (b, ph, pw)
    tm = p_ref.shape[1]
    p = p_ref[...].reshape(4 * tm, p_ref.shape[2])     # outer-dim merge: free
    z = jnp.dot(p, w_ref[...], preferred_element_type=jnp.float32)
    m = jnp.maximum(jnp.maximum(z[0 * tm:1 * tm], z[1 * tm:2 * tm]),
                    jnp.maximum(z[2 * tm:3 * tm], z[3 * tm:4 * tm]))
    # relu(max_i(y_i) + b) == pool(relu(conv + b)) since bias is shared.
    o_ref[...] = jnp.maximum(m + b_ref[...], 0.0).astype(o_ref.dtype)


def _conv2_fc_kernel(p_ref, w2_ref, b2_ref, w3_ref, b3_ref, w4_ref, b4_ref,
                     w5_ref, b5_ref, o_ref):
    # p_ref : [4, TB, 2400] bf16  pool-grouped conv2 patches, one row per image
    # w2_ref: [2400, 256]   bf16  block-diagonal conv2 weight; column order is
    #                             oc*16 + ph*4 + pw == PyTorch flatten order
    # b2_ref: [1, 256] f32 ; w3/w4/w5 bf16 padded ; b3/b4/b5 f32
    # o_ref : [TB, 128] f32  (logits in lanes 0..9)
    tb = p_ref.shape[1]
    p = p_ref[...].reshape(4 * tb, p_ref.shape[2])     # outer-dim merge: free
    z = jnp.dot(p, w2_ref[...], preferred_element_type=jnp.float32)
    m = jnp.maximum(jnp.maximum(z[0 * tb:1 * tb], z[1 * tb:2 * tb]),
                    jnp.maximum(z[2 * tb:3 * tb], z[3 * tb:4 * tb]))
    x = jnp.maximum(m + b2_ref[...], 0.0)              # == flattened fc1 input
    h = jnp.dot(x.astype(jnp.bfloat16), w3_ref[...],
                preferred_element_type=jnp.float32)
    h = jnp.maximum(h + b3_ref[...], 0.0)
    h = jnp.dot(h.astype(jnp.bfloat16), w4_ref[...],
                preferred_element_type=jnp.float32)
    h = jnp.maximum(h + b4_ref[...], 0.0)
    o = jnp.dot(h.astype(jnp.bfloat16), w5_ref[...],
                preferred_element_type=jnp.float32)
    o_ref[...] = o + b5_ref[...]


# ---------------------------------------------------------------------------
# Wrappers
# ---------------------------------------------------------------------------
def conv1_pool_pallas(patches, w1mat, b1row, *, tm_max=1024):
    """Fused conv1 + bias + ReLU + 2x2 maxpool.  patches: [4, M, 32] bf16."""
    _, M, Kp = patches.shape
    # >=4 grid steps when possible (v7x megacore + pipelining), 16-row aligned.
    TM = min(tm_max, max(16, _round_up(-(-M // 4), 16)))
    Mp = _round_up(M, TM)
    if Mp != M:
        patches = jnp.pad(patches, ((0, 0), (0, Mp - M), (0, 0)))
    out = pl.pallas_call(
        _conv1_pool_kernel,
        out_shape=jax.ShapeDtypeStruct((Mp, 8), jnp.bfloat16),
        grid=(Mp // TM,),
        in_specs=[
            pl.BlockSpec((4, TM, Kp), lambda i: (0, i, 0)),
            pl.BlockSpec((Kp, 8), lambda i: (0, 0)),      # resident weights
            pl.BlockSpec((1, 8), lambda i: (0, 0)),       # resident bias
        ],
        out_specs=pl.BlockSpec((TM, 8), lambda i: (i, 0)),
        compiler_params=pltpu.CompilerParams(
            dimension_semantics=("parallel",),
            vmem_limit_bytes=32 * 1024 * 1024),
        cost_estimate=pl.CostEstimate(
            flops=2 * 4 * Mp * Kp * 8, transcendentals=0,
            bytes_accessed=2 * 4 * Mp * Kp + 2 * Kp * 8 + 2 * Mp * 8),
    )(patches, w1mat, b1row)
    return out[:M]


def conv2_fc_pallas(patches2, w2bd, b2row, w3p, b3row, w4p, b4row, w5p, b5row,
                    *, tb_max=128):
    """Fused conv2 + bias + ReLU + pool + flatten + fc1 + fc2 + fc3."""
    _, B, K2 = patches2.shape
    TB = min(tb_max, max(16, _round_up(-(-B // 4), 16)))
    Bp = _round_up(B, TB)
    if Bp != B:
        patches2 = jnp.pad(patches2, ((0, 0), (0, Bp - B), (0, 0)))
    out = pl.pallas_call(
        _conv2_fc_kernel,
        out_shape=jax.ShapeDtypeStruct((Bp, 128), jnp.float32),
        grid=(Bp // TB,),
        in_specs=[
            pl.BlockSpec((4, TB, K2), lambda i: (0, i, 0)),
            pl.BlockSpec((K2, 256), lambda i: (0, 0)),    # resident weights
            pl.BlockSpec((1, 256), lambda i: (0, 0)),
            pl.BlockSpec((256, 128), lambda i: (0, 0)),
            pl.BlockSpec((1, 128), lambda i: (0, 0)),
            pl.BlockSpec((128, 128), lambda i: (0, 0)),
            pl.BlockSpec((1, 128), lambda i: (0, 0)),
            pl.BlockSpec((128, 128), lambda i: (0, 0)),
            pl.BlockSpec((1, 128), lambda i: (0, 0)),
        ],
        out_specs=pl.BlockSpec((TB, 128), lambda i: (i, 0)),
        compiler_params=pltpu.CompilerParams(
            dimension_semantics=("parallel",),
            vmem_limit_bytes=32 * 1024 * 1024),
        cost_estimate=pl.CostEstimate(
            flops=2 * Bp * (4 * K2 * 256 + 256 * 128 + 2 * 128 * 128),
            transcendentals=0,
            bytes_accessed=2 * 4 * Bp * K2 + 2 * K2 * 256 + 4 * Bp * 128),
    )(patches2, w2bd, b2row, w3p, b3row, w4p, b4row, w5p, b5row)
    return out[:B, :10]


# ---------------------------------------------------------------------------
# Parameter init (PyTorch-style uniform(+-1/sqrt(fan_in))) and one-time prep
# ---------------------------------------------------------------------------
def init_lenet5_params(key):
    ks = jax.random.split(key, 10)

    def u(k, shape, fan_in):
        b = 1.0 / jnp.sqrt(jnp.float32(fan_in))
        return jax.random.uniform(k, shape, jnp.float32, -b, b)

    return {
        "w1": u(ks[0], (6, 1, 5, 5), 25), "b1": u(ks[1], (6,), 25),
        "w2": u(ks[2], (16, 6, 5, 5), 150), "b2": u(ks[3], (16,), 150),
        "w3": u(ks[4], (256, 120), 256), "b3": u(ks[5], (120,), 256),  # [in,out]
        "w4": u(ks[6], (120, 84), 120), "b4": u(ks[7], (84,), 120),
        "w5": u(ks[8], (84, 10), 84), "b5": u(ks[9], (10,), 84),
    }


def prepare_lenet5_params(p):
    """One-time weight prep: pad / reorder / block-diagonalise / cast to bf16."""
    f32, bf16 = jnp.float32, jnp.bfloat16
    # conv1: [6,1,5,5] -> [25,6] -> padded [32,8]
    w1mat = jnp.zeros((32, 8), f32).at[:25, :6].set(p["w1"].reshape(6, 25).T)
    b1row = jnp.zeros((1, 8), f32).at[0, :6].set(p["b1"])
    # conv2 block-diagonal over the 4x4 pooled output positions:
    #   rows j2 = (ph*4+pw)*150 + (ki*5+kj)*6 + c
    #   cols n  = oc*16 + ph*4 + pw   (== PyTorch NCHW flatten order)
    oc, ph, pw, ki, kj, c = jnp.meshgrid(
        jnp.arange(16), jnp.arange(4), jnp.arange(4),
        jnp.arange(5), jnp.arange(5), jnp.arange(6), indexing="ij")
    j2 = (ph * 4 + pw) * 150 + (ki * 5 + kj) * 6 + c
    n = oc * 16 + ph * 4 + pw
    vals = p["w2"][oc, c, ki, kj]
    w2bd = jnp.zeros((2400, 256), f32).at[j2.ravel(), n.ravel()].set(vals.ravel())
    b2row = jnp.repeat(p["b2"], 16).reshape(1, 256)
    # FC stack padded to 128 lanes; fc1 rows already match the flatten order.
    w3p = jnp.zeros((256, 128), f32).at[:, :120].set(p["w3"])
    b3row = jnp.zeros((1, 128), f32).at[0, :120].set(p["b3"])
    w4p = jnp.zeros((128, 128), f32).at[:120, :84].set(p["w4"])
    b4row = jnp.zeros((1, 128), f32).at[0, :84].set(p["b4"])
    w5p = jnp.zeros((128, 128), f32).at[:84, :10].set(p["w5"])
    b5row = jnp.zeros((1, 128), f32).at[0, :10].set(p["b5"])
    return {
        "w1mat": w1mat.astype(bf16), "b1row": b1row,
        "w2bd": w2bd.astype(bf16), "b2row": b2row,
        "w3p": w3p.astype(bf16), "b3row": b3row,
        "w4p": w4p.astype(bf16), "b4row": b4row,
        "w5p": w5p.astype(bf16), "b5row": b5row,
    }


# ---------------------------------------------------------------------------
# Forward pass (matches PyTorch LeNet5.forward semantics, bf16 matmul operands)
# ---------------------------------------------------------------------------
@jax.jit
def lenet5_forward(prep, x):
    # x: [B, 1, 28, 28] NCHW (C=1 so dropping the channel dim is a pure reshape)
    B = x.shape[0]
    xh = x.reshape(B, 28, 28).astype(jnp.bfloat16)

    # conv1 im2col, grouped by 2x2 pool offset (XLA glue, bf16).
    # TODO(synk): move this gather in-kernel to kill the ~18x read blowup.
    slabs = []
    for dy in range(2):
        for dx in range(2):
            cols = [xh[:, dy + ki:dy + ki + 24:2, dx + kj:dx + kj + 24:2]
                    for ki in range(5) for kj in range(5)]
            s = jnp.stack(cols, axis=-1)                 # [B, 12, 12, 25]
            slabs.append(s.reshape(B * 144, 25))
    patches1 = jnp.pad(jnp.stack(slabs, axis=0), ((0, 0), (0, 0), (0, 7)))

    y1 = conv1_pool_pallas(patches1, prep["w1mat"], prep["b1row"])  # [B*144, 8]
    y1 = y1[:, :6].reshape(B, 12, 12, 6)                 # pooled conv1, NHWC

    # conv2 im2col, grouped by pool offset, block-diagonal row order (XLA glue).
    slabs = []
    for dy in range(2):
        for dx in range(2):
            cols = [y1[:, dy + ki:dy + ki + 8:2, dx + kj:dx + kj + 8:2, :]
                    for ki in range(5) for kj in range(5)]
            s = jnp.stack(cols, axis=3)                  # [B, 4, 4, 25, 6]
            slabs.append(s.reshape(B, 2400))
    patches2 = jnp.stack(slabs, axis=0)                  # [4, B, 2400]

    return conv2_fc_pallas(patches2, prep["w2bd"], prep["b2row"],
                           prep["w3p"], prep["b3row"],
                           prep["w4p"], prep["b4row"],
                           prep["w5p"], prep["b5row"])    # [B, 10]


if __name__ == "__main__":
    key = jax.random.PRNGKey(0)
    pkey, xkey = jax.random.split(key)
    params = init_lenet5_params(pkey)
    prep = prepare_lenet5_params(params)   # one-time weight prep (review #7)
    # LeNet5 implies 1x28x28 inputs (fc1 expects 16*4*4 = 256 features).
    x = jax.random.normal(xkey, (2, 1, 28, 28), jnp.float32)
    out = lenet5_forward(prep, x)
    jax.block_until_ready(out)
    assert out.shape == (2, 10), out.shape
    assert bool(jnp.all(jnp.isfinite(out)))
    print("KERNEL_OK")
</pallas_src>

<mosaic_0001>
module attributes {stable_mosaic.version = 11 : i64} {
  func.func @_conv1_pool_kernel(%arg0: i32, %arg1: memref<4x80x32xbf16, #tpu.memory_space<vmem>>, %arg2: memref<32x8xbf16, #tpu.memory_space<vmem>>, %arg3: memref<1x8xf32, #tpu.memory_space<vmem>>, %arg4: memref<80x8xbf16, #tpu.memory_space<vmem>>) attributes {dimension_semantics = [#tpu.dimension_semantics<parallel>], iteration_bounds = array<i64: 4>, scalar_prefetch = 0 : i64, scratch_operands = 0 : i64, tpu.core_type = #tpu.core_type<tc>, window_params = [{transform_indices = @transform_0, window_bounds = array<i64: 4, 80, 32>}, {pipeline_mode = #tpu.pipeline_mode<synchronous>, transform_indices = @transform_1, window_bounds = array<i64: 32, 8>}, {pipeline_mode = #tpu.pipeline_mode<synchronous>, transform_indices = @transform_2, window_bounds = array<i64: 1, 8>}, {transform_indices = @transform_3, window_bounds = array<i64: 80, 8>}]} {
    %c0 = arith.constant 0 : index
    %c0_0 = arith.constant 0 : index
    %c0_1 = arith.constant 0 : index
    %0 = vector.load %arg1[%c0, %c0_0, %c0_1] : memref<4x80x32xbf16, #tpu.memory_space<vmem>>, vector<4x80x32xbf16>
    %1 = vector.shape_cast %0 : vector<4x80x32xbf16> to vector<320x32xbf16>
    %c0_2 = arith.constant 0 : index
    %c0_3 = arith.constant 0 : index
    %2 = vector.load %arg2[%c0_2, %c0_3] : memref<32x8xbf16, #tpu.memory_space<vmem>>, vector<32x8xbf16>
    %cst = arith.constant dense<0.000000e+00> : vector<320x8xf32>
    %3 = tpu.matmul %1, %2, %cst {dimension_numbers = #tpu.dot_dimension_numbers<[1], [0], [0], [1], [0, 0, 1, 1], [], []>} : vector<320x32xbf16>, vector<32x8xbf16>, vector<320x8xf32> -> vector<320x8xf32>
    %4 = vector.extract_strided_slice %3 {offsets = [0, 0], sizes = [80, 8], strides = [1, 1]} : vector<320x8xf32> to vector<80x8xf32>
    %5 = vector.extract_strided_slice %3 {offsets = [80, 0], sizes = [80, 8], strides = [1, 1]} : vector<320x8xf32> to vector<80x8xf32>
    %6 = arith.maximumf %4, %5 : vector<80x8xf32>
    %7 = vector.extract_strided_slice %3 {offsets = [160, 0], sizes = [80, 8], strides = [1, 1]} : vector<320x8xf32> to vector<80x8xf32>
    %8 = vector.extract_strided_slice %3 {offsets = [240, 0], sizes = [80, 8], strides = [1, 1]} : vector<320x8xf32> to vector<80x8xf32>
    %9 = arith.maximumf %7, %8 : vector<80x8xf32>
    %10 = arith.maximumf %6, %9 : vector<80x8xf32>
    %c0_4 = arith.constant 0 : index
    %c0_5 = arith.constant 0 : index
    %11 = vector.load %arg3[%c0_4, %c0_5] : memref<1x8xf32, #tpu.memory_space<vmem>>, vector<1x8xf32>
    %12 = vector.broadcast %11 : vector<1x8xf32> to vector<80x8xf32>
    %13 = arith.addf %10, %12 : vector<80x8xf32>
    %cst_6 = arith.constant 0.000000e+00 : f32
    %14 = vector.broadcast %cst_6 : f32 to vector<80x8xf32>
    %15 = arith.maximumf %13, %14 : vector<80x8xf32>
    %16 = arith.truncf %15 : vector<80x8xf32> to vector<80x8xbf16>
    %c0_7 = arith.constant 0 : index
    %c0_8 = arith.constant 0 : index
    %17 = vector.load %arg4[%c0_7, %c0_8] : memref<80x8xbf16, #tpu.memory_space<vmem>>, vector<80x8xbf16>
    tpu.vector_store %arg4[%c0_7, %c0_8], %16 {strides = array<i32>} : memref<80x8xbf16, #tpu.memory_space<vmem>>, vector<80x8xbf16>,
    return
  }
  func.func @transform_0(%arg0: i32) -> (i32, i32, i32) {
    %c0_i32 = arith.constant 0 : i32
    %c0_i32_0 = arith.constant 0 : i32
    %c0_i32_1 = arith.constant 0 : i32
    return %c0_i32, %arg0, %c0_i32_0 : i32, i32, i32
  }
  func.func @transform_1(%arg0: i32) -> (i32, i32) {
    %c0_i32 = arith.constant 0 : i32
    %c0_i32_0 = arith.constant 0 : i32
    %c0_i32_1 = arith.constant 0 : i32
    return %c0_i32, %c0_i32_0 : i32, i32
  }
  func.func @transform_2(%arg0: i32) -> (i32, i32) {
    %c0_i32 = arith.constant 0 : i32
    %c0_i32_0 = arith.constant 0 : i32
    %c0_i32_1 = arith.constant 0 : i32
    return %c0_i32, %c0_i32_0 : i32, i32
  }
  func.func @transform_3(%arg0: i32) -> (i32, i32) {
    %c0_i32 = arith.constant 0 : i32
    %c0_i32_0 = arith.constant 0 : i32
    return %arg0, %c0_i32 : i32, i32
  }
}

module attributes {stable_mosaic.version = 11 : i64} {
  func.func @_conv2_fc_kernel(%arg0: i32, %arg1: memref<4x16x2400xbf16, #tpu.memory_space<vmem>>, %arg2: memref<2400x256xbf16, #tpu.memory_space<vmem>>, %arg3: memref<1x256xf32, #tpu.memory_space<vmem>>, %arg4: memref<256x128xbf16, #tpu.memory_space<vmem>>, %arg5: memref<1x128xf32, #tpu.memory_space<vmem>>, %arg6: memref<128x128xbf16, #tpu.memory_space<vmem>>, %arg7: memref<1x128xf32, #tpu.memory_space<vmem>>, %arg8: memref<128x128xbf16, #tpu.memory_space<vmem>>, %arg9: memref<1x128xf32, #tpu.memory_space<vmem>>, %arg10: memref<16x128xf32, #tpu.memory_space<vmem>>) attributes {dimension_semantics = [#tpu.dimension_semantics<parallel>], iteration_bounds = array<i64: 1>, scalar_prefetch = 0 : i64, scratch_operands = 0 : i64, tpu.core_type = #tpu.core_type<tc>, window_params = [{transform_indices = @transform_0, window_bounds = array<i64: 4, 16, 2400>}, {pipeline_mode = #tpu.pipeline_mode<synchronous>, transform_indices = @transform_1, window_bounds = array<i64: 2400, 256>}, {pipeline_mode = #tpu.pipeline_mode<synchronous>, transform_indices = @transform_2, window_bounds = array<i64: 1, 256>}, {pipeline_mode = #tpu.pipeline_mode<synchronous>, transform_indices = @transform_3, window_bounds = array<i64: 256, 128>}, {pipeline_mode = #tpu.pipeline_mode<synchronous>, transform_indices = @transform_4, window_bounds = array<i64: 1, 128>}, {pipeline_mode = #tpu.pipeline_mode<synchronous>, transform_indices = @transform_5, window_bounds = array<i64: 128, 128>}, {pipeline_mode = #tpu.pipeline_mode<synchronous>, transform_indices = @transform_6, window_bounds = array<i64: 1, 128>}, {pipeline_mode = #tpu.pipeline_mode<synchronous>, transform_indices = @transform_7, window_bounds = array<i64: 128, 128>}, {pipeline_mode = #tpu.pipeline_mode<synchronous>, transform_indices = @transform_8, window_bounds = array<i64: 1, 128>}, {transform_indices = @transform_9, window_bounds = array<i64: 16, 128>}]} {
    %c0 = arith.constant 0 : index
    %c0_0 = arith.constant 0 : index
    %c0_1 = arith.constant 0 : index
    %0 = vector.load %arg1[%c0, %c0_0, %c0_1] : memref<4x16x2400xbf16, #tpu.memory_space<vmem>>, vector<4x16x2400xbf16>
    %1 = vector.shape_cast %0 : vector<4x16x2400xbf16> to vector<64x2400xbf16>
    %c0_2 = arith.constant 0 : index
    %c0_3 = arith.constant 0 : index
    %2 = vector.load %arg2[%c0_2, %c0_3] : memref<2400x256xbf16, #tpu.memory_space<vmem>>, vector<2400x256xbf16>
    %cst = arith.constant dense<0.000000e+00> : vector<64x256xf32>
    %3 = tpu.matmul %1, %2, %cst {dimension_numbers = #tpu.dot_dimension_numbers<[1], [0], [0], [1], [0, 0, 1, 1], [], []>} : vector<64x2400xbf16>, vector<2400x256xbf16>, vector<64x256xf32> -> vector<64x256xf32>
    %4 = vector.extract_strided_slice %3 {offsets = [0, 0], sizes = [16, 256], strides = [1, 1]} : vector<64x256xf32> to vector<16x256xf32>
    %5 = vector.extract_strided_slice %3 {offsets = [16, 0], sizes = [16, 256], strides = [1, 1]} : vector<64x256xf32> to vector<16x256xf32>
    %6 = arith.maximumf %4, %5 : vector<16x256xf32>
    %7 = vector.extract_strided_slice %3 {offsets = [32, 0], sizes = [16, 256], strides = [1, 1]} : vector<64x256xf32> to vector<16x256xf32>
    %8 = vector.extract_strided_slice %3 {offsets = [48, 0], sizes = [16, 256], strides = [1, 1]} : vector<64x256xf32> to vector<16x256xf32>
    %9 = arith.maximumf %7, %8 : vector<16x256xf32>
    %10 = arith.maximumf %6, %9 : vector<16x256xf32>
    %c0_4 = arith.constant 0 : index
    %c0_5 = arith.constant 0 : index
    %11 = vector.load %arg3[%c0_4, %c0_5] : memref<1x256xf32, #tpu.memory_space<vmem>>, vector<1x256xf32>
    %12 = vector.broadcast %11 : vector<1x256xf32> to vector<16x256xf32>
    %13 = arith.addf %10, %12 : vector<16x256xf32>
    %cst_6 = arith.constant 0.000000e+00 : f32
    %14 = vector.broadcast %cst_6 : f32 to vector<16x256xf32>
    %15 = arith.maximumf %13, %14 : vector<16x256xf32>
    %16 = arith.truncf %15 : vector<16x256xf32> to vector<16x256xbf16>
    %c0_7 = arith.constant 0 : index
    %c0_8 = arith.constant 0 : index
    %17 = vector.load %arg4[%c0_7, %c0_8] : memref<256x128xbf16, #tpu.memory_space<vmem>>, vector<256x128xbf16>
    %cst_9 = arith.constant dense<0.000000e+00> : vector<16x128xf32>
    %18 = tpu.matmul %16, %17, %cst_9 {dimension_numbers = #tpu.dot_dimension_numbers<[1], [0], [0], [1], [0, 0, 1, 1], [], []>} : vector<16x256xbf16>, vector<256x128xbf16>, vector<16x128xf32> -> vector<16x128xf32>
    %c0_10 = arith.constant 0 : index
    %c0_11 = arith.constant 0 : index
    %19 = vector.load %arg5[%c0_10, %c0_11] : memref<1x128xf32, #tpu.memory_space<vmem>>, vector<1x128xf32>
    %20 = vector.broadcast %19 : vector<1x128xf32> to vector<16x128xf32>
    %21 = arith.addf %18, %20 : vector<16x128xf32>
    %cst_12 = arith.constant 0.000000e+00 : f32
    %22 = vector.broadcast %cst_12 : f32 to vector<16x128xf32>
    %23 = arith.maximumf %21, %22 : vector<16x128xf32>
    %24 = arith.truncf %23 : vector<16x128xf32> to vector<16x128xbf16>
    %c0_13 = arith.constant 0 : index
    %c0_14 = arith.constant 0 : index
    %25 = vector.load %arg6[%c0_13, %c0_14] : memref<128x128xbf16, #tpu.memory_space<vmem>>, vector<128x128xbf16>
    %cst_15 = arith.constant dense<0.000000e+00> : vector<16x128xf32>
    %26 = tpu.matmul %24, %25, %cst_15 {dimension_numbers = #tpu.dot_dimension_numbers<[1], [0], [0], [1], [0, 0, 1, 1], [], []>} : vector<16x128xbf16>, vector<128x128xbf16>, vector<16x128xf32> -> vector<16x128xf32>
    %c0_16 = arith.constant 0 : index
    %c0_17 = arith.constant 0 : index
    %27 = vector.load %arg7[%c0_16, %c0_17] : memref<1x128xf32, #tpu.memory_space<vmem>>, vector<1x128xf32>
    %28 = vector.broadcast %27 : vector<1x128xf32> to vector<16x128xf32>
    %29 = arith.addf %26, %28 : vector<16x128xf32>
    %cst_18 = arith.constant 0.000000e+00 : f32
    %30 = vector.broadcast %cst_18 : f32 to vector<16x128xf32>
    %31 = arith.maximumf %29, %30 : vector<16x128xf32>
    %32 = arith.truncf %31 : vector<16x128xf32> to vector<16x128xbf16>
    %c0_19 = arith.constant 0 : index
    %c0_20 = arith.constant 0 : index
    %33 = vector.load %arg8[%c0_19, %c0_20] : memref<128x128xbf16, #tpu.memory_space<vmem>>, vector<128x128xbf16>
    %cst_21 = arith.constant dense<0.000000e+00> : vector<16x128xf32>
    %34 = tpu.matmul %32, %33, %cst_21 {dimension_numbers = #tpu.dot_dimension_numbers<[1], [0], [0], [1], [0, 0, 1, 1], [], []>} : vector<16x128xbf16>, vector<128x128xbf16>, vector<16x128xf32> -> vector<16x128xf32>
    %c0_22 = arith.constant 0 : index
    %c0_23 = arith.constant 0 : index
    %35 = vector.load %arg9[%c0_22, %c0_23] : memref<1x128xf32, #tpu.memory_space<vmem>>, vector<1x128xf32>
    %36 = vector.broadcast %35 : vector<1x128xf32> to vector<16x128xf32>
    %37 = arith.addf %34, %36 : vector<16x128xf32>
    %c0_24 = arith.constant 0 : index
    %c0_25 = arith.constant 0 : index
    %38 = vector.load %arg10[%c0_24, %c0_25] : memref<16x128xf32, #tpu.memory_space<vmem>>, vector<16x128xf32>
    tpu.vector_store %arg10[%c0_24, %c0_25], %37 {strides = array<i32>} : memref<16x128xf32, #tpu.memory_space<vmem>>, vector<16x128xf32>,
    return
  }
  func.func @transform_0(%arg0: i32) -> (i32, i32, i32) {
    %c0_i32 = arith.constant 0 : i32
    %c0_i32_0 = arith.constant 0 : i32
    %c0_i32_1 = arith.constant 0 : i32
    return %c0_i32, %arg0, %c0_i32_0 : i32, i32, i32
  }
  func.func @transform_1(%arg0: i32) -> (i32, i32) {
    %c0_i32 = arith.constant 0 : i32
    %c0_i32_0 = arith.constant 0 : i32
    %c0_i32_1 = arith.constant 0 : i32
    return %c0_i32, %c0_i32_0 : i32, i32
  }
  func.func @transform_2(%arg0: i32) -> (i32, i32) {
    %c0_i32 = arith.constant 0 : i32
    %c0_i32_0 = arith.constant 0 : i32
    %c0_i32_1 = arith.constant 0 : i32
    return %c0_i32, %c0_i32_0 : i32, i32
  }
  func.func @transform_3(%arg0: i32) -> (i32, i32) {
    %c0_i32 = arith.constant 0 : i32
    %c0_i32_0 = arith.constant 0 : i32
    %c0_i32_1 = arith.constant 0 : i32
    return %c0_i32, %c0_i32_0 : i32, i32
  }
  func.func @transform_4(%arg0: i32) -> (i32, i32) {
    %c0_i32 = arith.constant 0 : i32
    %c0_i32_0 = arith.constant 0 : i32
    %c0_i32_1 = arith.constant 0 : i32
    return %c0_i32, %c0_i32_0 : i32, i32
  }
  func.func @transform_5(%arg0: i32) -> (i32, i32) {
    %c0_i32 = arith.constant 0 : i32
    %c0_i32_0 = arith.constant 0 : i32
    %c0_i32_1 = arith.constant 0 : i32
    return %c0_i32, %c0_i32_0 : i32, i32
  }
  func.func @transform_6(%arg0: i32) -> (i32, i32) {
    %c0_i32 = arith.constant 0 : i32
    %c0_i32_0 = arith.constant 0 : i32
    %c0_i32_1 = arith.constant 0 : i32
    return %c0_i32, %c0_i32_0 : i32, i32
  }
  func.func @transform_7(%arg0: i32) -> (i32, i32) {
    %c0_i32 = arith.constant 0 : i32
    %c0_i32_0 = arith.constant 0 : i32
    %c0_i32_1 = arith.constant 0 : i32
    return %c0_i32, %c0_i32_0 : i32, i32
  }
  func.func @transform_8(%arg0: i32) -> (i32, i32) {
    %c0_i32 = arith.constant 0 : i32
    %c0_i32_0 = arith.constant 0 : i32
    %c0_i32_1 = arith.constant 0 : i32
    return %c0_i32, %c0_i32_0 : i32, i32
  }
  func.func @transform_9(%arg0: i32) -> (i32, i32) {
    %c0_i32 = arith.constant 0 : i32
    %c0_i32_0 = arith.constant 0 : i32
    return %arg0, %c0_i32 : i32, i32
  }
}

</mosaic_0001>

<llo_original>
// kernel: lenet5_forward.2
$region0: #{lenet5_forward.2}
  #allocation0 [shape = 'u32[]', space=smem, size = 0x4, offset = 0x4, fixed_abs, tag = 'smem constant byte address 0x4 - core index']
  #allocation1 [shape = 'u32[144,128]{1,0:T(1,128)}', space=vmem, size = 0x12000, scoped, tag = 'internal scratch']
  %s0 = inlined_call_operand.vmem [shape: bf16[4,320,32], index: 0, kind: input, shape index: {}]
  %s1 = inlined_call_operand.vmem [shape: bf16[32,8], index: 1, kind: input, shape index: {}]
  %s2 = inlined_call_operand.vmem [shape: f32[1,8], index: 2, kind: input, shape index: {}]
  %s3 = inlined_call_operand.vmem [shape: bf16[320,8], index: 3, kind: output, shape index: {}]
  %s4 = sld [smem:[#allocation0]]
  $region86: #{lenet5_forward.2} parent=0
    _
  %s6 = ssub.s32 1, %s4
  %s7 = scalar_select 0, %s6, %s4
  $region1: #{lenet5_forward.2} parent=0
    #allocation2 [shape = 'u8[163840]{0}', space=vmem, size = 0x28000, scoped, tag = 'input window, operand 0']
    loop: start=0, step=1, limit=6
    $region2: #{lenet5_forward.2} parent=1 // loop_pre_header
      _
    $region3: #{lenet5_forward.2} parent=1 // loop_header
      %s9 = sphi 0, %s13
      %p10 = scmp.ge.s32.totalorder %s9, 6
      %s19 = sphi 0, %s21
      %s22 = sphi 0, %s19
      %s23 = sphi 0, %s22
      %s39 = sphi 0, %s23
      %s43 = sphi 0, %s43
      %s45 = sphi 0, %s43
      %s46 = sphi 0, %s45
      %s60 = sphi 0, %s46
      %s64 = sphi 0, %s64
      %s66 = sphi 0, %s64
      %s67 = sphi 0, %s66
      %s81 = sphi 0, %s67
      %s87 = sphi 0, %s89
      %s90 = sphi 0, %s87
      %s91 = sphi 0, %s90
      %s107 = sphi 0, %s91
    $region4: #{lenet5_forward.2} parent=1 // loop_header_branch
      %12 = sbr.rel (%p10) target = $region8
    $region5: #{lenet5_forward.2} parent=1 // loop_body
      %s14 = ssub.s32 %s9, 1
      %s15 = ssub.s32 %s9, 2
      %s16 = sadd.s32 %s9, 1
      %s17 = ssub.s32 %s9, %s16
      %p18 = scmp.eq.s32.totalorder %s17, 0
      %s20 = sadd.s32 %s19, 1
      %s21 = scalar_select %p18, %s19, %s20
      %p24 = pneg %p18
      %p25 = scmp.eq.s32.totalorder %s9, 3
      %p26 = por %p24, %p25
      %p27 = scmp.ne.s32.totalorder %s19, %s22
      %p28 = scmp.eq.s32.totalorder %s9, 0
      %p29 = por %p27, %p28
      %p30 = scmp.ne.s32.totalorder %s19, %s22
      %p31 = scmp.eq.s32.totalorder %s14, 3
      %p32 = por %p30, %p31
      %p33 = scmp.ne.s32.totalorder %s22, %s23
      %p34 = scmp.eq.s32.totalorder %s14, 0
      %p35 = por %p33, %p34
      %p36 = scmp.ne.s32.totalorder %s22, %s23
      %p37 = scmp.eq.s32.totalorder %s15, 3
      %p38 = por %p36, %p37
      %p40 = scmp.ne.s32.totalorder %s23, %s39
      %p41 = scmp.eq.s32.totalorder %s15, 0
      %p42 = por %p40, %p41
      %s44 = sadd.s32 %s43, 1
      %p47 = scmp.eq.s32.totalorder %s9, 3
      %p48 = scmp.ne.s32.totalorder %s43, %s45
      %p49 = scmp.eq.s32.totalorder %s9, 0
      %p50 = por %p48, %p49
      %p51 = scmp.ne.s32.totalorder %s43, %s45
      %p52 = scmp.eq.s32.totalorder %s14, 3
      %p53 = por %p51, %p52
      %p54 = scmp.ne.s32.totalorder %s45, %s46
      %p55 = scmp.eq.s32.totalorder %s14, 0
      %p56 = por %p54, %p55
      %p57 = scmp.ne.s32.totalorder %s45, %s46
      %p58 = scmp.eq.s32.totalorder %s15, 3
      %p59 = por %p57, %p58
      %p61 = scmp.ne.s32.totalorder %s46, %s60
      %p62 = scmp.eq.s32.totalorder %s15, 0
      %p63 = por %p61, %p62
      %s65 = sadd.s32 %s64, 1
      %p68 = scmp.eq.s32.totalorder %s9, 3
      %p69 = scmp.ne.s32.totalorder %s64, %s66
      %p70 = scmp.eq.s32.totalorder %s9, 0
      %p71 = por %p69, %p70
      %p72 = scmp.ne.s32.totalorder %s64, %s66
      %p73 = scmp.eq.s32.totalorder %s14, 3
      %p74 = por %p72, %p73
      %p75 = scmp.ne.s32.totalorder %s66, %s67
      %p76 = scmp.eq.s32.totalorder %s14, 0
      %p77 = por %p75, %p76
      %p78 = scmp.ne.s32.totalorder %s66, %s67
      %p79 = scmp.eq.s32.totalorder %s15, 3
      %p80 = por %p78, %p79
      %p82 = scmp.ne.s32.totalorder %s67, %s81
      %p83 = scmp.eq.s32.totalorder %s15, 0
      %p84 = por %p82, %p83
      %s85 = ssub.s32 %s9, %s16
      %p86 = scmp.eq.s32.totalorder %s85, 0
      %s88 = sadd.s32 %s87, 1
      %s89 = scalar_select %p86, %s87, %s88
      %p92 = pneg %p86
      %p93 = scmp.eq.s32.totalorder %s9, 3
      %p94 = por %p92, %p93
      %p95 = scmp.ne.s32.totalorder %s87, %s90
      %p96 = scmp.eq.s32.totalorder %s9, 0
      %p97 = por %p95, %p96
      %p98 = scmp.ne.s32.totalorder %s87, %s90
      %p99 = scmp.eq.s32.totalorder %s14, 3
      %p100 = por %p98, %p99
      %p101 = scmp.ne.s32.totalorder %s90, %s91
      %p102 = scmp.eq.s32.totalorder %s14, 0
      %p103 = por %p101, %p102
      %p104 = scmp.ne.s32.totalorder %s90, %s91
      %p105 = scmp.eq.s32.totalorder %s15, 3
      %p106 = por %p104, %p105
      %p108 = scmp.ne.s32.totalorder %s91, %s107
      %p109 = scmp.eq.s32.totalorder %s15, 0
      %p110 = por %p108, %p109
      %p111 = scmp.le.s32.totalorder 1, %s9
      %p112 = scmp.lt.s32.totalorder %s9, 5
      %p113 = pnand %p111, %p112
      %p114 = pneg %p113
      // Predicated region
      $region9: #{lenet5_forward.2} parent=5 // pred_check
        _
      $region10: #{lenet5_forward.2} parent=5 // pred_check_branch
        %116 = sbr.rel (%p113) target = $region12
      $region11: #{lenet5_forward.2} parent=5 // pred_region
        %s117 = ssub.s32 %s9, 1
        // Predicated region
        $region13: #{lenet5_forward.2} parent=11 // pred_check
          %p118 = pneg %p56
        $region14: #{lenet5_forward.2} parent=11 // pred_check_branch
          %120 = sbr.rel (%p118) target = $region16
        $region15: #{lenet5_forward.2} parent=11 // pred_region
          _
        $region16: #{lenet5_forward.2} parent=11 // pred_fallthru
          _
        // Predicated region
        $region17: #{lenet5_forward.2} parent=11 // pred_check
          %p121 = pneg %p77
        $region18: #{lenet5_forward.2} parent=11 // pred_check_branch
          %123 = sbr.rel (%p121) target = $region20
        $region19: #{lenet5_forward.2} parent=11 // pred_region
          _
        $region20: #{lenet5_forward.2} parent=11 // pred_fallthru
          _
      $region12: #{lenet5_forward.2} parent=5 // pred_fallthru
        _
      %p124 = scmp.lt.s32.totalorder %s9, 4
      // Predicated region
      $region21: #{lenet5_forward.2} parent=5 // pred_check
        %p125 = pneg %p124
      $region22: #{lenet5_forward.2} parent=5 // pred_check_branch
        %127 = sbr.rel (%p125) target = $region24
      $region23: #{lenet5_forward.2} parent=5 // pred_region
        // Predicated region
        $region25: #{lenet5_forward.2} parent=23 // pred_check
          %p128 = pneg %p29
        $region26: #{lenet5_forward.2} parent=23 // pred_check_branch
          %130 = sbr.rel (%p128) target = $region28
        $region27: #{lenet5_forward.2} parent=23 // pred_region
          %s131 = sand.u32 %s19, 1
          %s132 = sand.u32 %s19, 1
          %s133 = smul.addr %s132, 160
          %s134 = scalar_lea.vmem [#allocation2], %s133
          %s135 = smul.u32 10, %s9
          %s136 = smul.addr %s135, 4
          %s137 = scalar_lea.vmem %s0, %s136
          // Predicated region
          $region29: #{lenet5_forward.2} parent=27 // pred_check
            _
          $region30: #{lenet5_forward.2} parent=27 // pred_check_branch
            %139 = sbr.rel (0) target = $region32
          $region31: #{lenet5_forward.2} parent=27 // pred_region
            // Predicated region
            $region33: #{lenet5_forward.2} parent=31 // pred_check
              _
            $region34: #{lenet5_forward.2} parent=31 // pred_check_branch
              %141 = sbr.rel target = $region36
            $region35: #{lenet5_forward.2} parent=31 // pred_region
              // Predicated region
              $region48: #{lenet5_forward.2} parent=35 // pred_check
                _
              $region49: #{lenet5_forward.2} parent=35 // pred_check_branch
                %234 = sbr.rel (0) target = $region51
              $region50: #{lenet5_forward.2} parent=35 // pred_region
                loop: start=0, step=1, limit=1
                $region52: #{lenet5_forward.2} parent=50 // loop_pre_header
                  _
                $region53: #{lenet5_forward.2} parent=50 // loop_header
                  %s236 = sphi 0, %s240
                  %p237 = scmp.ge.s32.totalorder %s236, 1
                  %s241 = sphi %s137, %s137
                  %s242 = sphi %s134, %s134
                $region54: #{lenet5_forward.2} parent=50 // loop_header_branch
                  %239 = sbr.rel (%p237) target = $region58
                $region55: #{lenet5_forward.2} parent=50 // loop_body
                  _
                $region56: #{lenet5_forward.2} parent=50 // loop_footer
                  %s240 = sadd.s32 1, %s236
                $region57: #{lenet5_forward.2} parent=50 // loop_footer_branch
                  %235 = sbr.rel target = $region53
                $region58: #{lenet5_forward.2} parent=50 // loop_exit
                  _
                loop: start=0, step=1, limit=1
                $region59: #{lenet5_forward.2} parent=50 // loop_pre_header
                  _
                $region60: #{lenet5_forward.2} parent=50 // loop_header
                  %s245 = sphi 0, %s249
                  %p246 = scmp.ge.s32.totalorder %s245, 1
                  %s250 = sphi %s137, %s137
                  %s251 = sphi %s134, %s134
                $region61: #{lenet5_forward.2} parent=50 // loop_header_branch
                  %248 = sbr.rel (%p246) target = $region65
                $region62: #{lenet5_forward.2} parent=50 // loop_body
                  %v252 = vld [vmem:[%s250] sm:$0xf]
                  %253 = vst [vmem:[%s251] sm:$0xf] %v252
                  %v254 = vld [vmem:[%s250 + $0x4] sm:$0xf]
                  %255 = vst [vmem:[%s251 + $0x4] sm:$0xf] %v254
                  %v256 = vld [vmem:[%s250 + $0x8] sm:$0xf]
                  %257 = vst [vmem:[%s251 + $0x8] sm:$0xf] %v256
                  %v258 = vld [vmem:[%s250 + $0xc] sm:$0xf]
                  %259 = vst [vmem:[%s251 + $0xc] sm:$0xf] %v258
                  %v260 = vld [vmem:[%s250 + $0x10] sm:$0xf]
                  %261 = vst [vmem:[%s251 + $0x10] sm:$0xf] %v260
                  %v262 = vld [vmem:[%s250 + $0x14] sm:$0xf]
                  %263 = vst [vmem:[%s251 + $0x14] sm:$0xf] %v262
                  %v264 = vld [vmem:[%s250 + $0x18] sm:$0xf]
                  %265 = vst [vmem:[%s251 + $0x18] sm:$0xf] %v264
                  %v266 = vld [vmem:[%s250 + $0x1c] sm:$0xf]
                  %267 = vst [vmem:[%s251 + $0x1c] sm:$0xf] %v266
                  %v268 = vld [vmem:[%s250 + $0x20] sm:$0xf]
                  %269 = vst [vmem:[%s251 + $0x20] sm:$0xf] %v268
                  %v270 = vld [vmem:[%s250 + $0x24] sm:$0xf]
                  %271 = vst [vmem:[%s251 + $0x24] sm:$0xf] %v270
                  %v272 = vld [vmem:[%s250 + $0xa0] sm:$0xf]
                  %273 = vst [vmem:[%s251 + $0x28] sm:$0xf] %v272
                  %v274 = vld [vmem:[%s250 + $0xa4] sm:$0xf]
                  %275 = vst [vmem:[%s251 + $0x2c] sm:$0xf] %v274
                  %v276 = vld [vmem:[%s250 + $0xa8] sm:$0xf]
                  %277 = vst [vmem:[%s251 + $0x30] sm:$0xf] %v276
                  %v278 = vld [vmem:[%s250 + $0xac] sm:$0xf]
                  %279 = vst [vmem:[%s251 + $0x34] sm:$0xf] %v278
                  %v280 = vld [vmem:[%s250 + $0xb0] sm:$0xf]
                  %281 = vst [vmem:[%s251 + $0x38] sm:$0xf] %v280
                  %v282 = vld [vmem:[%s250 + $0xb4] sm:$0xf]
                  %283 = vst [vmem:[%s251 + $0x3c] sm:$0xf] %v282
                  %v284 = vld [vmem:[%s250 + $0xb8] sm:$0xf]
                  %285 = vst [vmem:[%s251 + $0x40] sm:$0xf] %v284
                  %v286 = vld [vmem:[%s250 + $0xbc] sm:$0xf]
                  %287 = vst [vmem:[%s251 + $0x44] sm:$0xf] %v286
                  %v288 = vld [vmem:[%s250 + $0xc0] sm:$0xf]
                  %289 = vst [vmem:[%s251 + $0x48] sm:$0xf] %v288
                  %v290 = vld [vmem:[%s250 + $0xc4] sm:$0xf]
                  %291 = vst [vmem:[%s251 + $0x4c] sm:$0xf] %v290
                  %v292 = vld [vmem:[%s250 + $0x140] sm:$0xf]
                  %293 = vst [vmem:[%s251 + $0x50] sm:$0xf] %v292
                  %v294 = vld [vmem:[%s250 + $0x144] sm:$0xf]
                  %295 = vst [vmem:[%s251 + $0x54] sm:$0xf] %v294
                  %v296 = vld [vmem:[%s250 + $0x148] sm:$0xf]
                  %297 = vst [vmem:[%s251 + $0x58] sm:$0xf] %v296
                  %v298 = vld [vmem:[%s250 + $0x14c] sm:$0xf]
                  %299 = vst [vmem:[%s251 + $0x5c] sm:$0xf] %v298
                  %v300 = vld [vmem:[%s250 + $0x150] sm:$0xf]
                  %301 = vst [vmem:[%s251 + $0x60] sm:$0xf] %v300
                  %v302 = vld [vmem:[%s250 + $0x154] sm:$0xf]
                  %303 = vst [vmem:[%s251 + $0x64] sm:$0xf] %v302
                  %v304 = vld [vmem:[%s250 + $0x158] sm:$0xf]
                  %305 = vst [vmem:[%s251 + $0x68] sm:$0xf] %v304
                  %v306 = vld [vmem:[%s250 + $0x15c] sm:$0xf]
                  %307 = vst [vmem:[%s251 + $0x6c] sm:$0xf] %v306
                  %v308 = vld [vmem:[%s250 + $0x160] sm:$0xf]
                  %309 = vst [vmem:[%s251 + $0x70] sm:$0xf] %v308
                  %v310 = vld [vmem:[%s250 + $0x164] sm:$0xf]
                  %311 = vst [vmem:[%s251 + $0x74] sm:$0xf] %v310
                  %v312 = vld [vmem:[%s250 + $0x1e0] sm:$0xf]
                  %313 = vst [vmem:[%s251 + $0x78] sm:$0xf] %v312
                  %v314 = vld [vmem:[%s250 + $0x1e4] sm:$0xf]
                  %315 = vst [vmem:[%s251 + $0x7c] sm:$0xf] %v314
                  %v316 = vld [vmem:[%s250 + $0x1e8] sm:$0xf]
                  %317 = vst [vmem:[%s251 + $0x80] sm:$0xf] %v316
                  %v318 = vld [vmem:[%s250 + $0x1ec] sm:$0xf]
                  %319 = vst [vmem:[%s251 + $0x84] sm:$0xf] %v318
                  %v320 = vld [vmem:[%s250 + $0x1f0] sm:$0xf]
                  %321 = vst [vmem:[%s251 + $0x88] sm:$0xf] %v320
                  %v322 = vld [vmem:[%s250 + $0x1f4] sm:$0xf]
                  %323 = vst [vmem:[%s251 + $0x8c] sm:$0xf] %v322
                  %v324 = vld [vmem:[%s250 + $0x1f8] sm:$0xf]
                  %325 = vst [vmem:[%s251 + $0x90] sm:$0xf] %v324
                  %v326 = vld [vmem:[%s250 + $0x1fc] sm:$0xf]
                  %327 = vst [vmem:[%s251 + $0x94] sm:$0xf] %v326
                  %v328 = vld [vmem:[%s250 + $0x200] sm:$0xf]
                  %329 = vst [vmem:[%s251 + $0x98] sm:$0xf] %v328
                  %v330 = vld [vmem:[%s250 + $0x204] sm:$0xf]
                  %331 = vst [vmem:[%s251 + $0x9c] sm:$0xf] %v330
                $region63: #{lenet5_forward.2} parent=50 // loop_footer
                  %s249 = sadd.s32 1, %s245
                $region64: #{lenet5_forward.2} parent=50 // loop_footer_branch
                  %244 = sbr.rel target = $region60
                $region65: #{lenet5_forward.2} parent=50 // loop_exit
                  _
              $region51: #{lenet5_forward.2} parent=35 // pred_fallthru
                _
            $region36: #{lenet5_forward.2} parent=31 // pred_fallthru
              _
            // Predicated region
            $region37: #{lenet5_forward.2} parent=31 // pred_check
              _
            $region38: #{lenet5_forward.2} parent=31 // pred_check_branch
              %143 = sbr.rel (0) target = $region40
            $region39: #{lenet5_forward.2} parent=31 // pred_region
              loop: start=0, step=1, limit=1
              $region41: #{lenet5_forward.2} parent=39 // loop_pre_header
                _
              $region42: #{lenet5_forward.2} parent=39 // loop_header
                %s146 = sphi 0, %s150
                %p147 = scmp.ge.s32.totalorder %s146, 1
                %s151 = sphi %s137, %s137
                %s152 = sphi %s134, %s134
              $region43: #{lenet5_forward.2} parent=39 // loop_header_branch
                %149 = sbr.rel (%p147) target = $region47
              $region44: #{lenet5_forward.2} parent=39 // loop_body
                %v153 = vld [vmem:[%s151] sm:$0xf]
                %154 = vst [vmem:[%s152] sm:$0xf] %v153
                %v155 = vld [vmem:[%s151 + $0x4] sm:$0xf]
                %156 = vst [vmem:[%s152 + $0x4] sm:$0xf] %v155
                %v157 = vld [vmem:[%s151 + $0x8] sm:$0xf]
                %158 = vst [vmem:[%s152 + $0x8] sm:$0xf] %v157
                %v159 = vld [vmem:[%s151 + $0xc] sm:$0xf]
                %160 = vst [vmem:[%s152 + $0xc] sm:$0xf] %v159
                %v161 = vld [vmem:[%s151 + $0x10] sm:$0xf]
                %162 = vst [vmem:[%s152 + $0x10] sm:$0xf] %v161
                %v163 = vld [vmem:[%s151 + $0x14] sm:$0xf]
                %164 = vst [vmem:[%s152 + $0x14] sm:$0xf] %v163
                %v165 = vld [vmem:[%s151 + $0x18] sm:$0xf]
                %166 = vst [vmem:[%s152 + $0x18] sm:$0xf] %v165
                %v167 = vld [vmem:[%s151 + $0x1c] sm:$0xf]
                %168 = vst [vmem:[%s152 + $0x1c] sm:$0xf] %v167
                %v169 = vld [vmem:[%s151 + $0x20] sm:$0xf]
                %170 = vst [vmem:[%s152 + $0x20] sm:$0xf] %v169
                %v171 = vld [vmem:[%s151 + $0x24] sm:$0xf]
                %172 = vst [vmem:[%s152 + $0x24] sm:$0xf] %v171
                %v173 = vld [vmem:[%s151 + $0xa0] sm:$0xf]
                %174 = vst [vmem:[%s152 + $0x28] sm:$0xf] %v173
                %v175 = vld [vmem:[%s151 + $0xa4] sm:$0xf]
                %176 = vst [vmem:[%s152 + $0x2c] sm:$0xf] %v175
                %v177 = vld [vmem:[%s151 + $0xa8] sm:$0xf]
                %178 = vst [vmem:[%s152 + $0x30] sm:$0xf] %v177
                %v179 = vld [vmem:[%s151 + $0xac] sm:$0xf]
                %180 = vst [vmem:[%s152 + $0x34] sm:$0xf] %v179
                %v181 = vld [vmem:[%s151 + $0xb0] sm:$0xf]
                %182 = vst [vmem:[%s152 + $0x38] sm:$0xf] %v181
                %v183 = vld [vmem:[%s151 + $0xb4] sm:$0xf]
                %184 = vst [vmem:[%s152 + $0x3c] sm:$0xf] %v183
                %v185 = vld [vmem:[%s151 + $0xb8] sm:$0xf]
                %186 = vst [vmem:[%s152 + $0x40] sm:$0xf] %v185
                %v187 = vld [vmem:[%s151 + $0xbc] sm:$0xf]
                %188 = vst [vmem:[%s152 + $0x44] sm:$0xf] %v187
                %v189 = vld [vmem:[%s151 + $0xc0] sm:$0xf]
                %190 = vst [vmem:[%s152 + $0x48] sm:$0xf] %v189
                %v191 = vld [vmem:[%s151 + $0xc4] sm:$0xf]
                %192 = vst [vmem:[%s152 + $0x4c] sm:$0xf] %v191
                %v193 = vld [vmem:[%s151 + $0x140] sm:$0xf]
                %194 = vst [vmem:[%s152 + $0x50] sm:$0xf] %v193
                %v195 = vld [vmem:[%s151 + $0x144] sm:$0xf]
                %196 = vst [vmem:[%s152 + $0x54] sm:$0xf] %v195
                %v197 = vld [vmem:[%s151 + $0x148] sm:$0xf]
                %198 = vst [vmem:[%s152 + $0x58] sm:$0xf] %v197
                %v199 = vld [vmem:[%s151 + $0x14c] sm:$0xf]
                %200 = vst [vmem:[%s152 + $0x5c] sm:$0xf] %v199
                %v201 = vld [vmem:[%s151 + $0x150] sm:$0xf]
                %202 = vst [vmem:[%s152 + $0x60] sm:$0xf] %v201
                %v203 = vld [vmem:[%s151 + $0x154] sm:$0xf]
                %204 = vst [vmem:[%s152 + $0x64] sm:$0xf] %v203
                %v205 = vld [vmem:[%s151 + $0x158] sm:$0xf]
                %206 = vst [vmem:[%s152 + $0x68] sm:$0xf] %v205
                %v207 = vld [vmem:[%s151 + $0x15c] sm:$0xf]
                %208 = vst [vmem:[%s152 + $0x6c] sm:$0xf] %v207
                %v209 = vld [vmem:[%s151 + $0x160] sm:$0xf]
                %210 = vst [vmem:[%s152 + $0x70] sm:$0xf] %v209
                %v211 = vld [vmem:[%s151 + $0x164] sm:$0xf]
                %212 = vst [vmem:[%s152 + $0x74] sm:$0xf] %v211
                %v213 = vld [vmem:[%s151 + $0x1e0] sm:$0xf]
                %214 = vst [vmem:[%s152 + $0x78] sm:$0xf] %v213
                %v215 = vld [vmem:[%s151 + $0x1e4] sm:$0xf]
                %216 = vst [vmem:[%s152 + $0x7c] sm:$0xf] %v215
                %v217 = vld [vmem:[%s151 + $0x1e8] sm:$0xf]
                %218 = vst [vmem:[%s152 + $0x80] sm:$0xf] %v217
                %v219 = vld [vmem:[%s151 + $0x1ec] sm:$0xf]
                %220 = vst [vmem:[%s152 + $0x84] sm:$0xf] %v219
                %v221 = vld [vmem:[%s151 + $0x1f0] sm:$0xf]
                %222 = vst [vmem:[%s152 + $0x88] sm:$0xf] %v221
                %v223 = vld [vmem:[%s151 + $0x1f4] sm:$0xf]
                %224 = vst [vmem:[%s152 + $0x8c] sm:$0xf] %v223
                %v225 = vld [vmem:[%s151 + $0x1f8] sm:$0xf]
                %226 = vst [vmem:[%s152 + $0x90] sm:$0xf] %v225
                %v227 = vld [vmem:[%s151 + $0x1fc] sm:$0xf]
                %228 = vst [vmem:[%s152 + $0x94] sm:$0xf] %v227
                %v229 = vld [vmem:[%s151 + $0x200] sm:$0xf]
                %230 = vst [vmem:[%s152 + $0x98] sm:$0xf] %v229
                %v231 = vld [vmem:[%s151 + $0x204] sm:$0xf]
                %232 = vst [vmem:[%s152 + $0x9c] sm:$0xf] %v231
              $region45: #{lenet5_forward.2} parent=39 // loop_footer
                %s150 = sadd.s32 1, %s146
              $region46: #{lenet5_forward.2} parent=39 // loop_footer_branch
                %145 = sbr.rel target = $region42
              $region47: #{lenet5_forward.2} parent=39 // loop_exit
                _
            $region40: #{lenet5_forward.2} parent=31 // pred_fallthru
              _
          $region32: #{lenet5_forward.2} parent=27 // pred_fallthru
            _
          %332 = vnop
        $region28: #{lenet5_forward.2} parent=23 // pred_fallthru
          _
      $region24: #{lenet5_forward.2} parent=5 // pred_fallthru
        _
      %p333 = scmp.le.s32.totalorder 1, %s9
      %p334 = scmp.lt.s32.totalorder %s9, 5
      %p335 = pnand %p333, %p334
      %p336 = pneg %p335
      // Predicated region
      $region66: #{lenet5_forward.2} parent=5 // pred_check
        _
      $region67: #{lenet5_forward.2} parent=5 // pred_check_branch
        %338 = sbr.rel (%p335) target = $region69
      $region68: #{lenet5_forward.2} parent=5 // pred_region
        %s339 = ssub.s32 %s9, 1
        %s340 = sand.u32 %s22, 1
        %s341 = sand.u32 %s22, 1
        %s342 = smul.addr %s341, 160
        %s343 = scalar_lea.vmem [#allocation2], %s342
        // Predicated region
        $region70: #{lenet5_forward.2} parent=68 // pred_check
          %p344 = pneg %p35
        $region71: #{lenet5_forward.2} parent=68 // pred_check_branch
          %346 = sbr.rel (%p344) target = $region73
        $region72: #{lenet5_forward.2} parent=68 // pred_region
          _
        $region73: #{lenet5_forward.2} parent=68 // pred_fallthru
          _
        %s347 = sand.u32 %s22, 1
        %s348 = sand.u32 %s22, 1
        %s349 = smul.addr %s348, 160
        %s350 = scalar_lea.vmem [#allocation2], %s349
        %p351 = pneg %p35
        %p352 = pneg %p32
        %p353 = pneg %p56
        %p354 = pneg %p53
        %p355 = pneg %p77
        %p356 = pneg %p74
        %p357 = pneg %p103
        %p358 = pneg %p100
        %s359 = smul.u32 10, %s14
        %p360 = scmp.lt.s32.totalorder %s359, 39
        %s361 = scalar_select %p360, %s359, 39
        %s362 = smul.addr %s361, 4
        %s363 = scalar_lea.vmem %s3, %s362
        %s364 = smul.u32 10, %s14
        %s365 = smul.u32 10, %s14
        %p366 = scmp.lt.s32.totalorder %s365, 39
        %s367 = scalar_select %p366, %s365, 39
        %s368 = smul.addr %s367, 4
        %s369 = scalar_lea.vmem %s3, %s368
        %s370 = smul.u32 10, %s14
        %v372 = vld [vmem:[%s343] sm:$0xf]
        %v373 = vld [vmem:[%s343 + $0x4] sm:$0xf]
        %v374 = vld [vmem:[%s343 + $0x8] sm:$0xf]
        %v375 = vld [vmem:[%s343 + $0xc] sm:$0xf]
        %v376 = vld [vmem:[%s343 + $0x10] sm:$0xf]
        %v377 = vld [vmem:[%s343 + $0x14] sm:$0xf]
        %v378 = vld [vmem:[%s343 + $0x18] sm:$0xf]
        %v379 = vld [vmem:[%s343 + $0x1c] sm:$0xf]
        %v380 = vld [vmem:[%s343 + $0x20] sm:$0xf]
        %v381 = vld [vmem:[%s343 + $0x24] sm:$0xf]
        %v382 = vld [vmem:[%s343 + $0x28] sm:$0xf]
        %v383 = vld [vmem:[%s343 + $0x2c] sm:$0xf]
        %v384 = vld [vmem:[%s343 + $0x30] sm:$0xf]
        %v385 = vld [vmem:[%s343 + $0x34] sm:$0xf]
        %v386 = vld [vmem:[%s343 + $0x38] sm:$0xf]
        %v387 = vld [vmem:[%s343 + $0x3c] sm:$0xf]
        %v388 = vld [vmem:[%s343 + $0x40] sm:$0xf]
        %v389 = vld [vmem:[%s343 + $0x44] sm:$0xf]
        %v390 = vld [vmem:[%s343 + $0x48] sm:$0xf]
        %v391 = vld [vmem:[%s343 + $0x4c] sm:$0xf]
        %v392 = vld [vmem:[%s343 + $0x50] sm:$0xf]
        %v393 = vld [vmem:[%s343 + $0x54] sm:$0xf]
        %v394 = vld [vmem:[%s343 + $0x58] sm:$0xf]
        %v395 = vld [vmem:[%s343 + $0x5c] sm:$0xf]
        %v396 = vld [vmem:[%s343 + $0x60] sm:$0xf]
        %v397 = vld [vmem:[%s343 + $0x64] sm:$0xf]
        %v398 = vld [vmem:[%s343 + $0x68] sm:$0xf]
        %v399 = vld [vmem:[%s343 + $0x6c] sm:$0xf]
        %v400 = vld [vmem:[%s343 + $0x70] sm:$0xf]
        %v401 = vld [vmem:[%s343 + $0x74] sm:$0xf]
        %v402 = vld [vmem:[%s343 + $0x78] sm:$0xf]
        %v403 = vld [vmem:[%s343 + $0x7c] sm:$0xf]
        %v404 = vld [vmem:[%s343 + $0x80] sm:$0xf]
        %v405 = vld [vmem:[%s343 + $0x84] sm:$0xf]
        %v406 = vld [vmem:[%s343 + $0x88] sm:$0xf]
        %v407 = vld [vmem:[%s343 + $0x8c] sm:$0xf]
        %v408 = vld [vmem:[%s343 + $0x90] sm:$0xf]
        %v409 = vld [vmem:[%s343 + $0x94] sm:$0xf]
        %v410 = vld [vmem:[%s343 + $0x98] sm:$0xf]
        %v411 = vld [vmem:[%s343 + $0x9c] sm:$0xf]
        %v412 = vld [vmem:[%s1] sm:$0xf]
        %v413 = vld [vmem:[%s1 + $0x4] sm:$0xf]
        %v414 = vld [vmem:[%s1 + $0x8] sm:$0xf]
        %v415 = vld [vmem:[%s1 + $0xc] sm:$0xf]
        %v456 = vunpack.c.l.b16 %v372
        %v457 = vunpack.c.l.b16 %v373
        %v458 = vunpack.c.l.b16 %v374
        %v459 = vunpack.c.l.b16 %v375
        %v460 = vunpack.c.l.b16 %v376
        %v461 = vunpack.c.l.b16 %v377
        %v462 = vunpack.c.l.b16 %v378
        %v463 = vunpack.c.l.b16 %v379
        %v464 = vunpack.c.l.b16 %v380
        %v465 = vunpack.c.l.b16 %v381
        %v466 = vunpack.c.l.b16 %v382
        %v467 = vunpack.c.l.b16 %v383
        %v468 = vunpack.c.l.b16 %v384
        %v469 = vunpack.c.l.b16 %v385
        %v470 = vunpack.c.l.b16 %v386
        %v471 = vunpack.c.l.b16 %v387
        %v472 = vunpack.c.l.b16 %v388
        %v473 = vunpack.c.l.b16 %v389
        %v474 = vunpack.c.l.b16 %v390
        %v475 = vunpack.c.l.b16 %v391
        %v476 = vunpack.c.l.b16 %v392
        %v477 = vunpack.c.l.b16 %v393
        %v478 = vunpack.c.l.b16 %v394
        %v479 = vunpack.c.l.b16 %v395
        %v480 = vunpack.c.l.b16 %v396
        %v481 = vunpack.c.l.b16 %v397
        %v482 = vunpack.c.l.b16 %v398
        %v483 = vunpack.c.l.b16 %v399
        %v484 = vunpack.c.l.b16 %v400
        %v485 = vunpack.c.l.b16 %v401
        %v486 = vunpack.c.l.b16 %v402
        %v487 = vunpack.c.l.b16 %v403
        %v488 = vunpack.c.l.b16 %v404
        %v489 = vunpack.c.l.b16 %v405
        %v490 = vunpack.c.l.b16 %v406
        %v491 = vunpack.c.l.b16 %v407
        %v492 = vunpack.c.l.b16 %v408
        %v493 = vunpack.c.l.b16 %v409
        %v494 = vunpack.c.l.b16 %v410
        %v495 = vunpack.c.l.b16 %v411
        %v496 = vpack.c.b16 %v457, %v456
        %v497 = vpack.c.b16 %v459, %v458
        %v498 = vpack.c.b16 %v461, %v460
        %v499 = vpack.c.b16 %v463, %v462
        %v500 = vpack.c.b16 %v465, %v464
        %v501 = vpack.c.b16 %v467, %v466
        %v502 = vpack.c.b16 %v469, %v468
        %v503 = vpack.c.b16 %v471, %v470
        %v504 = vpack.c.b16 %v473, %v472
        %v505 = vpack.c.b16 %v475, %v474
        %v506 = vpack.c.b16 %v477, %v476
        %v507 = vpack.c.b16 %v479, %v478
        %v508 = vpack.c.b16 %v481, %v480
        %v509 = vpack.c.b16 %v483, %v482
        %v510 = vpack.c.b16 %v485, %v484
        %v511 = vpack.c.b16 %v487, %v486
        %v512 = vpack.c.b16 %v489, %v488
        %v513 = vpack.c.b16 %v491, %v490
        %v514 = vpack.c.b16 %v493, %v492
        %v515 = vpack.c.b16 %v495, %v494
        %v520 = vunpack.c.l.b16 %v412
        %v521 = vunpack.c.l.b16 %v413
        %v522 = vunpack.c.l.b16 %v414
        %v523 = vunpack.c.l.b16 %v415
        %v524 = vpack.c.b16 %v521, %v520
        %v525 = vpack.c.b16 %v523, %v522
        %vm528 = vcmask 261120
        %v530 = vsel %vm528, %v496, 0
        %v533 = vsel %vm528, %v497, 0
        %v536 = vsel %vm528, %v498, 0
        %v539 = vsel %vm528, %v499, 0
        %v542 = vsel %vm528, %v500, 0
        %v545 = vsel %vm528, %v501, 0
        %v548 = vsel %vm528, %v502, 0
        %v551 = vsel %vm528, %v503, 0
        %v554 = vsel %vm528, %v504, 0
        %v557 = vsel %vm528, %v505, 0
        %v560 = vsel %vm528, %v506, 0
        %v563 = vsel %vm528, %v507, 0
        %v566 = vsel %vm528, %v508, 0
        %v569 = vsel %vm528, %v509, 0
        %v572 = vsel %vm528, %v510, 0
        %v575 = vsel %vm528, %v511, 0
        %v578 = vsel %vm528, %v512, 0
        %v581 = vsel %vm528, %v513, 0
        %v584 = vsel %vm528, %v514, 0
        %v587 = vsel %vm528, %v515, 0
        %589 = vmatprep.subr.bf16.mxu0 0
        %590 = vmatpush1.bf16.msra.mxu0 %v524
        %591 = vmatprep.subr.bf16.mxu0 0
        %592 = vmatpush1.bf16.msra.mxu0 %v525
        %593 = vmatprep.subr.bf16.mxu0 0
        %594 = vmatpush1.bf16.msra.mxu0 0
        %595 = vmatprep.subr.bf16.mxu0 0
        %596 = vmatpush1.bf16.msra.mxu0 0
        %597 = vmatprep.subr.bf16.mxu0 0
        %598 = vmatpush1.bf16.msra.mxu0 0
        %599 = vmatprep.subr.bf16.mxu0 0
        %600 = vmatpush1.bf16.msra.mxu0 0
        %601 = vmatprep.subr.bf16.mxu0 0
        %602 = vmatpush1.bf16.msra.mxu0 0
        %603 = vmatprep.subr.bf16.mxu0 0
        %604 = vmatpush1.bf16.msra.mxu0 0
        %605 = vmatprep.subr.bf16.mxu0 0
        %606 = vmatpush1.bf16.msra.mxu0 0
        %607 = vmatprep.subr.bf16.mxu0 0
        %608 = vmatpush1.bf16.msra.mxu0 0
        %609 = vmatprep.subr.bf16.mxu0 0
        %610 = vmatpush1.bf16.msra.mxu0 0
        %611 = vmatprep.subr.bf16.mxu0 0
        %612 = vmatpush1.bf16.msra.mxu0 0
        %613 = vmatprep.subr.bf16.mxu0 0
        %614 = vmatpush1.bf16.msra.mxu0 0
        %615 = vmatprep.subr.bf16.mxu0 0
        %616 = vmatpush1.bf16.msra.mxu0 0
        %617 = vmatprep.subr.bf16.mxu0 0
        %618 = vmatpush1.bf16.msra.mxu0 0
        %619 = vmatprep.subr.bf16.mxu0 0
        %620 = vmatpush1.bf16.msra.mxu0 0
        %621 = vmatprep.mubr.bf16.mxu0 0
        %622 = vmatmul.mubr.bf16.gmra.mrb[0].mxu0 %v530
        %v623 = vpop.f32.mrb[0].mxu0
        %v624 = vadd.f32 0.0, %v623
        %v625 = vpop.f32.mrb[0].mxu0
        %v626 = vpop.f32.mrb[0].mxu0
        %v627 = vadd.f32 0.0, %v626
        %v628 = vpop.f32.mrb[0].mxu0
        %629 = vmatprep.mubr.bf16.mxu0 0
        %630 = vmatmul.mubr.bf16.gmra.mrb[0].mxu0 %v533
        %v631 = vpop.f32.mrb[0].mxu0
        %v632 = vadd.f32 0.0, %v631
        %v633 = vpop.f32.mrb[0].mxu0
        %v634 = vpop.f32.mrb[0].mxu0
        %v635 = vadd.f32 0.0, %v634
        %v636 = vpop.f32.mrb[0].mxu0
        %637 = vmatprep.mubr.bf16.mxu0 0
        %638 = vmatmul.mubr.bf16.gmra.mrb[0].mxu0 %v536
        %v639 = vpop.f32.mrb[0].mxu0
        %v640 = vadd.f32 0.0, %v639
        %v641 = vpop.f32.mrb[0].mxu0
        %v642 = vpop.f32.mrb[0].mxu0
        %v643 = vadd.f32 0.0, %v642
        %v644 = vpop.f32.mrb[0].mxu0
        %645 = vmatprep.mubr.bf16.mxu0 0
        %646 = vmatmul.mubr.bf16.gmra.mrb[0].mxu0 %v539
        %v647 = vpop.f32.mrb[0].mxu0
        %v648 = vadd.f32 0.0, %v647
        %v649 = vpop.f32.mrb[0].mxu0
        %v650 = vpop.f32.mrb[0].mxu0
        %v651 = vadd.f32 0.0, %v650
        %v652 = vpop.f32.mrb[0].mxu0
        %653 = vmatprep.mubr.bf16.mxu0 0
        %654 = vmatmul.mubr.bf16.gmra.mrb[0].mxu0 %v542
        %v655 = vpop.f32.mrb[0].mxu0
        %v656 = vadd.f32 0.0, %v655
        %v657 = vpop.f32.mrb[0].mxu0
        %v658 = vpop.f32.mrb[0].mxu0
        %v659 = vadd.f32 0.0, %v658
        %v660 = vpop.f32.mrb[0].mxu0
        %661 = vmatprep.mubr.bf16.mxu0 0
        %662 = vmatmul.mubr.bf16.gmra.mrb[0].mxu0 %v545
        %v663 = vpop.f32.mrb[0].mxu0
        %v664 = vadd.f32 0.0, %v663
        %v665 = vpop.f32.mrb[0].mxu0
        %v666 = vpop.f32.mrb[0].mxu0
        %v667 = vadd.f32 0.0, %v666
        %v668 = vpop.f32.mrb[0].mxu0
        %669 = vmatprep.mubr.bf16.mxu0 0
        %670 = vmatmul.mubr.bf16.gmra.mrb[0].mxu0 %v548
        %v671 = vpop.f32.mrb[0].mxu0
        %v672 = vadd.f32 0.0, %v671
        %v673 = vpop.f32.mrb[0].mxu0
        %v674 = vpop.f32.mrb[0].mxu0
        %v675 = vadd.f32 0.0, %v674
        %v676 = vpop.f32.mrb[0].mxu0
        %677 = vmatprep.mubr.bf16.mxu0 0
        %678 = vmatmul.mubr.bf16.gmra.mrb[0].mxu0 %v551
        %v679 = vpop.f32.mrb[0].mxu0
        %v680 = vadd.f32 0.0, %v679
        %v681 = vpop.f32.mrb[0].mxu0
        %v682 = vpop.f32.mrb[0].mxu0
        %v683 = vadd.f32 0.0, %v682
        %v684 = vpop.f32.mrb[0].mxu0
        %685 = vmatprep.mubr.bf16.mxu0 0
        %686 = vmatmul.mubr.bf16.gmra.mrb[0].mxu0 %v554
        %v687 = vpop.f32.mrb[0].mxu0
        %v688 = vadd.f32 0.0, %v687
        %v689 = vpop.f32.mrb[0].mxu0
        %v690 = vpop.f32.mrb[0].mxu0
        %v691 = vadd.f32 0.0, %v690
        %v692 = vpop.f32.mrb[0].mxu0
        %693 = vmatprep.mubr.bf16.mxu0 0
        %694 = vmatmul.mubr.bf16.gmra.mrb[0].mxu0 %v557
        %v695 = vpop.f32.mrb[0].mxu0
        %v696 = vadd.f32 0.0, %v695
        %v697 = vpop.f32.mrb[0].mxu0
        %v698 = vpop.f32.mrb[0].mxu0
        %v699 = vadd.f32 0.0, %v698
        %v700 = vpop.f32.mrb[0].mxu0
        %701 = vmatprep.mubr.bf16.mxu0 0
        %702 = vmatmul.mubr.bf16.gmra.mrb[0].mxu0 %v560
        %v703 = vpop.f32.mrb[0].mxu0
        %v704 = vadd.f32 0.0, %v703
        %v705 = vpop.f32.mrb[0].mxu0
        %v706 = vpop.f32.mrb[0].mxu0
        %v707 = vadd.f32 0.0, %v706
        %v708 = vpop.f32.mrb[0].mxu0
        %709 = vmatprep.mubr.bf16.mxu0 0
        %710 = vmatmul.mubr.bf16.gmra.mrb[0].mxu0 %v563
        %v711 = vpop.f32.mrb[0].mxu0
        %v712 = vadd.f32 0.0, %v711
        %v713 = vpop.f32.mrb[0].mxu0
        %v714 = vpop.f32.mrb[0].mxu0
        %v715 = vadd.f32 0.0, %v714
        %v716 = vpop.f32.mrb[0].mxu0
        %717 = vmatprep.mubr.bf16.mxu0 0
        %718 = vmatmul.mubr.bf16.gmra.mrb[0].mxu0 %v566
        %v719 = vpop.f32.mrb[0].mxu0
        %v720 = vadd.f32 0.0, %v719
        %v721 = vpop.f32.mrb[0].mxu0
        %v722 = vpop.f32.mrb[0].mxu0
        %v723 = vadd.f32 0.0, %v722
        %v724 = vpop.f32.mrb[0].mxu0
        %725 = vmatprep.mubr.bf16.mxu0 0
        %726 = vmatmul.mubr.bf16.gmra.mrb[0].mxu0 %v569
        %v727 = vpop.f32.mrb[0].mxu0
        %v728 = vadd.f32 0.0, %v727
        %v729 = vpop.f32.mrb[0].mxu0
        %v730 = vpop.f32.mrb[0].mxu0
        %v731 = vadd.f32 0.0, %v730
        %v732 = vpop.f32.mrb[0].mxu0
        %733 = vmatprep.mubr.bf16.mxu0 0
        %734 = vmatmul.mubr.bf16.gmra.mrb[0].mxu0 %v572
        %v735 = vpop.f32.mrb[0].mxu0
        %v736 = vadd.f32 0.0, %v735
        %v737 = vpop.f32.mrb[0].mxu0
        %v738 = vpop.f32.mrb[0].mxu0
        %v739 = vadd.f32 0.0, %v738
        %v740 = vpop.f32.mrb[0].mxu0
        %741 = vmatprep.mubr.bf16.mxu0 0
        %742 = vmatmul.mubr.bf16.gmra.mrb[0].mxu0 %v575
        %v743 = vpop.f32.mrb[0].mxu0
        %v744 = vadd.f32 0.0, %v743
        %v745 = vpop.f32.mrb[0].mxu0
        %v746 = vpop.f32.mrb[0].mxu0
        %v747 = vadd.f32 0.0, %v746
        %v748 = vpop.f32.mrb[0].mxu0
        %749 = vmatprep.mubr.bf16.mxu0 0
        %750 = vmatmul.mubr.bf16.gmra.mrb[0].mxu0 %v578
        %v751 = vpop.f32.mrb[0].mxu0
        %v752 = vadd.f32 0.0, %v751
        %v753 = vpop.f32.mrb[0].mxu0
        %v754 = vpop.f32.mrb[0].mxu0
        %v755 = vadd.f32 0.0, %v754
        %v756 = vpop.f32.mrb[0].mxu0
        %757 = vmatprep.mubr.bf16.mxu0 0
        %758 = vmatmul.mubr.bf16.gmra.mrb[0].mxu0 %v581
        %v759 = vpop.f32.mrb[0].mxu0
        %v760 = vadd.f32 0.0, %v759
        %v761 = vpop.f32.mrb[0].mxu0
        %v762 = vpop.f32.mrb[0].mxu0
        %v763 = vadd.f32 0.0, %v762
        %v764 = vpop.f32.mrb[0].mxu0
        %765 = vmatprep.mubr.bf16.mxu0 0
        %766 = vmatmul.mubr.bf16.gmra.mrb[0].mxu0 %v584
        %v767 = vpop.f32.mrb[0].mxu0
        %v768 = vadd.f32 0.0, %v767
        %v769 = vpop.f32.mrb[0].mxu0
        %v770 = vpop.f32.mrb[0].mxu0
        %v771 = vadd.f32 0.0, %v770
        %v772 = vpop.f32.mrb[0].mxu0
        %773 = vmatprep.mubr.bf16.mxu0 0
        %774 = vmatmul.mubr.bf16.gmra.mrb[0].mxu0 %v587
        %v775 = vpop.f32.mrb[0].mxu0
        %v776 = vadd.f32 0.0, %v775
        %v777 = vpop.f32.mrb[0].mxu0
        %v778 = vpop.f32.mrb[0].mxu0
        %v779 = vadd.f32 0.0, %v778
        %v780 = vpop.f32.mrb[0].mxu0
        %781 = vdwg.mxu0
        %v782 = vmax.f32 %v624, %v664
        %v783 = vmax.f32 %v627, %v667
        %v784 = vmax.f32 %v632, %v672
        %v785 = vmax.f32 %v635, %v675
        %v786 = vmax.f32 %v640, %v680
        %v787 = vmax.f32 %v643, %v683
        %v788 = vmax.f32 %v648, %v688
        %v789 = vmax.f32 %v651, %v691
        %v790 = vmax.f32 %v656, %v696
        %v791 = vmax.f32 %v659, %v699
        %v792 = vmax.f32 %v704, %v744
        %v793 = vmax.f32 %v707, %v747
        %v794 = vmax.f32 %v712, %v752
        %v795 = vmax.f32 %v715, %v755
        %v796 = vmax.f32 %v720, %v760
        %v797 = vmax.f32 %v723, %v763
        %v798 = vmax.f32 %v728, %v768
        %v799 = vmax.f32 %v731, %v771
        %v800 = vmax.f32 %v736, %v776
        %v801 = vmax.f32 %v739, %v779
        %v802 = vmax.f32 %v782, %v792
        %v803 = vmax.f32 %v783, %v793
        %v804 = vmax.f32 %v784, %v794
        %v805 = vmax.f32 %v785, %v795
        %v806 = vmax.f32 %v786, %v796
        %v807 = vmax.f32 %v787, %v797
        %v808 = vmax.f32 %v788, %v798
        %v809 = vmax.f32 %v789, %v799
        %v810 = vmax.f32 %v790, %v800
        %v811 = vmax.f32 %v791, %v801
        %v812 = vld [vmem:[%s2] sm:$0x1]
        %v814 = vlaneseq
        %v815 = vshrl.u32 %v814, 7
        %v816 = vsub.s32 0, %v815
        %v817 = vrot.slane %v812, %v816
        %v819 = vadd.f32 %v802, %v817
        %v820 = vadd.f32 %v803, %v817
        %v821 = vadd.f32 %v804, %v817
        %v822 = vadd.f32 %v805, %v817
        %v823 = vadd.f32 %v806, %v817
        %v824 = vadd.f32 %v807, %v817
        %v825 = vadd.f32 %v808, %v817
        %v826 = vadd.f32 %v809, %v817
        %v827 = vadd.f32 %v810, %v817
        %v828 = vadd.f32 %v811, %v817
        %v829 = vmax.f32 %v819, 0.0
        %v830 = vmax.f32 %v820, 0.0
        %v831 = vmax.f32 %v821, 0.0
        %v832 = vmax.f32 %v822, 0.0
        %v833 = vmax.f32 %v823, 0.0
        %v834 = vmax.f32 %v824, 0.0
        %v835 = vmax.f32 %v825, 0.0
        %v836 = vmax.f32 %v826, 0.0
        %v837 = vmax.f32 %v827, 0.0
        %v838 = vmax.f32 %v828, 0.0
        %v839 = vpack.c.bf16 %v830, %v829
        %v840 = vpack.c.bf16 %v832, %v831
        %v841 = vpack.c.bf16 %v834, %v833
        %v842 = vpack.c.bf16 %v836, %v835
        %v843 = vpack.c.bf16 %v838, %v837
        %v849 = vunpack.c.l.b16 %v839
        %v850 = vunpack.c.h.b16 %v839
        %v851 = vunpack.c.l.b16 %v840
        %v852 = vunpack.c.h.b16 %v840
        %v853 = vunpack.c.l.b16 %v841
        %v854 = vunpack.c.h.b16 %v841
        %v855 = vunpack.c.l.b16 %v842
        %v856 = vunpack.c.h.b16 %v842
        %v857 = vunpack.c.l.b16 %v843
        %v858 = vunpack.c.h.b16 %v843
        %v859 = vpack.c.b16 %v849, %v849
        %v860 = vpack.c.b16 %v850, %v850
        %v861 = vpack.c.b16 %v851, %v851
        %v862 = vpack.c.b16 %v852, %v852
        %v863 = vpack.c.b16 %v853, %v853
        %v864 = vpack.c.b16 %v854, %v854
        %v865 = vpack.c.b16 %v855, %v855
        %v866 = vpack.c.b16 %v856, %v856
        %v867 = vpack.c.b16 %v857, %v857
        %v868 = vpack.c.b16 %v858, %v858
        %vm879 = vcmask 60416
        %880 = vst.msk [vmem:[%s369] sm:$0xf] %vm879, %v859
        %881 = vst.msk [vmem:[%s369 + $0x4] sm:$0xf] %vm879, %v860
        %882 = vst.msk [vmem:[%s369 + $0x8] sm:$0xf] %vm879, %v861
        %883 = vst.msk [vmem:[%s369 + $0xc] sm:$0xf] %vm879, %v862
        %884 = vst.msk [vmem:[%s369 + $0x10] sm:$0xf] %vm879, %v863
        %885 = vst.msk [vmem:[%s369 + $0x14] sm:$0xf] %vm879, %v864
        %886 = vst.msk [vmem:[%s369 + $0x18] sm:$0xf] %vm879, %v865
        %887 = vst.msk [vmem:[%s369 + $0x1c] sm:$0xf] %vm879, %v866
        %888 = vst.msk [vmem:[%s369 + $0x20] sm:$0xf] %vm879, %v867
        %889 = vst.msk [vmem:[%s369 + $0x24] sm:$0xf] %vm879, %v868
        %s890 = smul.u32 10, %s14
        %p891 = scmp.lt.s32.totalorder %s890, 39
        %s892 = scalar_select %p891, %s890, 39
        %s893 = smul.addr %s892, 4
        %s894 = scalar_lea.vmem %s3, %s893
        // Predicated region
        $region74: #{lenet5_forward.2} parent=68 // pred_check
          %p895 = pneg %p100
        $region75: #{lenet5_forward.2} parent=68 // pred_check_branch
          %897 = sbr.rel (%p895) target = $region77
        $region76: #{lenet5_forward.2} parent=68 // pred_region
          %s898 = smul.u32 10, %s14
        $region77: #{lenet5_forward.2} parent=68 // pred_fallthru
          _
      $region69: #{lenet5_forward.2} parent=5 // pred_fallthru
        _
      %p899 = scmp.le.s32.totalorder 2, %s9
      // Predicated region
      $region78: #{lenet5_forward.2} parent=5 // pred_check
        %p900 = pneg %p899
      $region79: #{lenet5_forward.2} parent=5 // pred_check_branch
        %902 = sbr.rel (%p900) target = $region81
      $region80: #{lenet5_forward.2} parent=5 // pred_region
        %s903 = ssub.s32 %s9, 2
        // Predicated region
        $region82: #{lenet5_forward.2} parent=80 // pred_check
          %p904 = pneg %p106
        $region83: #{lenet5_forward.2} parent=80 // pred_check_branch
          %906 = sbr.rel (%p904) target = $region85
        $region84: #{lenet5_forward.2} parent=80 // pred_region
          %s907 = smul.u32 10, %s15
          %p908 = scmp.lt.s32.totalorder %s907, 39
          %s909 = scalar_select %p908, %s907, 39
          %s910 = smul.addr %s909, 4
          %s911 = scalar_lea.vmem %s3, %s910
        $region85: #{lenet5_forward.2} parent=80 // pred_fallthru
          _
      $region81: #{lenet5_forward.2} parent=5 // pred_fallthru
        _
    $region6: #{lenet5_forward.2} parent=1 // loop_footer
      %s13 = sadd.s32 1, %s9
    $region7: #{lenet5_forward.2} parent=1 // loop_footer_branch
      %8 = sbr.rel target = $region3
    $region8: #{lenet5_forward.2} parent=1 // loop_exit
      _

// kernel: lenet5_forward.3
$region0: #{lenet5_forward.3}
  #allocation0 [shape = 'u32[]', space=smem, size = 0x4, offset = 0x4, fixed_abs, tag = 'smem constant byte address 0x4 - core index']
  #allocation1 [shape = 'u32[144,128]{1,0:T(1,128)}', space=vmem, size = 0x12000, scoped, tag = 'internal scratch']
  %s0 = inlined_call_operand.vmem [shape: bf16[4,16,2400], index: 0, kind: input, shape index: {}]
  %s1 = inlined_call_operand.vmem [shape: bf16[2400,256], index: 1, kind: input, shape index: {}]
  %s2 = inlined_call_operand.vmem [shape: f32[1,256], index: 2, kind: input, shape index: {}]
  %s3 = inlined_call_operand.vmem [shape: bf16[256,128], index: 3, kind: input, shape index: {}]
  %s4 = inlined_call_operand.vmem [shape: f32[1,128], index: 4, kind: input, shape index: {}]
  %s5 = inlined_call_operand.vmem [shape: bf16[128,128], index: 5, kind: input, shape index: {}]
  %s6 = inlined_call_operand.vmem [shape: f32[1,128], index: 6, kind: input, shape index: {}]
  %s7 = inlined_call_operand.vmem [shape: bf16[128,128], index: 7, kind: input, shape index: {}]
  %s8 = inlined_call_operand.vmem [shape: f32[1,128], index: 8, kind: input, shape index: {}]
  %s9 = inlined_call_operand.vmem [shape: f32[16,128], index: 9, kind: output, shape index: {}]
  %s10 = sld [smem:[#allocation0]]
  $region46: #{lenet5_forward.3} parent=0
    _
  %s12 = ssub.s32 1, %s10
  %s13 = scalar_select 0, %s12, %s10
  // Predicated region
  $region2: #{lenet5_forward.3} parent=0 // pred_check
    _
  $region3: #{lenet5_forward.3} parent=0 // pred_check_branch
    %15 = sbr.rel (0) target = $region5
  $region4: #{lenet5_forward.3} parent=0 // pred_region
    _
  $region5: #{lenet5_forward.3} parent=0 // pred_fallthru
    _
  // Predicated region
  $region6: #{lenet5_forward.3} parent=0 // pred_check
    _
  $region7: #{lenet5_forward.3} parent=0 // pred_check_branch
    %17 = sbr.rel (0) target = $region9
  $region8: #{lenet5_forward.3} parent=0 // pred_region
    _
  $region9: #{lenet5_forward.3} parent=0 // pred_fallthru
    _
  // Predicated region
  $region10: #{lenet5_forward.3} parent=0 // pred_check
    _
  $region11: #{lenet5_forward.3} parent=0 // pred_check_branch
    %19 = sbr.rel (0) target = $region13
  $region12: #{lenet5_forward.3} parent=0 // pred_region
    _
  $region13: #{lenet5_forward.3} parent=0 // pred_fallthru
    _
  // Predicated region
  $region14: #{lenet5_forward.3} parent=0 // pred_check
    _
  $region15: #{lenet5_forward.3} parent=0 // pred_check_branch
    %21 = sbr.rel (0) target = $region17
  $region16: #{lenet5_forward.3} parent=0 // pred_region
    _
  $region17: #{lenet5_forward.3} parent=0 // pred_fallthru
    _
  // Predicated region
  $region18: #{lenet5_forward.3} parent=0 // pred_check
    _
  $region19: #{lenet5_forward.3} parent=0 // pred_check_branch
    %23 = sbr.rel (0) target = $region21
  $region20: #{lenet5_forward.3} parent=0 // pred_region
    _
  $region21: #{lenet5_forward.3} parent=0 // pred_fallthru
    _
  // Predicated region
  $region22: #{lenet5_forward.3} parent=0 // pred_check
    _
  $region23: #{lenet5_forward.3} parent=0 // pred_check_branch
    %25 = sbr.rel (0) target = $region25
  $region24: #{lenet5_forward.3} parent=0 // pred_region
    _
  $region25: #{lenet5_forward.3} parent=0 // pred_fallthru
    _
  // Predicated region
  $region26: #{lenet5_forward.3} parent=0 // pred_check
    _
  $region27: #{lenet5_forward.3} parent=0 // pred_check_branch
    %27 = sbr.rel (0) target = $region29
  $region28: #{lenet5_forward.3} parent=0 // pred_region
    _
  $region29: #{lenet5_forward.3} parent=0 // pred_fallthru
    _
  // Predicated region
  $region30: #{lenet5_forward.3} parent=0 // pred_check
    _
  $region31: #{lenet5_forward.3} parent=0 // pred_check_branch
    %29 = sbr.rel (0) target = $region33
  $region32: #{lenet5_forward.3} parent=0 // pred_region
    _
  $region33: #{lenet5_forward.3} parent=0 // pred_fallthru
    _
  // Predicated region
  $region34: #{lenet5_forward.3} parent=0 // pred_check
    _
  $region35: #{lenet5_forward.3} parent=0 // pred_check_branch
    %31 = sbr.rel (0) target = $region37
  $region36: #{lenet5_forward.3} parent=0 // pred_region
    _
  $region37: #{lenet5_forward.3} parent=0 // pred_fallthru
    _
  %v33 = vld [vmem:[%s0] sm:$0xff]
  %v34 = vld [vmem:[%s0 + $0x8] sm:$0xff]
  %v35 = vld [vmem:[%s0 + $0x10] sm:$0xff]
  %v36 = vld [vmem:[%s0 + $0x18] sm:$0xff]
  %v37 = vld [vmem:[%s0 + $0x20] sm:$0xff]
  %v38 = vld [vmem:[%s0 + $0x28] sm:$0xff]
  %v39 = vld [vmem:[%s0 + $0x30] sm:$0xff]
  %v40 = vld [vmem:[%s0 + $0x38] sm:$0xff]
  %v41 = vld [vmem:[%s0 + $0x40] sm:$0xff]
  %v42 = vld [vmem:[%s0 + $0x48] sm:$0xf]
  %v43 = vld [vmem:[%s0 + $0x4c] sm:$0xff]
  %v44 = vld [vmem:[%s0 + $0x54] sm:$0xff]
  %v45 = vld [vmem:[%s0 + $0x5c] sm:$0xff]
  %v46 = vld [vmem:[%s0 + $0x64] sm:$0xff]
  %v47 = vld [vmem:[%s0 + $0x6c] sm:$0xff]
  %v48 = vld [vmem:[%s0 + $0x74] sm:$0xff]
  %v49 = vld [vmem:[%s0 + $0x7c] sm:$0xff]
  %v50 = vld [vmem:[%s0 + $0x84] sm:$0xff]
  %v51 = vld [vmem:[%s0 + $0x8c] sm:$0xff]
  %v52 = vld [vmem:[%s0 + $0x94] sm:$0xf]
  %v53 = vld [vmem:[%s0 + $0x98] sm:$0xff]
  %v54 = vld [vmem:[%s0 + $0xa0] sm:$0xff]
  %v55 = vld [vmem:[%s0 + $0xa8] sm:$0xff]
  %v56 = vld [vmem:[%s0 + $0xb0] sm:$0xff]
  %v57 = vld [vmem:[%s0 + $0xb8] sm:$0xff]
  %v58 = vld [vmem:[%s0 + $0xc0] sm:$0xff]
  %v59 = vld [vmem:[%s0 + $0xc8] sm:$0xff]
  %v60 = vld [vmem:[%s0 + $0xd0] sm:$0xff]
  %v61 = vld [vmem:[%s0 + $0xd8] sm:$0xff]
  %v62 = vld [vmem:[%s0 + $0xe0] sm:$0xf]
  %v63 = vld [vmem:[%s0 + $0xe4] sm:$0xff]
  %v64 = vld [vmem:[%s0 + $0xec] sm:$0xff]
  %v65 = vld [vmem:[%s0 + $0xf4] sm:$0xff]
  %v66 = vld [vmem:[%s0 + $0xfc] sm:$0xff]
  %v67 = vld [vmem:[%s0 + $0x104] sm:$0xff]
  %v68 = vld [vmem:[%s0 + $0x10c] sm:$0xff]
  %v69 = vld [vmem:[%s0 + $0x114] sm:$0xff]
  %v70 = vld [vmem:[%s0 + $0x11c] sm:$0xff]
  %v71 = vld [vmem:[%s0 + $0x124] sm:$0xff]
  %v72 = vld [vmem:[%s0 + $0x12c] sm:$0xf]
  %v73 = vld [vmem:[%s0 + $0x130] sm:$0xff]
  %v74 = vld [vmem:[%s0 + $0x138] sm:$0xff]
  %v75 = vld [vmem:[%s0 + $0x140] sm:$0xff]
  %v76 = vld [vmem:[%s0 + $0x148] sm:$0xff]
  %v77 = vld [vmem:[%s0 + $0x150] sm:$0xff]
  %v78 = vld [vmem:[%s0 + $0x158] sm:$0xff]
  %v79 = vld [vmem:[%s0 + $0x160] sm:$0xff]
  %v80 = vld [vmem:[%s0 + $0x168] sm:$0xff]
  %v81 = vld [vmem:[%s0 + $0x170] sm:$0xff]
  %v82 = vld [vmem:[%s0 + $0x178] sm:$0xf]
  %v83 = vld [vmem:[%s0 + $0x17c] sm:$0xff]
  %v84 = vld [vmem:[%s0 + $0x184] sm:$0xff]
  %v85 = vld [vmem:[%s0 + $0x18c] sm:$0xff]
  %v86 = vld [vmem:[%s0 + $0x194] sm:$0xff]
  %v87 = vld [vmem:[%s0 + $0x19c] sm:$0xff]
  %v88 = vld [vmem:[%s0 + $0x1a4] sm:$0xff]
  %v89 = vld [vmem:[%s0 + $0x1ac] sm:$0xff]
  %v90 = vld [vmem:[%s0 + $0x1b4] sm:$0xff]
  %v91 = vld [vmem:[%s0 + $0x1bc] sm:$0xff]
  %v92 = vld [vmem:[%s0 + $0x1c4] sm:$0xf]
  %v93 = vld [vmem:[%s0 + $0x1c8] sm:$0xff]
  %v94 = vld [vmem:[%s0 + $0x1d0] sm:$0xff]
  %v95 = vld [vmem:[%s0 + $0x1d8] sm:$0xff]
  %v96 = vld [vmem:[%s0 + $0x1e0] sm:$0xff]
  %v97 = vld [vmem:[%s0 + $0x1e8] sm:$0xff]
  %v98 = vld [vmem:[%s0 + $0x1f0] sm:$0xff]
  %v99 = vld [vmem:[%s0 + $0x1f8] sm:$0xff]
  %v100 = vld [vmem:[%s0 + $0x200] sm:$0xff]
  %v101 = vld [vmem:[%s0 + $0x208] sm:$0xff]
  %v102 = vld [vmem:[%s0 + $0x210] sm:$0xf]
  %v103 = vld [vmem:[%s0 + $0x214] sm:$0xff]
  %v104 = vld [vmem:[%s0 + $0x21c] sm:$0xff]
  %v105 = vld [vmem:[%s0 + $0x224] sm:$0xff]
  %v106 = vld [vmem:[%s0 + $0x22c] sm:$0xff]
  %v107 = vld [vmem:[%s0 + $0x234] sm:$0xff]
  %v108 = vld [vmem:[%s0 + $0x23c] sm:$0xff]
  %v109 = vld [vmem:[%s0 + $0x244] sm:$0xff]
  %v110 = vld [vmem:[%s0 + $0x24c] sm:$0xff]
  %v111 = vld [vmem:[%s0 + $0x254] sm:$0xff]
  %v112 = vld [vmem:[%s0 + $0x25c] sm:$0xf]
  %v113 = vld [vmem:[%s1] sm:$0xff]
  %v114 = vld [vmem:[%s1 + $0x8] sm:$0xff]
  %v115 = vld [vmem:[%s1 + $0x10] sm:$0xff]
  %v116 = vld [vmem:[%s1 + $0x18] sm:$0xff]
  %v117 = vld [vmem:[%s1 + $0x20] sm:$0xff]
  %v118 = vld [vmem:[%s1 + $0x28] sm:$0xff]
  %v119 = vld [vmem:[%s1 + $0x30] sm:$0xff]
  %v120 = vld [vmem:[%s1 + $0x38] sm:$0xff]
  %v121 = vld [vmem:[%s1 + $0x40] sm:$0xff]
  %v122 = vld [vmem:[%s1 + $0x48] sm:$0xff]
  %v123 = vld [vmem:[%s1 + $0x50] sm:$0xff]
  %v124 = vld [vmem:[%s1 + $0x58] sm:$0xff]
  %v125 = vld [vmem:[%s1 + $0x60] sm:$0xff]
  %v126 = vld [vmem:[%s1 + $0x68] sm:$0xff]
  %v127 = vld [vmem:[%s1 + $0x70] sm:$0xff]
  %v128 = vld [vmem:[%s1 + $0x78] sm:$0xff]
  %v129 = vld [vmem:[%s1 + $0x80] sm:$0xff]
  %v130 = vld [vmem:[%s1 + $0x88] sm:$0xff]
  %v131 = vld [vmem:[%s1 + $0x90] sm:$0xff]
  %v132 = vld [vmem:[%s1 + $0x98] sm:$0xff]
  %v133 = vld [vmem:[%s1 + $0xa0] sm:$0xff]
  %v134 = vld [vmem:[%s1 + $0xa8] sm:$0xff]
  %v135 = vld [vmem:[%s1 + $0xb0] sm:$0xff]
  %v136 = vld [vmem:[%s1 + $0xb8] sm:$0xff]
  %v137 = vld [vmem:[%s1 + $0xc0] sm:$0xff]
  %v138 = vld [vmem:[%s1 + $0xc8] sm:$0xff]
  %v139 = vld [vmem:[%s1 + $0xd0] sm:$0xff]
  %v140 = vld [vmem:[%s1 + $0xd8] sm:$0xff]
  %v141 = vld [vmem:[%s1 + $0xe0] sm:$0xff]
  %v142 = vld [vmem:[%s1 + $0xe8] sm:$0xff]
  %v143 = vld [vmem:[%s1 + $0xf0] sm:$0xff]
  %v144 = vld [vmem:[%s1 + $0xf8] sm:$0xff]
  %v145 = vld [vmem:[%s1 + $0x100] sm:$0xff]
  %v146 = vld [vmem:[%s1 + $0x108] sm:$0xff]
  %v147 = vld [vmem:[%s1 + $0x110] sm:$0xff]
  %v148 = vld [vmem:[%s1 + $0x118] sm:$0xff]
  %v149 = vld [vmem:[%s1 + $0x120] sm:$0xff]
  %v150 = vld [vmem:[%s1 + $0x128] sm:$0xff]
  %v151 = vld [vmem:[%s1 + $0x130] sm:$0xff]
  %v152 = vld [vmem:[%s1 + $0x138] sm:$0xff]
  %v153 = vld [vmem:[%s1 + $0x140] sm:$0xff]
  %v154 = vld [vmem:[%s1 + $0x148] sm:$0xff]
  %v155 = vld [vmem:[%s1 + $0x150] sm:$0xff]
  %v156 = vld [vmem:[%s1 + $0x158] sm:$0xff]
  %v157 = vld [vmem:[%s1 + $0x160] sm:$0xff]
  %v158 = vld [vmem:[%s1 + $0x168] sm:$0xff]
  %v159 = vld [vmem:[%s1 + $0x170] sm:$0xff]
  %v160 = vld [vmem:[%s1 + $0x178] sm:$0xff]
  %v161 = vld [vmem:[%s1 + $0x180] sm:$0xff]
  %v162 = vld [vmem:[%s1 + $0x188] sm:$0xff]
  %v163 = vld [vmem:[%s1 + $0x190] sm:$0xff]
  %v164 = vld [vmem:[%s1 + $0x198] sm:$0xff]
  %v165 = vld [vmem:[%s1 + $0x1a0] sm:$0xff]
  %v166 = vld [vmem:[%s1 + $0x1a8] sm:$0xff]
  %v167 = vld [vmem:[%s1 + $0x1b0] sm:$0xff]
  %v168 = vld [vmem:[%s1 + $0x1b8] sm:$0xff]
  %v169 = vld [vmem:[%s1 + $0x1c0] sm:$0xff]
  %v170 = vld [vmem:[%s1 + $0x1c8] sm:$0xff]
  %v171 = vld [vmem:[%s1 + $0x1d0] sm:$0xff]
  %v172 = vld [vmem:[%s1 + $0x1d8] sm:$0xff]
  %v173 = vld [vmem:[%s1 + $0x1e0] sm:$0xff]
  %v174 = vld [vmem:[%s1 + $0x1e8] sm:$0xff]
  %v175 = vld [vmem:[%s1 + $0x1f0] sm:$0xff]
  %v176 = vld [vmem:[%s1 + $0x1f8] sm:$0xff]
  %v177 = vld [vmem:[%s1 + $0x200] sm:$0xff]
  %v178 = vld [vmem:[%s1 + $0x208] sm:$0xff]
  %v179 = vld [vmem:[%s1 + $0x210] sm:$0xff]
  %v180 = vld [vmem:[%s1 + $0x218] sm:$0xff]
  %v181 = vld [vmem:[%s1 + $0x220] sm:$0xff]
  %v182 = vld [vmem:[%s1 + $0x228] sm:$0xff]
  %v183 = vld [vmem:[%s1 + $0x230] sm:$0xff]
  %v184 = vld [vmem:[%s1 + $0x238] sm:$0xff]
  %v185 = vld [vmem:[%s1 + $0x240] sm:$0xff]
  %v186 = vld [vmem:[%s1 + $0x248] sm:$0xff]
  %v187 = vld [vmem:[%s1 + $0x250] sm:$0xff]
  %v188 = vld [vmem:[%s1 + $0x258] sm:$0xff]
  %v189 = vld [vmem:[%s1 + $0x260] sm:$0xff]
  %v190 = vld [vmem:[%s1 + $0x268] sm:$0xff]
  %v191 = vld [vmem:[%s1 + $0x270] sm:$0xff]
  %v192 = vld [vmem:[%s1 + $0x278] sm:$0xff]
  %v193 = vld [vmem:[%s1 + $0x280] sm:$0xff]
  %v194 = vld [vmem:[%s1 + $0x288] sm:$0xff]
  %v195 = vld [vmem:[%s1 + $0x290] sm:$0xff]
  %v196 = vld [vmem:[%s1 + $0x298] sm:$0xff]
  %v197 = vld [vmem:[%s1 + $0x2a0] sm:$0xff]
  %v198 = vld [vmem:[%s1 + $0x2a8] sm:$0xff]
  %v199 = vld [vmem:[%s1 + $0x2b0] sm:$0xff]
  %v200 = vld [vmem:[%s1 + $0x2b8] sm:$0xff]
  %v201 = vld [vmem:[%s1 + $0x2c0] sm:$0xff]
  %v202 = vld [vmem:[%s1 + $0x2c8] sm:$0xff]
  %v203 = vld [vmem:[%s1 + $0x2d0] sm:$0xff]
  %v204 = vld [vmem:[%s1 + $0x2d8] sm:$0xff]
  %v205 = vld [vmem:[%s1 + $0x2e0] sm:$0xff]
  %v206 = vld [vmem:[%s1 + $0x2e8] sm:$0xff]
  %v207 = vld [vmem:[%s1 + $0x2f0] sm:$0xff]
  %v208 = vld [vmem:[%s1 + $0x2f8] sm:$0xff]
  %v209 = vld [vmem:[%s1 + $0x300] sm:$0xff]
  %v210 = vld [vmem:[%s1 + $0x308] sm:$0xff]
  %v211 = vld [vmem:[%s1 + $0x310] sm:$0xff]
  %v212 = vld [vmem:[%s1 + $0x318] sm:$0xff]
  %v213 = vld [vmem:[%s1 + $0x320] sm:$0xff]
  %v214 = vld [vmem:[%s1 + $0x328] sm:$0xff]
  %v215 = vld [vmem:[%s1 + $0x330] sm:$0xff]
  %v216 = vld [vmem:[%s1 + $0x338] sm:$0xff]
  %v217 = vld [vmem:[%s1 + $0x340] sm:$0xff]
  %v218 = vld [vmem:[%s1 + $0x348] sm:$0xff]
  %v219 = vld [vmem:[%s1 + $0x350] sm:$0xff]
  %v220 = vld [vmem:[%s1 + $0x358] sm:$0xff]
  %v221 = vld [vmem:[%s1 + $0x360] sm:$0xff]
  %v222 = vld [vmem:[%s1 + $0x368] sm:$0xff]
  %v223 = vld [vmem:[%s1 + $0x370] sm:$0xff]
  %v224 = vld [vmem:[%s1 + $0x378] sm:$0xff]
  %v225 = vld [vmem:[%s1 + $0x380] sm:$0xff]
  %v226 = vld [vmem:[%s1 + $0x388] sm:$0xff]
  %v227 = vld [vmem:[%s1 + $0x390] sm:$0xff]
  %v228 = vld [vmem:[%s1 + $0x398] sm:$0xff]
  %v229 = vld [vmem:[%s1 + $0x3a0] sm:$0xff]
  %v230 = vld [vmem:[%s1 + $0x3a8] sm:$0xff]
  %v231 = vld [vmem:[%s1 + $0x3b0] sm:$0xff]
  %v232 = vld [vmem:[%s1 + $0x3b8] sm:$0xff]
  %v233 = vld [vmem:[%s1 + $0x3c0] sm:$0xff]
  %v234 = vld [vmem:[%s1 + $0x3c8] sm:$0xff]
  %v235 = vld [vmem:[%s1 + $0x3d0] sm:$0xff]
  %v236 = vld [vmem:[%s1 + $0x3d8] sm:$0xff]
  %v237 = vld [vmem:[%s1 + $0x3e0] sm:$0xff]
  %v238 = vld [vmem:[%s1 + $0x3e8] sm:$0xff]
  %v239 = vld [vmem:[%s1 + $0x3f0] sm:$0xff]
  %v240 = vld [vmem:[%s1 + $0x3f8] sm:$0xff]
  %v241 = vld [vmem:[%s1 + $0x400] sm:$0xff]
  %v242 = vld [vmem:[%s1 + $0x408] sm:$0xff]
  %v243 = vld [vmem:[%s1 + $0x410] sm:$0xff]
  %v244 = vld [vmem:[%s1 + $0x418] sm:$0xff]
  %v245 = vld [vmem:[%s1 + $0x420] sm:$0xff]
  %v246 = vld [vmem:[%s1 + $0x428] sm:$0xff]
  %v247 = vld [vmem:[%s1 + $0x430] sm:$0xff]
  %v248 = vld [vmem:[%s1 + $0x438] sm:$0xff]
  %v249 = vld [vmem:[%s1 + $0x440] sm:$0xff]
  %v250 = vld [vmem:[%s1 + $0x448] sm:$0xff]
  %v251 = vld [vmem:[%s1 + $0x450] sm:$0xff]
  %v252 = vld [vmem:[%s1 + $0x458] sm:$0xff]
  %v253 = vld [vmem:[%s1 + $0x460] sm:$0xff]
  %v254 = vld [vmem:[%s1 + $0x468] sm:$0xff]
  %v255 = vld [vmem:[%s1 + $0x470] sm:$0xff]
  %v256 = vld [vmem:[%s1 + $0x478] sm:$0xff]
  %v257 = vld [vmem:[%s1 + $0x480] sm:$0xff]
  %v258 = vld [vmem:[%s1 + $0x488] sm:$0xff]
  %v259 = vld [vmem:[%s1 + $0x490] sm:$0xff]
  %v260 = vld [vmem:[%s1 + $0x498] sm:$0xff]
  %v261 = vld [vmem:[%s1 + $0x4a0] sm:$0xff]
  %v262 = vld [vmem:[%s1 + $0x4a8] sm:$0xff]
  %v263 = vld [vmem:[%s1 + $0x4b0] sm:$0xff]
  %v264 = vld [vmem:[%s1 + $0x4b8] sm:$0xff]
  %v265 = vld [vmem:[%s1 + $0x4c0] sm:$0xff]
  %v266 = vld [vmem:[%s1 + $0x4c8] sm:$0xff]
  %v267 = vld [vmem:[%s1 + $0x4d0] sm:$0xff]
  %v268 = vld [vmem:[%s1 + $0x4d8] sm:$0xff]
  %v269 = vld [vmem:[%s1 + $0x4e0] sm:$0xff]
  %v270 = vld [vmem:[%s1 + $0x4e8] sm:$0xff]
  %v271 = vld [vmem:[%s1 + $0x4f0] sm:$0xff]
  %v272 = vld [vmem:[%s1 + $0x4f8] sm:$0xff]
  %v273 = vld [vmem:[%s1 + $0x500] sm:$0xff]
  %v274 = vld [vmem:[%s1 + $0x508] sm:$0xff]
  %v275 = vld [vmem:[%s1 + $0x510] sm:$0xff]
  %v276 = vld [vmem:[%s1 + $0x518] sm:$0xff]
  %v277 = vld [vmem:[%s1 + $0x520] sm:$0xff]
  %v278 = vld [vmem:[%s1 + $0x528] sm:$0xff]
  %v279 = vld [vmem:[%s1 + $0x530] sm:$0xff]
  %v280 = vld [vmem:[%s1 + $0x538] sm:$0xff]
  %v281 = vld [vmem:[%s1 + $0x540] sm:$0xff]
  %v282 = vld [vmem:[%s1 + $0x548] sm:$0xff]
  %v283 = vld [vmem:[%s1 + $0x550] sm:$0xff]
  %v284 = vld [vmem:[%s1 + $0x558] sm:$0xff]
  %v285 = vld [vmem:[%s1 + $0x560] sm:$0xff]
  %v286 = vld [vmem:[%s1 + $0x568] sm:$0xff]
  %v287 = vld [vmem:[%s1 + $0x570] sm:$0xff]
  %v288 = vld [vmem:[%s1 + $0x578] sm:$0xff]
  %v289 = vld [vmem:[%s1 + $0x580] sm:$0xff]
  %v290 = vld [vmem:[%s1 + $0x588] sm:$0xff]
  %v291 = vld [vmem:[%s1 + $0x590] sm:$0xff]
  %v292 = vld [vmem:[%s1 + $0x598] sm:$0xff]
  %v293 = vld [vmem:[%s1 + $0x5a0] sm:$0xff]
  %v294 = vld [vmem:[%s1 + $0x5a8] sm:$0xff]
  %v295 = vld [vmem:[%s1 + $0x5b0] sm:$0xff]
  %v296 = vld [vmem:[%s1 + $0x5b8] sm:$0xff]
  %v297 = vld [vmem:[%s1 + $0x5c0] sm:$0xff]
  %v298 = vld [vmem:[%s1 + $0x5c8] sm:$0xff]
  %v299 = vld [vmem:[%s1 + $0x5d0] sm:$0xff]
  %v300 = vld [vmem:[%s1 + $0x5d8] sm:$0xff]
  %v301 = vld [vmem:[%s1 + $0x5e0] sm:$0xff]
  %v302 = vld [vmem:[%s1 + $0x5e8] sm:$0xff]
  %v303 = vld [vmem:[%s1 + $0x5f0] sm:$0xff]
  %v304 = vld [vmem:[%s1 + $0x5f8] sm:$0xff]
  %v305 = vld [vmem:[%s1 + $0x600] sm:$0xff]
  %v306 = vld [vmem:[%s1 + $0x608] sm:$0xff]
  %v307 = vld [vmem:[%s1 + $0x610] sm:$0xff]
  %v308 = vld [vmem:[%s1 + $0x618] sm:$0xff]
  %v309 = vld [vmem:[%s1 + $0x620] sm:$0xff]
  %v310 = vld [vmem:[%s1 + $0x628] sm:$0xff]
  %v311 = vld [vmem:[%s1 + $0x630] sm:$0xff]
  %v312 = vld [vmem:[%s1 + $0x638] sm:$0xff]
  %v313 = vld [vmem:[%s1 + $0x640] sm:$0xff]
  %v314 = vld [vmem:[%s1 + $0x648] sm:$0xff]
  %v315 = vld [vmem:[%s1 + $0x650] sm:$0xff]
  %v316 = vld [vmem:[%s1 + $0x658] sm:$0xff]
  %v317 = vld [vmem:[%s1 + $0x660] sm:$0xff]
  %v318 = vld [vmem:[%s1 + $0x668] sm:$0xff]
  %v319 = vld [vmem:[%s1 + $0x670] sm:$0xff]
  %v320 = vld [vmem:[%s1 + $0x678] sm:$0xff]
  %v321 = vld [vmem:[%s1 + $0x680] sm:$0xff]
  %v322 = vld [vmem:[%s1 + $0x688] sm:$0xff]
  %v323 = vld [vmem:[%s1 + $0x690] sm:$0xff]
  %v324 = vld [vmem:[%s1 + $0x698] sm:$0xff]
  %v325 = vld [vmem:[%s1 + $0x6a0] sm:$0xff]
  %v326 = vld [vmem:[%s1 + $0x6a8] sm:$0xff]
  %v327 = vld [vmem:[%s1 + $0x6b0] sm:$0xff]
  %v328 = vld [vmem:[%s1 + $0x6b8] sm:$0xff]
  %v329 = vld [vmem:[%s1 + $0x6c0] sm:$0xff]
  %v330 = vld [vmem:[%s1 + $0x6c8] sm:$0xff]
  %v331 = vld [vmem:[%s1 + $0x6d0] sm:$0xff]
  %v332 = vld [vmem:[%s1 + $0x6d8] sm:$0xff]
  %v333 = vld [vmem:[%s1 + $0x6e0] sm:$0xff]
  %v334 = vld [vmem:[%s1 + $0x6e8] sm:$0xff]
  %v335 = vld [vmem:[%s1 + $0x6f0] sm:$0xff]
  %v336 = vld [vmem:[%s1 + $0x6f8] sm:$0xff]
  %v337 = vld [vmem:[%s1 + $0x700] sm:$0xff]
  %v338 = vld [vmem:[%s1 + $0x708] sm:$0xff]
  %v339 = vld [vmem:[%s1 + $0x710] sm:$0xff]
  %v340 = vld [vmem:[%s1 + $0x718] sm:$0xff]
  %v341 = vld [vmem:[%s1 + $0x720] sm:$0xff]
  %v342 = vld [vmem:[%s1 + $0x728] sm:$0xff]
  %v343 = vld [vmem:[%s1 + $0x730] sm:$0xff]
  %v344 = vld [vmem:[%s1 + $0x738] sm:$0xff]
  %v345 = vld [vmem:[%s1 + $0x740] sm:$0xff]
  %v346 = vld [vmem:[%s1 + $0x748] sm:$0xff]
  %v347 = vld [vmem:[%s1 + $0x750] sm:$0xff]
  %v348 = vld [vmem:[%s1 + $0x758] sm:$0xff]
  %v349 = vld [vmem:[%s1 + $0x760] sm:$0xff]
  %v350 = vld [vmem:[%s1 + $0x768] sm:$0xff]
  %v351 = vld [vmem:[%s1 + $0x770] sm:$0xff]
  %v352 = vld [vmem:[%s1 + $0x778] sm:$0xff]
  %v353 = vld [vmem:[%s1 + $0x780] sm:$0xff]
  %v354 = vld [vmem:[%s1 + $0x788] sm:$0xff]
  %v355 = vld [vmem:[%s1 + $0x790] sm:$0xff]
  %v356 = vld [vmem:[%s1 + $0x798] sm:$0xff]
  %v357 = vld [vmem:[%s1 + $0x7a0] sm:$0xff]
  %v358 = vld [vmem:[%s1 + $0x7a8] sm:$0xff]
  %v359 = vld [vmem:[%s1 + $0x7b0] sm:$0xff]
  %v360 = vld [vmem:[%s1 + $0x7b8] sm:$0xff]
  %v361 = vld [vmem:[%s1 + $0x7c0] sm:$0xff]
  %v362 = vld [vmem:[%s1 + $0x7c8] sm:$0xff]
  %v363 = vld [vmem:[%s1 + $0x7d0] sm:$0xff]
  %v364 = vld [vmem:[%s1 + $0x7d8] sm:$0xff]
  %v365 = vld [vmem:[%s1 + $0x7e0] sm:$0xff]
  %v366 = vld [vmem:[%s1 + $0x7e8] sm:$0xff]
  %v367 = vld [vmem:[%s1 + $0x7f0] sm:$0xff]
  %v368 = vld [vmem:[%s1 + $0x7f8] sm:$0xff]
  %v369 = vld [vmem:[%s1 + $0x800] sm:$0xff]
  %v370 = vld [vmem:[%s1 + $0x808] sm:$0xff]
  %v371 = vld [vmem:[%s1 + $0x810] sm:$0xff]
  %v372 = vld [vmem:[%s1 + $0x818] sm:$0xff]
  %v373 = vld [vmem:[%s1 + $0x820] sm:$0xff]
  %v374 = vld [vmem:[%s1 + $0x828] sm:$0xff]
  %v375 = vld [vmem:[%s1 + $0x830] sm:$0xff]
  %v376 = vld [vmem:[%s1 + $0x838] sm:$0xff]
  %v377 = vld [vmem:[%s1 + $0x840] sm:$0xff]
  %v378 = vld [vmem:[%s1 + $0x848] sm:$0xff]
  %v379 = vld [vmem:[%s1 + $0x850] sm:$0xff]
  %v380 = vld [vmem:[%s1 + $0x858] sm:$0xff]
  %v381 = vld [vmem:[%s1 + $0x860] sm:$0xff]
  %v382 = vld [vmem:[%s1 + $0x868] sm:$0xff]
  %v383 = vld [vmem:[%s1 + $0x870] sm:$0xff]
  %v384 = vld [vmem:[%s1 + $0x878] sm:$0xff]
  %v385 = vld [vmem:[%s1 + $0x880] sm:$0xff]
  %v386 = vld [vmem:[%s1 + $0x888] sm:$0xff]
  %v387 = vld [vmem:[%s1 + $0x890] sm:$0xff]
  %v388 = vld [vmem:[%s1 + $0x898] sm:$0xff]
  %v389 = vld [vmem:[%s1 + $0x8a0] sm:$0xff]
  %v390 = vld [vmem:[%s1 + $0x8a8] sm:$0xff]
  %v391 = vld [vmem:[%s1 + $0x8b0] sm:$0xff]
  %v392 = vld [vmem:[%s1 + $0x8b8] sm:$0xff]
  %v393 = vld [vmem:[%s1 + $0x8c0] sm:$0xff]
  %v394 = vld [vmem:[%s1 + $0x8c8] sm:$0xff]
  %v395 = vld [vmem:[%s1 + $0x8d0] sm:$0xff]
  %v396 = vld [vmem:[%s1 + $0x8d8] sm:$0xff]
  %v397 = vld [vmem:[%s1 + $0x8e0] sm:$0xff]
  %v398 = vld [vmem:[%s1 + $0x8e8] sm:$0xff]
  %v399 = vld [vmem:[%s1 + $0x8f0] sm:$0xff]
  %v400 = vld [vmem:[%s1 + $0x8f8] sm:$0xff]
  %v401 = vld [vmem:[%s1 + $0x900] sm:$0xff]
  %v402 = vld [vmem:[%s1 + $0x908] sm:$0xff]
  %v403 = vld [vmem:[%s1 + $0x910] sm:$0xff]
  %v404 = vld [vmem:[%s1 + $0x918] sm:$0xff]
  %v405 = vld [vmem:[%s1 + $0x920] sm:$0xff]
  %v406 = vld [vmem:[%s1 + $0x928] sm:$0xff]
  %v407 = vld [vmem:[%s1 + $0x930] sm:$0xff]
  %v408 = vld [vmem:[%s1 + $0x938] sm:$0xff]
  %v409 = vld [vmem:[%s1 + $0x940] sm:$0xff]
  %v410 = vld [vmem:[%s1 + $0x948] sm:$0xff]
  %v411 = vld [vmem:[%s1 + $0x950] sm:$0xff]
  %v412 = vld [vmem:[%s1 + $0x958] sm:$0xff]
  %v493 = vunpack.c.l.b16 %v33
  %v494 = vunpack.c.h.b16 %v33
  %v495 = vunpack.c.l.b16 %v34
  %v496 = vunpack.c.h.b16 %v34
  %v497 = vunpack.c.l.b16 %v35
  %v498 = vunpack.c.h.b16 %v35
  %v499 = vunpack.c.l.b16 %v36
  %v500 = vunpack.c.h.b16 %v36
  %v501 = vunpack.c.l.b16 %v37
  %v502 = vunpack.c.h.b16 %v37
  %v503 = vunpack.c.l.b16 %v38
  %v504 = vunpack.c.h.b16 %v38
  %v505 = vunpack.c.l.b16 %v39
  %v506 = vunpack.c.h.b16 %v39
  %v507 = vunpack.c.l.b16 %v40
  %v508 = vunpack.c.h.b16 %v40
  %v509 = vunpack.c.l.b16 %v41
  %v510 = vunpack.c.h.b16 %v41
  %v511 = vunpack.c.l.b16 %v42
  %v512 = vunpack.c.l.b16 %v43
  %v513 = vunpack.c.h.b16 %v43
  %v514 = vunpack.c.l.b16 %v44
  %v515 = vunpack.c.h.b16 %v44
  %v516 = vunpack.c.l.b16 %v45
  %v517 = vunpack.c.h.b16 %v45
  %v518 = vunpack.c.l.b16 %v46
  %v519 = vunpack.c.h.b16 %v46
  %v520 = vunpack.c.l.b16 %v47
  %v521 = vunpack.c.h.b16 %v47
  %v522 = vunpack.c.l.b16 %v48
  %v523 = vunpack.c.h.b16 %v48
  %v524 = vunpack.c.l.b16 %v49
  %v525 = vunpack.c.h.b16 %v49
  %v526 = vunpack.c.l.b16 %v50
  %v527 = vunpack.c.h.b16 %v50
  %v528 = vunpack.c.l.b16 %v51
  %v529 = vunpack.c.h.b16 %v51
  %v530 = vunpack.c.l.b16 %v52
  %v531 = vunpack.c.l.b16 %v53
  %v532 = vunpack.c.h.b16 %v53
  %v533 = vunpack.c.l.b16 %v54
  %v534 = vunpack.c.h.b16 %v54
  %v535 = vunpack.c.l.b16 %v55
  %v536 = vunpack.c.h.b16 %v55
  %v537 = vunpack.c.l.b16 %v56
  %v538 = vunpack.c.h.b16 %v56
  %v539 = vunpack.c.l.b16 %v57
  %v540 = vunpack.c.h.b16 %v57
  %v541 = vunpack.c.l.b16 %v58
  %v542 = vunpack.c.h.b16 %v58
  %v543 = vunpack.c.l.b16 %v59
  %v544 = vunpack.c.h.b16 %v59
  %v545 = vunpack.c.l.b16 %v60
  %v546 = vunpack.c.h.b16 %v60
  %v547 = vunpack.c.l.b16 %v61
  %v548 = vunpack.c.h.b16 %v61
  %v549 = vunpack.c.l.b16 %v62
  %v550 = vunpack.c.l.b16 %v63
  %v551 = vunpack.c.h.b16 %v63
  %v552 = vunpack.c.l.b16 %v64
  %v553 = vunpack.c.h.b16 %v64
  %v554 = vunpack.c.l.b16 %v65
  %v555 = vunpack.c.h.b16 %v65
  %v556 = vunpack.c.l.b16 %v66
  %v557 = vunpack.c.h.b16 %v66
  %v558 = vunpack.c.l.b16 %v67
  %v559 = vunpack.c.h.b16 %v67
  %v560 = vunpack.c.l.b16 %v68
  %v561 = vunpack.c.h.b16 %v68
  %v562 = vunpack.c.l.b16 %v69
  %v563 = vunpack.c.h.b16 %v69
  %v564 = vunpack.c.l.b16 %v70
  %v565 = vunpack.c.h.b16 %v70
  %v566 = vunpack.c.l.b16 %v71
  %v567 = vunpack.c.h.b16 %v71
  %v568 = vunpack.c.l.b16 %v72
  %v569 = vunpack.c.l.b16 %v73
  %v570 = vunpack.c.h.b16 %v73
  %v571 = vunpack.c.l.b16 %v74
  %v572 = vunpack.c.h.b16 %v74
  %v573 = vunpack.c.l.b16 %v75
  %v574 = vunpack.c.h.b16 %v75
  %v575 = vunpack.c.l.b16 %v76
  %v576 = vunpack.c.h.b16 %v76
  %v577 = vunpack.c.l.b16 %v77
  %v578 = vunpack.c.h.b16 %v77
  %v579 = vunpack.c.l.b16 %v78
  %v580 = vunpack.c.h.b16 %v78
  %v581 = vunpack.c.l.b16 %v79
  %v582 = vunpack.c.h.b16 %v79
  %v583 = vunpack.c.l.b16 %v80
  %v584 = vunpack.c.h.b16 %v80
  %v585 = vunpack.c.l.b16 %v81
  %v586 = vunpack.c.h.b16 %v81
  %v587 = vunpack.c.l.b16 %v82
  %v588 = vunpack.c.l.b16 %v83
  %v589 = vunpack.c.h.b16 %v83
  %v590 = vunpack.c.l.b16 %v84
  %v591 = vunpack.c.h.b16 %v84
  %v592 = vunpack.c.l.b16 %v85
  %v593 = vunpack.c.h.b16 %v85
  %v594 = vunpack.c.l.b16 %v86
  %v595 = vunpack.c.h.b16 %v86
  %v596 = vunpack.c.l.b16 %v87
  %v597 = vunpack.c.h.b16 %v87
  %v598 = vunpack.c.l.b16 %v88
  %v599 = vunpack.c.h.b16 %v88
  %v600 = vunpack.c.l.b16 %v89
  %v601 = vunpack.c.h.b16 %v89
  %v602 = vunpack.c.l.b16 %v90
  %v603 = vunpack.c.h.b16 %v90
  %v604 = vunpack.c.l.b16 %v91
  %v605 = vunpack.c.h.b16 %v91
  %v606 = vunpack.c.l.b16 %v92
  %v607 = vunpack.c.l.b16 %v93
  %v608 = vunpack.c.h.b16 %v93
  %v609 = vunpack.c.l.b16 %v94
  %v610 = vunpack.c.h.b16 %v94
  %v611 = vunpack.c.l.b16 %v95
  %v612 = vunpack.c.h.b16 %v95
  %v613 = vunpack.c.l.b16 %v96
  %v614 = vunpack.c.h.b16 %v96
  %v615 = vunpack.c.l.b16 %v97
  %v616 = vunpack.c.h.b16 %v97
  %v617 = vunpack.c.l.b16 %v98
  %v618 = vunpack.c.h.b16 %v98
  %v619 = vunpack.c.l.b16 %v99
  %v620 = vunpack.c.h.b16 %v99
  %v621 = vunpack.c.l.b16 %v100
  %v622 = vunpack.c.h.b16 %v100
  %v623 = vunpack.c.l.b16 %v101
  %v624 = vunpack.c.h.b16 %v101
  %v625 = vunpack.c.l.b16 %v102
  %v626 = vunpack.c.l.b16 %v103
  %v627 = vunpack.c.h.b16 %v103
  %v628 = vunpack.c.l.b16 %v104
  %v629 = vunpack.c.h.b16 %v104
  %v630 = vunpack.c.l.b16 %v105
  %v631 = vunpack.c.h.b16 %v105
  %v632 = vunpack.c.l.b16 %v106
  %v633 = vunpack.c.h.b16 %v106
  %v634 = vunpack.c.l.b16 %v107
  %v635 = vunpack.c.h.b16 %v107
  %v636 = vunpack.c.l.b16 %v108
  %v637 = vunpack.c.h.b16 %v108
  %v638 = vunpack.c.l.b16 %v109
  %v639 = vunpack.c.h.b16 %v109
  %v640 = vunpack.c.l.b16 %v110
  %v641 = vunpack.c.h.b16 %v110
  %v642 = vunpack.c.l.b16 %v111
  %v643 = vunpack.c.h.b16 %v111
  %v644 = vunpack.c.l.b16 %v112
  %v645 = vpack.c.b16 %v512, %v493
  %v646 = vpack.c.b16 %v513, %v494
  %v647 = vpack.c.b16 %v514, %v495
  %v648 = vpack.c.b16 %v515, %v496
  %v649 = vpack.c.b16 %v516, %v497
  %v650 = vpack.c.b16 %v517, %v498
  %v651 = vpack.c.b16 %v518, %v499
  %v652 = vpack.c.b16 %v519, %v500
  %v653 = vpack.c.b16 %v520, %v501
  %v654 = vpack.c.b16 %v521, %v502
  %v655 = vpack.c.b16 %v522, %v503
  %v656 = vpack.c.b16 %v523, %v504
  %v657 = vpack.c.b16 %v524, %v505
  %v658 = vpack.c.b16 %v525, %v506
  %v659 = vpack.c.b16 %v526, %v507
  %v660 = vpack.c.b16 %v527, %v508
  %v661 = vpack.c.b16 %v528, %v509
  %v662 = vpack.c.b16 %v529, %v510
  %v663 = vpack.c.b16 %v530, %v511
  %v664 = vpack.c.b16 %v550, %v531
  %v665 = vpack.c.b16 %v551, %v532
  %v666 = vpack.c.b16 %v552, %v533
  %v667 = vpack.c.b16 %v553, %v534
  %v668 = vpack.c.b16 %v554, %v535
  %v669 = vpack.c.b16 %v555, %v536
  %v670 = vpack.c.b16 %v556, %v537
  %v671 = vpack.c.b16 %v557, %v538
  %v672 = vpack.c.b16 %v558, %v539
  %v673 = vpack.c.b16 %v559, %v540
  %v674 = vpack.c.b16 %v560, %v541
  %v675 = vpack.c.b16 %v561, %v542
  %v676 = vpack.c.b16 %v562, %v543
  %v677 = vpack.c.b16 %v563, %v544
  %v678 = vpack.c.b16 %v564, %v545
  %v679 = vpack.c.b16 %v565, %v546
  %v680 = vpack.c.b16 %v566, %v547
  %v681 = vpack.c.b16 %v567, %v548
  %v682 = vpack.c.b16 %v568, %v549
  %v683 = vpack.c.b16 %v588, %v569
  %v684 = vpack.c.b16 %v589, %v570
  %v685 = vpack.c.b16 %v590, %v571
  %v686 = vpack.c.b16 %v591, %v572
  %v687 = vpack.c.b16 %v592, %v573
  %v688 = vpack.c.b16 %v593, %v574
  %v689 = vpack.c.b16 %v594, %v575
  %v690 = vpack.c.b16 %v595, %v576
  %v691 = vpack.c.b16 %v596, %v577
  %v692 = vpack.c.b16 %v597, %v578
  %v693 = vpack.c.b16 %v598, %v579
  %v694 = vpack.c.b16 %v599, %v580
  %v695 = vpack.c.b16 %v600, %v581
  %v696 = vpack.c.b16 %v601, %v582
  %v697 = vpack.c.b16 %v602, %v583
  %v698 = vpack.c.b16 %v603, %v584
  %v699 = vpack.c.b16 %v604, %v585
  %v700 = vpack.c.b16 %v605, %v586
  %v701 = vpack.c.b16 %v606, %v587
  %v702 = vpack.c.b16 %v626, %v607
  %v703 = vpack.c.b16 %v627, %v608
  %v704 = vpack.c.b16 %v628, %v609
  %v705 = vpack.c.b16 %v629, %v610
  %v706 = vpack.c.b16 %v630, %v611
  %v707 = vpack.c.b16 %v631, %v612
  %v708 = vpack.c.b16 %v632, %v613
  %v709 = vpack.c.b16 %v633, %v614
  %v710 = vpack.c.b16 %v634, %v615
  %v711 = vpack.c.b16 %v635, %v616
  %v712 = vpack.c.b16 %v636, %v617
  %v713 = vpack.c.b16 %v637, %v618
  %v714 = vpack.c.b16 %v638, %v619
  %v715 = vpack.c.b16 %v639, %v620
  %v716 = vpack.c.b16 %v640, %v621
  %v717 = vpack.c.b16 %v641, %v622
  %v718 = vpack.c.b16 %v642, %v623
  %v719 = vpack.c.b16 %v643, %v624
  %v720 = vpack.c.b16 %v644, %v625
  %v1093 = vunpack.c.l.b16 %v113
  %v1094 = vunpack.c.h.b16 %v113
  %v1095 = vunpack.c.l.b16 %v114
  %v1096 = vunpack.c.h.b16 %v114
  %v1097 = vunpack.c.l.b16 %v115
  %v1098 = vunpack.c.h.b16 %v115
  %v1099 = vunpack.c.l.b16 %v116
  %v1100 = vunpack.c.h.b16 %v116
  %v1101 = vunpack.c.l.b16 %v117
  %v1102 = vunpack.c.h.b16 %v117
  %v1103 = vunpack.c.l.b16 %v118
  %v1104 = vunpack.c.h.b16 %v118
  %v1105 = vunpack.c.l.b16 %v119
  %v1106 = vunpack.c.h.b16 %v119
  %v1107 = vunpack.c.l.b16 %v120
  %v1108 = vunpack.c.h.b16 %v120
  %v1109 = vunpack.c.l.b16 %v121
  %v1110 = vunpack.c.h.b16 %v121
  %v1111 = vunpack.c.l.b16 %v122
  %v1112 = vunpack.c.h.b16 %v122
  %v1113 = vunpack.c.l.b16 %v123
  %v1114 = vunpack.c.h.b16 %v123
  %v1115 = vunpack.c.l.b16 %v124
  %v1116 = vunpack.c.h.b16 %v124
  %v1117 = vunpack.c.l.b16 %v125
  %v1118 = vunpack.c.h.b16 %v125
  %v1119 = vunpack.c.l.b16 %v126
  %v1120 = vunpack.c.h.b16 %v126
  %v1121 = vunpack.c.l.b16 %v127
  %v1122 = vunpack.c.h.b16 %v127
  %v1123 = vunpack.c.l.b16 %v128
  %v1124 = vunpack.c.h.b16 %v128
  %v1125 = vunpack.c.l.b16 %v129
  %v1126 = vunpack.c.h.b16 %v129
  %v1127 = vunpack.c.l.b16 %v130
  %v1128 = vunpack.c.h.b16 %v130
  %v1129 = vunpack.c.l.b16 %v131
  %v1130 = vunpack.c.h.b16 %v131
  %v1131 = vunpack.c.l.b16 %v132
  %v1132 = vunpack.c.h.b16 %v132
  %v1133 = vunpack.c.l.b16 %v133
  %v1134 = vunpack.c.h.b16 %v133
  %v1135 = vunpack.c.l.b16 %v134
  %v1136 = vunpack.c.h.b16 %v134
  %v1137 = vunpack.c.l.b16 %v135
  %v1138 = vunpack.c.h.b16 %v135
  %v1139 = vunpack.c.l.b16 %v136
  %v1140 = vunpack.c.h.b16 %v136
  %v1141 = vunpack.c.l.b16 %v137
  %v1142 = vunpack.c.h.b16 %v137
  %v1143 = vunpack.c.l.b16 %v138
  %v1144 = vunpack.c.h.b16 %v138
  %v1145 = vunpack.c.l.b16 %v139
  %v1146 = vunpack.c.h.b16 %v139
  %v1147 = vunpack.c.l.b16 %v140
  %v1148 = vunpack.c.h.b16 %v140
  %v1149 = vunpack.c.l.b16 %v141
  %v1150 = vunpack.c.h.b16 %v141
  %v1151 = vunpack.c.l.b16 %v142
  %v1152 = vunpack.c.h.b16 %v142
  %v1153 = vunpack.c.l.b16 %v143
  %v1154 = vunpack.c.h.b16 %v143
  %v1155 = vunpack.c.l.b16 %v144
  %v1156 = vunpack.c.h.b16 %v144
  %v1157 = vunpack.c.l.b16 %v145
  %v1158 = vunpack.c.h.b16 %v145
  %v1159 = vunpack.c.l.b16 %v146
  %v1160 = vunpack.c.h.b16 %v146
  %v1161 = vunpack.c.l.b16 %v147
  %v1162 = vunpack.c.h.b16 %v147
  %v1163 = vunpack.c.l.b16 %v148
  %v1164 = vunpack.c.h.b16 %v148
  %v1165 = vunpack.c.l.b16 %v149
  %v1166 = vunpack.c.h.b16 %v149
  %v1167 = vunpack.c.l.b16 %v150
  %v1168 = vunpack.c.h.b16 %v150
  %v1169 = vunpack.c.l.b16 %v151
  %v1170 = vunpack.c.h.b16 %v151
  %v1171 = vunpack.c.l.b16 %v152
  %v1172 = vunpack.c.h.b16 %v152
  %v1173 = vunpack.c.l.b16 %v153
  %v1174 = vunpack.c.h.b16 %v153
  %v1175 = vunpack.c.l.b16 %v154
  %v1176 = vunpack.c.h.b16 %v154
  %v1177 = vunpack.c.l.b16 %v155
  %v1178 = vunpack.c.h.b16 %v155
  %v1179 = vunpack.c.l.b16 %v156
  %v1180 = vunpack.c.h.b16 %v156
  %v1181 = vunpack.c.l.b16 %v157
  %v1182 = vunpack.c.h.b16 %v157
  %v1183 = vunpack.c.l.b16 %v158
  %v1184 = vunpack.c.h.b16 %v158
  %v1185 = vunpack.c.l.b16 %v159
  %v1186 = vunpack.c.h.b16 %v159
  %v1187 = vunpack.c.l.b16 %v160
  %v1188 = vunpack.c.h.b16 %v160
  %v1189 = vunpack.c.l.b16 %v161
  %v1190 = vunpack.c.h.b16 %v161
  %v1191 = vunpack.c.l.b16 %v162
  %v1192 = vunpack.c.h.b16 %v162
  %v1193 = vunpack.c.l.b16 %v163
  %v1194 = vunpack.c.h.b16 %v163
  %v1195 = vunpack.c.l.b16 %v164
  %v1196 = vunpack.c.h.b16 %v164
  %v1197 = vunpack.c.l.b16 %v165
  %v1198 = vunpack.c.h.b16 %v165
  %v1199 = vunpack.c.l.b16 %v166
  %v1200 = vunpack.c.h.b16 %v166
  %v1201 = vunpack.c.l.b16 %v167
  %v1202 = vunpack.c.h.b16 %v167
  %v1203 = vunpack.c.l.b16 %v168
  %v1204 = vunpack.c.h.b16 %v168
  %v1205 = vunpack.c.l.b16 %v169
  %v1206 = vunpack.c.h.b16 %v169
  %v1207 = vunpack.c.l.b16 %v170
  %v1208 = vunpack.c.h.b16 %v170
  %v1209 = vunpack.c.l.b16 %v171
  %v1210 = vunpack.c.h.b16 %v171
  %v1211 = vunpack.c.l.b16 %v172
  %v1212 = vunpack.c.h.b16 %v172
  %v1213 = vunpack.c.l.b16 %v173
  %v1214 = vunpack.c.h.b16 %v173
  %v1215 = vunpack.c.l.b16 %v174
  %v1216 = vunpack.c.h.b16 %v174
  %v1217 = vunpack.c.l.b16 %v175
  %v1218 = vunpack.c.h.b16 %v175
  %v1219 = vunpack.c.l.b16 %v176
  %v1220 = vunpack.c.h.b16 %v176
  %v1221 = vunpack.c.l.b16 %v177
  %v1222 = vunpack.c.h.b16 %v177
  %v1223 = vunpack.c.l.b16 %v178
  %v1224 = vunpack.c.h.b16 %v178
  %v1225 = vunpack.c.l.b16 %v179
  %v1226 = vunpack.c.h.b16 %v179
  %v1227 = vunpack.c.l.b16 %v180
  %v1228 = vunpack.c.h.b16 %v180
  %v1229 = vunpack.c.l.b16 %v181
  %v1230 = vunpack.c.h.b16 %v181
  %v1231 = vunpack.c.l.b16 %v182
  %v1232 = vunpack.c.h.b16 %v182
  %v1233 = vunpack.c.l.b16 %v183
  %v1234 = vunpack.c.h.b16 %v183
  %v1235 = vunpack.c.l.b16 %v184
  %v1236 = vunpack.c.h.b16 %v184
  %v1237 = vunpack.c.l.b16 %v185
  %v1238 = vunpack.c.h.b16 %v185
  %v1239 = vunpack.c.l.b16 %v186
  %v1240 = vunpack.c.h.b16 %v186
  %v1241 = vunpack.c.l.b16 %v187
  %v1242 = vunpack.c.h.b16 %v187
  %v1243 = vunpack.c.l.b16 %v188
  %v1244 = vunpack.c.h.b16 %v188
  %v1245 = vunpack.c.l.b16 %v189
  %v1246 = vunpack.c.h.b16 %v189
  %v1247 = vunpack.c.l.b16 %v190
  %v1248 = vunpack.c.h.b16 %v190
  %v1249 = vunpack.c.l.b16 %v191
  %v1250 = vunpack.c.h.b16 %v191
  %v1251 = vunpack.c.l.b16 %v192
  %v1252 = vunpack.c.h.b16 %v192
  %v1253 = vunpack.c.l.b16 %v193
  %v1254 = vunpack.c.h.b16 %v193
  %v1255 = vunpack.c.l.b16 %v194
  %v1256 = vunpack.c.h.b16 %v194
  %v1257 = vunpack.c.l.b16 %v195
  %v1258 = vunpack.c.h.b16 %v195
  %v1259 = vunpack.c.l.b16 %v196
  %v1260 = vunpack.c.h.b16 %v196
  %v1261 = vunpack.c.l.b16 %v197
  %v1262 = vunpack.c.h.b16 %v197
  %v1263 = vunpack.c.l.b16 %v198
  %v1264 = vunpack.c.h.b16 %v198
  %v1265 = vunpack.c.l.b16 %v199
  %v1266 = vunpack.c.h.b16 %v199
  %v1267 = vunpack.c.l.b16 %v200
  %v1268 = vunpack.c.h.b16 %v200
  %v1269 = vunpack.c.l.b16 %v201
  %v1270 = vunpack.c.h.b16 %v201
  %v1271 = vunpack.c.l.b16 %v202
  %v1272 = vunpack.c.h.b16 %v202
  %v1273 = vunpack.c.l.b16 %v203
  %v1274 = vunpack.c.h.b16 %v203
  %v1275 = vunpack.c.l.b16 %v204
  %v1276 = vunpack.c.h.b16 %v204
  %v1277 = vunpack.c.l.b16 %v205
  %v1278 = vunpack.c.h.b16 %v205
  %v1279 = vunpack.c.l.b16 %v206
  %v1280 = vunpack.c.h.b16 %v206
  %v1281 = vunpack.c.l.b16 %v207
  %v1282 = vunpack.c.h.b16 %v207
  %v1283 = vunpack.c.l.b16 %v208
  %v1284 = vunpack.c.h.b16 %v208
  %v1285 = vunpack.c.l.b16 %v209
  %v1286 = vunpack.c.h.b16 %v209
  %v1287 = vunpack.c.l.b16 %v210
  %v1288 = vunpack.c.h.b16 %v210
  %v1289 = vunpack.c.l.b16 %v211
  %v1290 = vunpack.c.h.b16 %v211
  %v1291 = vunpack.c.l.b16 %v212
  %v1292 = vunpack.c.h.b16 %v212
  %v1293 = vunpack.c.l.b16 %v213
  %v1294 = vunpack.c.h.b16 %v213
  %v1295 = vunpack.c.l.b16 %v214
  %v1296 = vunpack.c.h.b16 %v214
  %v1297 = vunpack.c.l.b16 %v215
  %v1298 = vunpack.c.h.b16 %v215
  %v1299 = vunpack.c.l.b16 %v216
  %v1300 = vunpack.c.h.b16 %v216
  %v1301 = vunpack.c.l.b16 %v217
  %v1302 = vunpack.c.h.b16 %v217
  %v1303 = vunpack.c.l.b16 %v218
  %v1304 = vunpack.c.h.b16 %v218
  %v1305 = vunpack.c.l.b16 %v219
  %v1306 = vunpack.c.h.b16 %v219
  %v1307 = vunpack.c.l.b16 %v220
  %v1308 = vunpack.c.h.b16 %v220
  %v1309 = vunpack.c.l.b16 %v221
  %v1310 = vunpack.c.h.b16 %v221
  %v1311 = vunpack.c.l.b16 %v222
  %v1312 = vunpack.c.h.b16 %v222
  %v1313 = vunpack.c.l.b16 %v223
  %v1314 = vunpack.c.h.b16 %v223
  %v1315 = vunpack.c.l.b16 %v224
  %v1316 = vunpack.c.h.b16 %v224
  %v1317 = vunpack.c.l.b16 %v225
  %v1318 = vunpack.c.h.b16 %v225
  %v1319 = vunpack.c.l.b16 %v226
  %v1320 = vunpack.c.h.b16 %v226
  %v1321 = vunpack.c.l.b16 %v227
  %v1322 = vunpack.c.h.b16 %v227
  %v1323 = vunpack.c.l.b16 %v228
  %v1324 = vunpack.c.h.b16 %v228
  %v1325 = vunpack.c.l.b16 %v229
  %v1326 = vunpack.c.h.b16 %v229
  %v1327 = vunpack.c.l.b16 %v230
  %v1328 = vunpack.c.h.b16 %v230
  %v1329 = vunpack.c.l.b16 %v231
  %v1330 = vunpack.c.h.b16 %v231
  %v1331 = vunpack.c.l.b16 %v232
  %v1332 = vunpack.c.h.b16 %v232
  %v1333 = vunpack.c.l.b16 %v233
  %v1334 = vunpack.c.h.b16 %v233
  %v1335 = vunpack.c.l.b16 %v234
  %v1336 = vunpack.c.h.b16 %v234
  %v1337 = vunpack.c.l.b16 %v235
  %v1338 = vunpack.c.h.b16 %v235
  %v1339 = vunpack.c.l.b16 %v236
  %v1340 = vunpack.c.h.b16 %v236
  %v1341 = vunpack.c.l.b16 %v237
  %v1342 = vunpack.c.h.b16 %v237
  %v1343 = vunpack.c.l.b16 %v238
  %v1344 = vunpack.c.h.b16 %v238
  %v1345 = vunpack.c.l.b16 %v239
  %v1346 = vunpack.c.h.b16 %v239
  %v1347 = vunpack.c.l.b16 %v240
  %v1348 = vunpack.c.h.b16 %v240
  %v1349 = vunpack.c.l.b16 %v241
  %v1350 = vunpack.c.h.b16 %v241
  %v1351 = vunpack.c.l.b16 %v242
  %v1352 = vunpack.c.h.b16 %v242
  %v1353 = vunpack.c.l.b16 %v243
  %v1354 = vunpack.c.h.b16 %v243
  %v1355 = vunpack.c.l.b16 %v244
  %v1356 = vunpack.c.h.b16 %v244
  %v1357 = vunpack.c.l.b16 %v245
  %v1358 = vunpack.c.h.b16 %v245
  %v1359 = vunpack.c.l.b16 %v246
  %v1360 = vunpack.c.h.b16 %v246
  %v1361 = vunpack.c.l.b16 %v247
  %v1362 = vunpack.c.h.b16 %v247
  %v1363 = vunpack.c.l.b16 %v248
  %v1364 = vunpack.c.h.b16 %v248
  %v1365 = vunpack.c.l.b16 %v249
  %v1366 = vunpack.c.h.b16 %v249
  %v1367 = vunpack.c.l.b16 %v250
  %v1368 = vunpack.c.h.b16 %v250
  %v1369 = vunpack.c.l.b16 %v251
  %v1370 = vunpack.c.h.b16 %v251
  %v1371 = vunpack.c.l.b16 %v252
  %v1372 = vunpack.c.h.b16 %v252
  %v1373 = vunpack.c.l.b16 %v253
  %v1374 = vunpack.c.h.b16 %v253
  %v1375 = vunpack.c.l.b16 %v254
  %v1376 = vunpack.c.h.b16 %v254
  %v1377 = vunpack.c.l.b16 %v255
  %v1378 = vunpack.c.h.b16 %v255
  %v1379 = vunpack.c.l.b16 %v256
  %v1380 = vunpack.c.h.b16 %v256
  %v1381 = vunpack.c.l.b16 %v257
  %v1382 = vunpack.c.h.b16 %v257
  %v1383 = vunpack.c.l.b16 %v258
  %v1384 = vunpack.c.h.b16 %v258
  %v1385 = vunpack.c.l.b16 %v259
  %v1386 = vunpack.c.h.b16 %v259
  %v1387 = vunpack.c.l.b16 %v260
  %v1388 = vunpack.c.h.b16 %v260
  %v1389 = vunpack.c.l.b16 %v261
  %v1390 = vunpack.c.h.b16 %v261
  %v1391 = vunpack.c.l.b16 %v262
  %v1392 = vunpack.c.h.b16 %v262
  %v1393 = vunpack.c.l.b16 %v263
  %v1394 = vunpack.c.h.b16 %v263
  %v1395 = vunpack.c.l.b16 %v264
  %v1396 = vunpack.c.h.b16 %v264
  %v1397 = vunpack.c.l.b16 %v265
  %v1398 = vunpack.c.h.b16 %v265
  %v1399 = vunpack.c.l.b16 %v266
  %v1400 = vunpack.c.h.b16 %v266
  %v1401 = vunpack.c.l.b16 %v267
  %v1402 = vunpack.c.h.b16 %v267
  %v1403 = vunpack.c.l.b16 %v268
  %v1404 = vunpack.c.h.b16 %v268
  %v1405 = vunpack.c.l.b16 %v269
  %v1406 = vunpack.c.h.b16 %v269
  %v1407 = vunpack.c.l.b16 %v270
  %v1408 = vunpack.c.h.b16 %v270
  %v1409 = vunpack.c.l.b16 %v271
  %v1410 = vunpack.c.h.b16 %v271
  %v1411 = vunpack.c.l.b16 %v272
  %v1412 = vunpack.c.h.b16 %v272
  %v1413 = vunpack.c.l.b16 %v273
  %v1414 = vunpack.c.h.b16 %v273
  %v1415 = vunpack.c.l.b16 %v274
  %v1416 = vunpack.c.h.b16 %v274
  %v1417 = vunpack.c.l.b16 %v275
  %v1418 = vunpack.c.h.b16 %v275
  %v1419 = vunpack.c.l.b16 %v276
  %v1420 = vunpack.c.h.b16 %v276
  %v1421 = vunpack.c.l.b16 %v277
  %v1422 = vunpack.c.h.b16 %v277
  %v1423 = vunpack.c.l.b16 %v278
  %v1424 = vunpack.c.h.b16 %v278
  %v1425 = vunpack.c.l.b16 %v279
  %v1426 = vunpack.c.h.b16 %v279
  %v1427 = vunpack.c.l.b16 %v280
  %v1428 = vunpack.c.h.b16 %v280
  %v1429 = vunpack.c.l.b16 %v281
  %v1430 = vunpack.c.h.b16 %v281
  %v1431 = vunpack.c.l.b16 %v282
  %v1432 = vunpack.c.h.b16 %v282
  %v1433 = vunpack.c.l.b16 %v283
  %v1434 = vunpack.c.h.b16 %v283
  %v1435 = vunpack.c.l.b16 %v284
  %v1436 = vunpack.c.h.b16 %v284
  %v1437 = vunpack.c.l.b16 %v285
  %v1438 = vunpack.c.h.b16 %v285
  %v1439 = vunpack.c.l.b16 %v286
  %v1440 = vunpack.c.h.b16 %v286
  %v1441 = vunpack.c.l.b16 %v287
  %v1442 = vunpack.c.h.b16 %v287
  %v1443 = vunpack.c.l.b16 %v288
  %v1444 = vunpack.c.h.b16 %v288
  %v1445 = vunpack.c.l.b16 %v289
  %v1446 = vunpack.c.h.b16 %v289
  %v1447 = vunpack.c.l.b16 %v290
  %v1448 = vunpack.c.h.b16 %v290
  %v1449 = vunpack.c.l.b16 %v291
  %v1450 = vunpack.c.h.b16 %v291
  %v1451 = vunpack.c.l.b16 %v292
  %v1452 = vunpack.c.h.b16 %v292
  %v1453 = vunpack.c.l.b16 %v293
  %v1454 = vunpack.c.h.b16 %v293
  %v1455 = vunpack.c.l.b16 %v294
  %v1456 = vunpack.c.h.b16 %v294
  %v1457 = vunpack.c.l.b16 %v295
  %v1458 = vunpack.c.h.b16 %v295
  %v1459 = vunpack.c.l.b16 %v296
  %v1460 = vunpack.c.h.b16 %v296
  %v1461 = vunpack.c.l.b16 %v297
  %v1462 = vunpack.c.h.b16 %v297
  %v1463 = vunpack.c.l.b16 %v298
  %v1464 = vunpack.c.h.b16 %v298
  %v1465 = vunpack.c.l.b16 %v299
  %v1466 = vunpack.c.h.b16 %v299
  %v1467 = vunpack.c.l.b16 %v300
  %v1468 = vunpack.c.h.b16 %v300
  %v1469 = vunpack.c.l.b16 %v301
  %v1470 = vunpack.c.h.b16 %v301
  %v1471 = vunpack.c.l.b16 %v302
  %v1472 = vunpack.c.h.b16 %v302
  %v1473 = vunpack.c.l.b16 %v303
  %v1474 = vunpack.c.h.b16 %v303
  %v1475 = vunpack.c.l.b16 %v304
  %v1476 = vunpack.c.h.b16 %v304
  %v1477 = vunpack.c.l.b16 %v305
  %v1478 = vunpack.c.h.b16 %v305
  %v1479 = vunpack.c.l.b16 %v306
  %v1480 = vunpack.c.h.b16 %v306
  %v1481 = vunpack.c.l.b16 %v307
  %v1482 = vunpack.c.h.b16 %v307
  %v1483 = vunpack.c.l.b16 %v308
  %v1484 = vunpack.c.h.b16 %v308
  %v1485 = vunpack.c.l.b16 %v309
  %v1486 = vunpack.c.h.b16 %v309
  %v1487 = vunpack.c.l.b16 %v310
  %v1488 = vunpack.c.h.b16 %v310
  %v1489 = vunpack.c.l.b16 %v311
  %v1490 = vunpack.c.h.b16 %v311
  %v1491 = vunpack.c.l.b16 %v312
  %v1492 = vunpack.c.h.b16 %v312
  %v1493 = vunpack.c.l.b16 %v313
  %v1494 = vunpack.c.h.b16 %v313
  %v1495 = vunpack.c.l.b16 %v314
  %v1496 = vunpack.c.h.b16 %v314
  %v1497 = vunpack.c.l.b16 %v315
  %v1498 = vunpack.c.h.b16 %v315
  %v1499 = vunpack.c.l.b16 %v316
  %v1500 = vunpack.c.h.b16 %v316
  %v1501 = vunpack.c.l.b16 %v317
  %v1502 = vunpack.c.h.b16 %v317
  %v1503 = vunpack.c.l.b16 %v318
  %v1504 = vunpack.c.h.b16 %v318
  %v1505 = vunpack.c.l.b16 %v319
  %v1506 = vunpack.c.h.b16 %v319
  %v1507 = vunpack.c.l.b16 %v320
  %v1508 = vunpack.c.h.b16 %v320
  %v1509 = vunpack.c.l.b16 %v321
  %v1510 = vunpack.c.h.b16 %v321
  %v1511 = vunpack.c.l.b16 %v322
  %v1512 = vunpack.c.h.b16 %v322
  %v1513 = vunpack.c.l.b16 %v323
  %v1514 = vunpack.c.h.b16 %v323
  %v1515 = vunpack.c.l.b16 %v324
  %v1516 = vunpack.c.h.b16 %v324
  %v1517 = vunpack.c.l.b16 %v325
  %v1518 = vunpack.c.h.b16 %v325
  %v1519 = vunpack.c.l.b16 %v326
  %v1520 = vunpack.c.h.b16 %v326
  %v1521 = vunpack.c.l.b16 %v327
  %v1522 = vunpack.c.h.b16 %v327
  %v1523 = vunpack.c.l.b16 %v328
  %v1524 = vunpack.c.h.b16 %v328
  %v1525 = vunpack.c.l.b16 %v329
  %v1526 = vunpack.c.h.b16 %v329
  %v1527 = vunpack.c.l.b16 %v330
  %v1528 = vunpack.c.h.b16 %v330
  %v1529 = vunpack.c.l.b16 %v331
  %v1530 = vunpack.c.h.b16 %v331
  %v1531 = vunpack.c.l.b16 %v332
  %v1532 = vunpack.c.h.b16 %v332
  %v1533 = vunpack.c.l.b16 %v333
  %v1534 = vunpack.c.h.b16 %v333
  %v1535 = vunpack.c.l.b16 %v334
  %v1536 = vunpack.c.h.b16 %v334
  %v1537 = vunpack.c.l.b16 %v335
  %v1538 = vunpack.c.h.b16 %v335
  %v1539 = vunpack.c.l.b16 %v336
  %v1540 = vunpack.c.h.b16 %v336
  %v1541 = vunpack.c.l.b16 %v337
  %v1542 = vunpack.c.h.b16 %v337
  %v1543 = vunpack.c.l.b16 %v338
  %v1544 = vunpack.c.h.b16 %v338
  %v1545 = vunpack.c.l.b16 %v339
  %v1546 = vunpack.c.h.b16 %v339
  %v1547 = vunpack.c.l.b16 %v340
  %v1548 = vunpack.c.h.b16 %v340
  %v1549 = vunpack.c.l.b16 %v341
  %v1550 = vunpack.c.h.b16 %v341
  %v1551 = vunpack.c.l.b16 %v342
  %v1552 = vunpack.c.h.b16 %v342
  %v1553 = vunpack.c.l.b16 %v343
  %v1554 = vunpack.c.h.b16 %v343
  %v1555 = vunpack.c.l.b16 %v344
  %v1556 = vunpack.c.h.b16 %v344
  %v1557 = vunpack.c.l.b16 %v345
  %v1558 = vunpack.c.h.b16 %v345
  %v1559 = vunpack.c.l.b16 %v346
  %v1560 = vunpack.c.h.b16 %v346
  %v1561 = vunpack.c.l.b16 %v347
  %v1562 = vunpack.c.h.b16 %v347
  %v1563 = vunpack.c.l.b16 %v348
  %v1564 = vunpack.c.h.b16 %v348
  %v1565 = vunpack.c.l.b16 %v349
  %v1566 = vunpack.c.h.b16 %v349
  %v1567 = vunpack.c.l.b16 %v350
  %v1568 = vunpack.c.h.b16 %v350
  %v1569 = vunpack.c.l.b16 %v351
  %v1570 = vunpack.c.h.b16 %v351
  %v1571 = vunpack.c.l.b16 %v352
  %v1572 = vunpack.c.h.b16 %v352
  %v1573 = vunpack.c.l.b16 %v353
  %v1574 = vunpack.c.h.b16 %v353
  %v1575 = vunpack.c.l.b16 %v354
  %v1576 = vunpack.c.h.b16 %v354
  %v1577 = vunpack.c.l.b16 %v355
  %v1578 = vunpack.c.h.b16 %v355
  %v1579 = vunpack.c.l.b16 %v356
  %v1580 = vunpack.c.h.b16 %v356
  %v1581 = vunpack.c.l.b16 %v357
  %v1582 = vunpack.c.h.b16 %v357
  %v1583 = vunpack.c.l.b16 %v358
  %v1584 = vunpack.c.h.b16 %v358
  %v1585 = vunpack.c.l.b16 %v359
  %v1586 = vunpack.c.h.b16 %v359
  %v1587 = vunpack.c.l.b16 %v360
  %v1588 = vunpack.c.h.b16 %v360
  %v1589 = vunpack.c.l.b16 %v361
  %v1590 = vunpack.c.h.b16 %v361
  %v1591 = vunpack.c.l.b16 %v362
  %v1592 = vunpack.c.h.b16 %v362
  %v1593 = vunpack.c.l.b16 %v363
  %v1594 = vunpack.c.h.b16 %v363
  %v1595 = vunpack.c.l.b16 %v364
  %v1596 = vunpack.c.h.b16 %v364
  %v1597 = vunpack.c.l.b16 %v365
  %v1598 = vunpack.c.h.b16 %v365
  %v1599 = vunpack.c.l.b16 %v366
  %v1600 = vunpack.c.h.b16 %v366
  %v1601 = vunpack.c.l.b16 %v367
  %v1602 = vunpack.c.h.b16 %v367
  %v1603 = vunpack.c.l.b16 %v368
  %v1604 = vunpack.c.h.b16 %v368
  %v1605 = vunpack.c.l.b16 %v369
  %v1606 = vunpack.c.h.b16 %v369
  %v1607 = vunpack.c.l.b16 %v370
  %v1608 = vunpack.c.h.b16 %v370
  %v1609 = vunpack.c.l.b16 %v371
  %v1610 = vunpack.c.h.b16 %v371
  %v1611 = vunpack.c.l.b16 %v372
  %v1612 = vunpack.c.h.b16 %v372
  %v1613 = vunpack.c.l.b16 %v373
  %v1614 = vunpack.c.h.b16 %v373
  %v1615 = vunpack.c.l.b16 %v374
  %v1616 = vunpack.c.h.b16 %v374
  %v1617 = vunpack.c.l.b16 %v375
  %v1618 = vunpack.c.h.b16 %v375
  %v1619 = vunpack.c.l.b16 %v376
  %v1620 = vunpack.c.h.b16 %v376
  %v1621 = vunpack.c.l.b16 %v377
  %v1622 = vunpack.c.h.b16 %v377
  %v1623 = vunpack.c.l.b16 %v378
  %v1624 = vunpack.c.h.b16 %v378
  %v1625 = vunpack.c.l.b16 %v379
  %v1626 = vunpack.c.h.b16 %v379
  %v1627 = vunpack.c.l.b16 %v380
  %v1628 = vunpack.c.h.b16 %v380
  %v1629 = vunpack.c.l.b16 %v381
  %v1630 = vunpack.c.h.b16 %v381
  %v1631 = vunpack.c.l.b16 %v382
  %v1632 = vunpack.c.h.b16 %v382
  %v1633 = vunpack.c.l.b16 %v383
  %v1634 = vunpack.c.h.b16 %v383
  %v1635 = vunpack.c.l.b16 %v384
  %v1636 = vunpack.c.h.b16 %v384
  %v1637 = vunpack.c.l.b16 %v385
  %v1638 = vunpack.c.h.b16 %v385
  %v1639 = vunpack.c.l.b16 %v386
  %v1640 = vunpack.c.h.b16 %v386
  %v1641 = vunpack.c.l.b16 %v387
  %v1642 = vunpack.c.h.b16 %v387
  %v1643 = vunpack.c.l.b16 %v388
  %v1644 = vunpack.c.h.b16 %v388
  %v1645 = vunpack.c.l.b16 %v389
  %v1646 = vunpack.c.h.b16 %v389
  %v1647 = vunpack.c.l.b16 %v390
  %v1648 = vunpack.c.h.b16 %v390
  %v1649 = vunpack.c.l.b16 %v391
  %v1650 = vunpack.c.h.b16 %v391
  %v1651 = vunpack.c.l.b16 %v392
  %v1652 = vunpack.c.h.b16 %v392
  %v1653 = vunpack.c.l.b16 %v393
  %v1654 = vunpack.c.h.b16 %v393
  %v1655 = vunpack.c.l.b16 %v394
  %v1656 = vunpack.c.h.b16 %v394
  %v1657 = vunpack.c.l.b16 %v395
  %v1658 = vunpack.c.h.b16 %v395
  %v1659 = vunpack.c.l.b16 %v396
  %v1660 = vunpack.c.h.b16 %v396
  %v1661 = vunpack.c.l.b16 %v397
  %v1662 = vunpack.c.h.b16 %v397
  %v1663 = vunpack.c.l.b16 %v398
  %v1664 = vunpack.c.h.b16 %v398
  %v1665 = vunpack.c.l.b16 %v399
  %v1666 = vunpack.c.h.b16 %v399
  %v1667 = vunpack.c.l.b16 %v400
  %v1668 = vunpack.c.h.b16 %v400
  %v1669 = vunpack.c.l.b16 %v401
  %v1670 = vunpack.c.h.b16 %v401
  %v1671 = vunpack.c.l.b16 %v402
  %v1672 = vunpack.c.h.b16 %v402
  %v1673 = vunpack.c.l.b16 %v403
  %v1674 = vunpack.c.h.b16 %v403
  %v1675 = vunpack.c.l.b16 %v404
  %v1676 = vunpack.c.h.b16 %v404
  %v1677 = vunpack.c.l.b16 %v405
  %v1678 = vunpack.c.h.b16 %v405
  %v1679 = vunpack.c.l.b16 %v406
  %v1680 = vunpack.c.h.b16 %v406
  %v1681 = vunpack.c.l.b16 %v407
  %v1682 = vunpack.c.h.b16 %v407
  %v1683 = vunpack.c.l.b16 %v408
  %v1684 = vunpack.c.h.b16 %v408
  %v1685 = vunpack.c.l.b16 %v409
  %v1686 = vunpack.c.h.b16 %v409
  %v1687 = vunpack.c.l.b16 %v410
  %v1688 = vunpack.c.h.b16 %v410
  %v1689 = vunpack.c.l.b16 %v411
  %v1690 = vunpack.c.h.b16 %v411
  %v1691 = vunpack.c.l.b16 %v412
  %v1692 = vunpack.c.h.b16 %v412
  %v1693 = vpack.c.b16 %v1095, %v1093
  %v1694 = vpack.c.b16 %v1096, %v1094
  %v1695 = vpack.c.b16 %v1099, %v1097
  %v1696 = vpack.c.b16 %v1100, %v1098
  %v1697 = vpack.c.b16 %v1103, %v1101
  %v1698 = vpack.c.b16 %v1104, %v1102
  %v1699 = vpack.c.b16 %v1107, %v1105
  %v1700 = vpack.c.b16 %v1108, %v1106
  %v1701 = vpack.c.b16 %v1111, %v1109
  %v1702 = vpack.c.b16 %v1112, %v1110
  %v1703 = vpack.c.b16 %v1115, %v1113
  %v1704 = vpack.c.b16 %v1116, %v1114
  %v1705 = vpack.c.b16 %v1119, %v1117
  %v1706 = vpack.c.b16 %v1120, %v1118
  %v1707 = vpack.c.b16 %v1123, %v1121
  %v1708 = vpack.c.b16 %v1124, %v1122
  %v1709 = vpack.c.b16 %v1127, %v1125
  %v1710 = vpack.c.b16 %v1128, %v1126
  %v1711 = vpack.c.b16 %v1131, %v1129
  %v1712 = vpack.c.b16 %v1132, %v1130
  %v1713 = vpack.c.b16 %v1135, %v1133
  %v1714 = vpack.c.b16 %v1136, %v1134
  %v1715 = vpack.c.b16 %v1139, %v1137
  %v1716 = vpack.c.b16 %v1140, %v1138
  %v1717 = vpack.c.b16 %v1143, %v1141
  %v1718 = vpack.c.b16 %v1144, %v1142
  %v1719 = vpack.c.b16 %v1147, %v1145
  %v1720 = vpack.c.b16 %v1148, %v1146
  %v1721 = vpack.c.b16 %v1151, %v1149
  %v1722 = vpack.c.b16 %v1152, %v1150
  %v1723 = vpack.c.b16 %v1155, %v1153
  %v1724 = vpack.c.b16 %v1156, %v1154
  %v1725 = vpack.c.b16 %v1159, %v1157
  %v1726 = vpack.c.b16 %v1160, %v1158
  %v1727 = vpack.c.b16 %v1163, %v1161
  %v1728 = vpack.c.b16 %v1164, %v1162
  %v1729 = vpack.c.b16 %v1167, %v1165
  %v1730 = vpack.c.b16 %v1168, %v1166
  %v1731 = vpack.c.b16 %v1171, %v1169
  %v1732 = vpack.c.b16 %v1172, %v1170
  %v1733 = vpack.c.b16 %v1175, %v1173
  %v1734 = vpack.c.b16 %v1176, %v1174
  %v1735 = vpack.c.b16 %v1179, %v1177
  %v1736 = vpack.c.b16 %v1180, %v1178
  %v1737 = vpack.c.b16 %v1183, %v1181
  %v1738 = vpack.c.b16 %v1184, %v1182
  %v1739 = vpack.c.b16 %v1187, %v1185
  %v1740 = vpack.c.b16 %v1188, %v1186
  %v1741 = vpack.c.b16 %v1191, %v1189
  %v1742 = vpack.c.b16 %v1192, %v1190
  %v1743 = vpack.c.b16 %v1195, %v1193
  %v1744 = vpack.c.b16 %v1196, %v1194
  %v1745 = vpack.c.b16 %v1199, %v1197
  %v1746 = vpack.c.b16 %v1200, %v1198
  %v1747 = vpack.c.b16 %v1203, %v1201
  %v1748 = vpack.c.b16 %v1204, %v1202
  %v1749 = vpack.c.b16 %v1207, %v1205
  %v1750 = vpack.c.b16 %v1208, %v1206
  %v1751 = vpack.c.b16 %v1211, %v1209
  %v1752 = vpack.c.b16 %v1212, %v1210
  %v1753 = vpack.c.b16 %v1215, %v1213
  %v1754 = vpack.c.b16 %v1216, %v1214
  %v1755 = vpack.c.b16 %v1219, %v1217
  %v1756 = vpack.c.b16 %v1220, %v1218
  %v1757 = vpack.c.b16 %v1223, %v1221
  %v1758 = vpack.c.b16 %v1224, %v1222
  %v1759 = vpack.c.b16 %v1227, %v1225
  %v1760 = vpack.c.b16 %v1228, %v1226
  %v1761 = vpack.c.b16 %v1231, %v1229
  %v1762 = vpack.c.b16 %v1232, %v1230
  %v1763 = vpack.c.b16 %v1235, %v1233
  %v1764 = vpack.c.b16 %v1236, %v1234
  %v1765 = vpack.c.b16 %v1239, %v1237
  %v1766 = vpack.c.b16 %v1240, %v1238
  %v1767 = vpack.c.b16 %v1243, %v1241
  %v1768 = vpack.c.b16 %v1244, %v1242
  %v1769 = vpack.c.b16 %v1247, %v1245
  %v1770 = vpack.c.b16 %v1248, %v1246
  %v1771 = vpack.c.b16 %v1251, %v1249
  %v1772 = vpack.c.b16 %v1252, %v1250
  %v1773 = vpack.c.b16 %v1255, %v1253
  %v1774 = vpack.c.b16 %v1256, %v1254
  %v1775 = vpack.c.b16 %v1259, %v1257
  %v1776 = vpack.c.b16 %v1260, %v1258
  %v1777 = vpack.c.b16 %v1263, %v1261
  %v1778 = vpack.c.b16 %v1264, %v1262
  %v1779 = vpack.c.b16 %v1267, %v1265
  %v1780 = vpack.c.b16 %v1268, %v1266
  %v1781 = vpack.c.b16 %v1271, %v1269
  %v1782 = vpack.c.b16 %v1272, %v1270
  %v1783 = vpack.c.b16 %v1275, %v1273
  %v1784 = vpack.c.b16 %v1276, %v1274
  %v1785 = vpack.c.b16 %v1279, %v1277
  %v1786 = vpack.c.b16 %v1280, %v1278
  %v1787 = vpack.c.b16 %v1283, %v1281
  %v1788 = vpack.c.b16 %v1284, %v1282
  %v1789 = vpack.c.b16 %v1287, %v1285
  %v1790 = vpack.c.b16 %v1288, %v1286
  %v1791 = vpack.c.b16 %v1291, %v1289
  %v1792 = vpack.c.b16 %v1292, %v1290
  %v1793 = vpack.c.b16 %v1295, %v1293
  %v1794 = vpack.c.b16 %v1296, %v1294
  %v1795 = vpack.c.b16 %v1299, %v1297
  %v1796 = vpack.c.b16 %v1300, %v1298
  %v1797 = vpack.c.b16 %v1303, %v1301
  %v1798 = vpack.c.b16 %v1304, %v1302
  %v1799 = vpack.c.b16 %v1307, %v1305
  %v1800 = vpack.c.b16 %v1308, %v1306
  %v1801 = vpack.c.b16 %v1311, %v1309
  %v1802 = vpack.c.b16 %v1312, %v1310
  %v1803 = vpack.c.b16 %v1315, %v1313
  %v1804 = vpack.c.b16 %v1316, %v1314
  %v1805 = vpack.c.b16 %v1319, %v1317
  %v1806 = vpack.c.b16 %v1320, %v1318
  %v1807 = vpack.c.b16 %v1323, %v1321
  %v1808 = vpack.c.b16 %v1324, %v1322
  %v1809 = vpack.c.b16 %v1327, %v1325
  %v1810 = vpack.c.b16 %v1328, %v1326
  %v1811 = vpack.c.b16 %v1331, %v1329
  %v1812 = vpack.c.b16 %v1332, %v1330
  %v1813 = vpack.c.b16 %v1335, %v1333
  %v1814 = vpack.c.b16 %v1336, %v1334
  %v1815 = vpack.c.b16 %v1339, %v1337
  %v1816 = vpack.c.b16 %v1340, %v1338
  %v1817 = vpack.c.b16 %v1343, %v1341
  %v1818 = vpack.c.b16 %v1344, %v1342
  %v1819 = vpack.c.b16 %v1347, %v1345
  %v1820 = vpack.c.b16 %v1348, %v1346
  %v1821 = vpack.c.b16 %v1351, %v1349
  %v1822 = vpack.c.b16 %v1352, %v1350
  %v1823 = vpack.c.b16 %v1355, %v1353
  %v1824 = vpack.c.b16 %v1356, %v1354
  %v1825 = vpack.c.b16 %v1359, %v1357
  %v1826 = vpack.c.b16 %v1360, %v1358
  %v1827 = vpack.c.b16 %v1363, %v1361
  %v1828 = vpack.c.b16 %v1364, %v1362
  %v1829 = vpack.c.b16 %v1367, %v1365
  %v1830 = vpack.c.b16 %v1368, %v1366
  %v1831 = vpack.c.b16 %v1371, %v1369
  %v1832 = vpack.c.b16 %v1372, %v1370
  %v1833 = vpack.c.b16 %v1375, %v1373
  %v1834 = vpack.c.b16 %v1376, %v1374
  %v1835 = vpack.c.b16 %v1379, %v1377
  %v1836 = vpack.c.b16 %v1380, %v1378
  %v1837 = vpack.c.b16 %v1383, %v1381
  %v1838 = vpack.c.b16 %v1384, %v1382
  %v1839 = vpack.c.b16 %v1387, %v1385
  %v1840 = vpack.c.b16 %v1388, %v1386
  %v1841 = vpack.c.b16 %v1391, %v1389
  %v1842 = vpack.c.b16 %v1392, %v1390
  %v1843 = vpack.c.b16 %v1395, %v1393
  %v1844 = vpack.c.b16 %v1396, %v1394
  %v1845 = vpack.c.b16 %v1399, %v1397
  %v1846 = vpack.c.b16 %v1400, %v1398
  %v1847 = vpack.c.b16 %v1403, %v1401
  %v1848 = vpack.c.b16 %v1404, %v1402
  %v1849 = vpack.c.b16 %v1407, %v1405
  %v1850 = vpack.c.b16 %v1408, %v1406
  %v1851 = vpack.c.b16 %v1411, %v1409
  %v1852 = vpack.c.b16 %v1412, %v1410
  %v1853 = vpack.c.b16 %v1415, %v1413
  %v1854 = vpack.c.b16 %v1416, %v1414
  %v1855 = vpack.c.b16 %v1419, %v1417
  %v1856 = vpack.c.b16 %v1420, %v1418
  %v1857 = vpack.c.b16 %v1423, %v1421
  %v1858 = vpack.c.b16 %v1424, %v1422
  %v1859 = vpack.c.b16 %v1427, %v1425
  %v1860 = vpack.c.b16 %v1428, %v1426
  %v1861 = vpack.c.b16 %v1431, %v1429
  %v1862 = vpack.c.b16 %v1432, %v1430
  %v1863 = vpack.c.b16 %v1435, %v1433
  %v1864 = vpack.c.b16 %v1436, %v1434
  %v1865 = vpack.c.b16 %v1439, %v1437
  %v1866 = vpack.c.b16 %v1440, %v1438
  %v1867 = vpack.c.b16 %v1443, %v1441
  %v1868 = vpack.c.b16 %v1444, %v1442
  %v1869 = vpack.c.b16 %v1447, %v1445
  %v1870 = vpack.c.b16 %v1448, %v1446
  %v1871 = vpack.c.b16 %v1451, %v1449
  %v1872 = vpack.c.b16 %v1452, %v1450
  %v1873 = vpack.c.b16 %v1455, %v1453
  %v1874 = vpack.c.b16 %v1456, %v1454
  %v1875 = vpack.c.b16 %v1459, %v1457
  %v1876 = vpack.c.b16 %v1460, %v1458
  %v1877 = vpack.c.b16 %v1463, %v1461
  %v1878 = vpack.c.b16 %v1464, %v1462
  %v1879 = vpack.c.b16 %v1467, %v1465
  %v1880 = vpack.c.b16 %v1468, %v1466
  %v1881 = vpack.c.b16 %v1471, %v1469
  %v1882 = vpack.c.b16 %v1472, %v1470
  %v1883 = vpack.c.b16 %v1475, %v1473
  %v1884 = vpack.c.b16 %v1476, %v1474
  %v1885 = vpack.c.b16 %v1479, %v1477
  %v1886 = vpack.c.b16 %v1480, %v1478
  %v1887 = vpack.c.b16 %v1483, %v1481
  %v1888 = vpack.c.b16 %v1484, %v1482
  %v1889 = vpack.c.b16 %v1487, %v1485
  %v1890 = vpack.c.b16 %v1488, %v1486
  %v1891 = vpack.c.b16 %v1491, %v1489
  %v1892 = vpack.c.b16 %v1492, %v1490
  %v1893 = vpack.c.b16 %v1495, %v1493
  %v1894 = vpack.c.b16 %v1496, %v1494
  %v1895 = vpack.c.b16 %v1499, %v1497
  %v1896 = vpack.c.b16 %v1500, %v1498
  %v1897 = vpack.c.b16 %v1503, %v1501
  %v1898 = vpack.c.b16 %v1504, %v1502
  %v1899 = vpack.c.b16 %v1507, %v1505
  %v1900 = vpack.c.b16 %v1508, %v1506
  %v1901 = vpack.c.b16 %v1511, %v1509
  %v1902 = vpack.c.b16 %v1512, %v1510
  %v1903 = vpack.c.b16 %v1515, %v1513
  %v1904 = vpack.c.b16 %v1516, %v1514
  %v1905 = vpack.c.b16 %v1519, %v1517
  %v1906 = vpack.c.b16 %v1520, %v1518
  %v1907 = vpack.c.b16 %v1523, %v1521
  %v1908 = vpack.c.b16 %v1524, %v1522
  %v1909 = vpack.c.b16 %v1527, %v1525
  %v1910 = vpack.c.b16 %v1528, %v1526
  %v1911 = vpack.c.b16 %v1531, %v1529
  %v1912 = vpack.c.b16 %v1532, %v1530
  %v1913 = vpack.c.b16 %v1535, %v1533
  %v1914 = vpack.c.b16 %v1536, %v1534
  %v1915 = vpack.c.b16 %v1539, %v1537
  %v1916 = vpack.c.b16 %v1540, %v1538
  %v1917 = vpack.c.b16 %v1543, %v1541
  %v1918 = vpack.c.b16 %v1544, %v1542
  %v1919 = vpack.c.b16 %v1547, %v1545
  %v1920 = vpack.c.b16 %v1548, %v1546
  %v1921 = vpack.c.b16 %v1551, %v1549
  %v1922 = vpack.c.b16 %v1552, %v1550
  %v1923 = vpack.c.b16 %v1555, %v1553
  %v1924 = vpack.c.b16 %v1556, %v1554
  %v1925 = vpack.c.b16 %v1559, %v1557
  %v1926 = vpack.c.b16 %v1560, %v1558
  %v1927 = vpack.c.b16 %v1563, %v1561
  %v1928 = vpack.c.b16 %v1564, %v1562
  %v1929 = vpack.c.b16 %v1567, %v1565
  %v1930 = vpack.c.b16 %v1568, %v1566
  %v1931 = vpack.c.b16 %v1571, %v1569
  %v1932 = vpack.c.b16 %v1572, %v1570
  %v1933 = vpack.c.b16 %v1575, %v1573
  %v1934 = vpack.c.b16 %v1576, %v1574
  %v1935 = vpack.c.b16 %v1579, %v1577
  %v1936 = vpack.c.b16 %v1580, %v1578
  %v1937 = vpack.c.b16 %v1583, %v1581
  %v1938 = vpack.c.b16 %v1584, %v1582
  %v1939 = vpack.c.b16 %v1587, %v1585
  %v1940 = vpack.c.b16 %v1588, %v1586
  %v1941 = vpack.c.b16 %v1591, %v1589
  %v1942 = vpack.c.b16 %v1592, %v1590
  %v1943 = vpack.c.b16 %v1595, %v1593
  %v1944 = vpack.c.b16 %v1596, %v1594
  %v1945 = vpack.c.b16 %v1599, %v1597
  %v1946 = vpack.c.b16 %v1600, %v1598
  %v1947 = vpack.c.b16 %v1603, %v1601
  %v1948 = vpack.c.b16 %v1604, %v1602
  %v1949 = vpack.c.b16 %v1607, %v1605
  %v1950 = vpack.c.b16 %v1608, %v1606
  %v1951 = vpack.c.b16 %v1611, %v1609
  %v1952 = vpack.c.b16 %v1612, %v1610
  %v1953 = vpack.c.b16 %v1615, %v1613
  %v1954 = vpack.c.b16 %v1616, %v1614
  %v1955 = vpack.c.b16 %v1619, %v1617
  %v1956 = vpack.c.b16 %v1620, %v1618
  %v1957 = vpack.c.b16 %v1623, %v1621
  %v1958 = vpack.c.b16 %v1624, %v1622
  %v1959 = vpack.c.b16 %v1627, %v1625
  %v1960 = vpack.c.b16 %v1628, %v1626
  %v1961 = vpack.c.b16 %v1631, %v1629
  %v1962 = vpack.c.b16 %v1632, %v1630
  %v1963 = vpack.c.b16 %v1635, %v1633
  %v1964 = vpack.c.b16 %v1636, %v1634
  %v1965 = vpack.c.b16 %v1639, %v1637
  %v1966 = vpack.c.b16 %v1640, %v1638
  %v1967 = vpack.c.b16 %v1643, %v1641
  %v1968 = vpack.c.b16 %v1644, %v1642
  %v1969 = vpack.c.b16 %v1647, %v1645
  %v1970 = vpack.c.b16 %v1648, %v1646
  %v1971 = vpack.c.b16 %v1651, %v1649
  %v1972 = vpack.c.b16 %v1652, %v1650
  %v1973 = vpack.c.b16 %v1655, %v1653
  %v1974 = vpack.c.b16 %v1656, %v1654
  %v1975 = vpack.c.b16 %v1659, %v1657
  %v1976 = vpack.c.b16 %v1660, %v1658
  %v1977 = vpack.c.b16 %v1663, %v1661
  %v1978 = vpack.c.b16 %v1664, %v1662
  %v1979 = vpack.c.b16 %v1667, %v1665
  %v1980 = vpack.c.b16 %v1668, %v1666
  %v1981 = vpack.c.b16 %v1671, %v1669
  %v1982 = vpack.c.b16 %v1672, %v1670
  %v1983 = vpack.c.b16 %v1675, %v1673
  %v1984 = vpack.c.b16 %v1676, %v1674
  %v1985 = vpack.c.b16 %v1679, %v1677
  %v1986 = vpack.c.b16 %v1680, %v1678
  %v1987 = vpack.c.b16 %v1683, %v1681
  %v1988 = vpack.c.b16 %v1684, %v1682
  %v1989 = vpack.c.b16 %v1687, %v1685
  %v1990 = vpack.c.b16 %v1688, %v1686
  %v1991 = vpack.c.b16 %v1691, %v1689
  %v1992 = vpack.c.b16 %v1692, %v1690
  %vm2293 = vcmask 785408
  %v2295 = vsel %vm2293, %v663, 0
  %v2298 = vsel %vm2293, %v682, 0
  %v2301 = vsel %vm2293, %v701, 0
  %v2304 = vsel %vm2293, %v720, 0
  %2306 = vmatprep.subr.bf16.mxu0 %v1694
  %2307 = vmatpush1.bf16.msra.mxu0 %v1693
  %2308 = vmatprep.subr.bf16.mxu0 %v1696
  %2309 = vmatpush1.bf16.msra.mxu0 %v1695
  %2310 = vmatprep.subr.bf16.mxu0 %v1698
  %2311 = vmatpush1.bf16.msra.mxu0 %v1697
  %2312 = vmatprep.subr.bf16.mxu0 %v1700
  %2313 = vmatpush1.bf16.msra.mxu0 %v1699
  %2314 = vmatprep.subr.bf16.mxu0 %v1702
  %2315 = vmatpush1.bf16.msra.mxu0 %v1701
  %2316 = vmatprep.subr.bf16.mxu0 %v1704
  %2317 = vmatpush1.bf16.msra.mxu0 %v1703
  %2318 = vmatprep.subr.bf16.mxu0 %v1706
  %2319 = vmatpush1.bf16.msra.mxu0 %v1705
  %2320 = vmatprep.subr.bf16.mxu0 %v1708
  %2321 = vmatpush1.bf16.msra.mxu0 %v1707
  %2322 = vmatprep.subr.bf16.mxu0 %v1710
  %2323 = vmatpush1.bf16.msra.mxu0 %v1709
  %2324 = vmatprep.subr.bf16.mxu0 %v1712
  %2325 = vmatpush1.bf16.msra.mxu0 %v1711
  %2326 = vmatprep.subr.bf16.mxu0 %v1714
  %2327 = vmatpush1.bf16.msra.mxu0 %v1713
  %2328 = vmatprep.subr.bf16.mxu0 %v1716
  %2329 = vmatpush1.bf16.msra.mxu0 %v1715
  %2330 = vmatprep.subr.bf16.mxu0 %v1718
  %2331 = vmatpush1.bf16.msra.mxu0 %v1717
  %2332 = vmatprep.subr.bf16.mxu0 %v1720
  %2333 = vmatpush1.bf16.msra.mxu0 %v1719
  %2334 = vmatprep.subr.bf16.mxu0 %v1722
  %2335 = vmatpush1.bf16.msra.mxu0 %v1721
  %2336 = vmatprep.subr.bf16.mxu0 %v1724
  %2337 = vmatpush1.bf16.msra.mxu0 %v1723
  %2338 = vmatprep.mubr.bf16.mxu0 %v646
  %2339 = vmatmul.mubr.bf16.gmra.mrb[0].mxu0 %v645
  %v2340 = vpop.f32.mrb[0].mxu0
  %v2341 = vadd.f32 0.0, %v2340
  %v2342 = vpop.f32.mrb[0].mxu0
  %v2343 = vadd.f32 0.0, %v2342
  %v2344 = vpop.f32.mrb[0].mxu0
  %v2345 = vadd.f32 0.0, %v2344
  %v2346 = vpop.f32.mrb[0].mxu0
  %v2347 = vadd.f32 0.0, %v2346
  %2348 = vmatprep.mubr.bf16.mxu0 %v665
  %2349 = vmatmul.mubr.bf16.gmra.mrb[0].mxu0 %v664
  %v2350 = vpop.f32.mrb[0].mxu0
  %v2351 = vadd.f32 0.0, %v2350
  %v2352 = vpop.f32.mrb[0].mxu0
  %v2353 = vadd.f32 0.0, %v2352
  %v2354 = vpop.f32.mrb[0].mxu0
  %v2355 = vadd.f32 0.0, %v2354
  %v2356 = vpop.f32.mrb[0].mxu0
  %v2357 = vadd.f32 0.0, %v2356
  %2358 = vmatprep.mubr.bf16.mxu0 %v684
  %2359 = vmatmul.mubr.bf16.gmra.mrb[0].mxu0 %v683
  %v2360 = vpop.f32.mrb[0].mxu0
  %v2361 = vadd.f32 0.0, %v2360
  %v2362 = vpop.f32.mrb[0].mxu0
  %v2363 = vadd.f32 0.0, %v2362
  %v2364 = vpop.f32.mrb[0].mxu0
  %v2365 = vadd.f32 0.0, %v2364
  %v2366 = vpop.f32.mrb[0].mxu0
  %v2367 = vadd.f32 0.0, %v2366
  %2368 = vmatprep.mubr.bf16.mxu0 %v703
  %2369 = vmatmul.mubr.bf16.gmra.mrb[0].mxu0 %v702
  %v2370 = vpop.f32.mrb[0].mxu0
  %v2371 = vadd.f32 0.0, %v2370
  %v2372 = vpop.f32.mrb[0].mxu0
  %v2373 = vadd.f32 0.0, %v2372
  %v2374 = vpop.f32.mrb[0].mxu0
  %v2375 = vadd.f32 0.0, %v2374
  %v2376 = vpop.f32.mrb[0].mxu0
  %v2377 = vadd.f32 0.0, %v2376
  %2378 = vdwg.mxu0
  %2379 = vmatprep.subr.bf16.mxu0 %v1726
  %2380 = vmatpush1.bf16.msra.mxu0 %v1725
  %2381 = vmatprep.subr.bf16.mxu0 %v1728
  %2382 = vmatpush1.bf16.msra.mxu0 %v1727
  %2383 = vmatprep.subr.bf16.mxu0 %v1730
  %2384 = vmatpush1.bf16.msra.mxu0 %v1729
  %2385 = vmatprep.subr.bf16.mxu0 %v1732
  %2386 = vmatpush1.bf16.msra.mxu0 %v1731
  %2387 = vmatprep.subr.bf16.mxu0 %v1734
  %2388 = vmatpush1.bf16.msra.mxu0 %v1733
  %2389 = vmatprep.subr.bf16.mxu0 %v1736
  %2390 = vmatpush1.bf16.msra.mxu0 %v1735
  %2391 = vmatprep.subr.bf16.mxu0 %v1738
  %2392 = vmatpush1.bf16.msra.mxu0 %v1737
  %2393 = vmatprep.subr.bf16.mxu0 %v1740
  %2394 = vmatpush1.bf16.msra.mxu0 %v1739
  %2395 = vmatprep.subr.bf16.mxu0 %v1742
  %2396 = vmatpush1.bf16.msra.mxu0 %v1741
  %2397 = vmatprep.subr.bf16.mxu0 %v1744
  %2398 = vmatpush1.bf16.msra.mxu0 %v1743
  %2399 = vmatprep.subr.bf16.mxu0 %v1746
  %2400 = vmatpush1.bf16.msra.mxu0 %v1745
  %2401 = vmatprep.subr.bf16.mxu0 %v1748
  %2402 = vmatpush1.bf16.msra.mxu0 %v1747
  %2403 = vmatprep.subr.bf16.mxu0 %v1750
  %2404 = vmatpush1.bf16.msra.mxu0 %v1749
  %2405 = vmatprep.subr.bf16.mxu0 %v1752
  %2406 = vmatpush1.bf16.msra.mxu0 %v1751
  %2407 = vmatprep.subr.bf16.mxu0 %v1754
  %2408 = vmatpush1.bf16.msra.mxu0 %v1753
  %2409 = vmatprep.subr.bf16.mxu0 %v1756
  %2410 = vmatpush1.bf16.msra.mxu0 %v1755
  %2411 = vmatprep.mubr.bf16.mxu0 %v648
  %2412 = vmatmul.mubr.bf16.gmra.mrb[0].mxu0 %v647
  %v2413 = vpop.f32.mrb[0].mxu0
  %v2414 = vadd.f32 %v2341, %v2413
  %v2415 = vpop.f32.mrb[0].mxu0
  %v2416 = vadd.f32 %v2343, %v2415
  %v2417 = vpop.f32.mrb[0].mxu0
  %v2418 = vadd.f32 %v2345, %v2417
  %v2419 = vpop.f32.mrb[0].mxu0
  %v2420 = vadd.f32 %v2347, %v2419
  %2421 = vmatprep.mubr.bf16.mxu0 %v667
  %2422 = vmatmul.mubr.bf16.gmra.mrb[0].mxu0 %v666
  %v2423 = vpop.f32.mrb[0].mxu0
  %v2424 = vadd.f32 %v2351, %v2423
  %v2425 = vpop.f32.mrb[0].mxu0
  %v2426 = vadd.f32 %v2353, %v2425
  %v2427 = vpop.f32.mrb[0].mxu0
  %v2428 = vadd.f32 %v2355, %v2427
  %v2429 = vpop.f32.mrb[0].mxu0
  %v2430 = vadd.f32 %v2357, %v2429
  %2431 = vmatprep.mubr.bf16.mxu0 %v686
  %2432 = vmatmul.mubr.bf16.gmra.mrb[0].mxu0 %v685
  %v2433 = vpop.f32.mrb[0].mxu0
  %v2434 = vadd.f32 %v2361, %v2433
  %v2435 = vpop.f32.mrb[0].mxu0
  %v2436 = vadd.f32 %v2363, %v2435
  %v2437 = vpop.f32.mrb[0].mxu0
  %v2438 = vadd.f32 %v2365, %v2437
  %v2439 = vpop.f32.mrb[0].mxu0
  %v2440 = vadd.f32 %v2367, %v2439
  %2441 = vmatprep.mubr.bf16.mxu0 %v705
  %2442 = vmatmul.mubr.bf16.gmra.mrb[0].mxu0 %v704
  %v2443 = vpop.f32.mrb[0].mxu0
  %v2444 = vadd.f32 %v2371, %v2443
  %v2445 = vpop.f32.mrb[0].mxu0
  %v2446 = vadd.f32 %v2373, %v2445
  %v2447 = vpop.f32.mrb[0].mxu0
  %v2448 = vadd.f32 %v2375, %v2447
  %v2449 = vpop.f32.mrb[0].mxu0
  %v2450 = vadd.f32 %v2377, %v2449
  %2451 = vdwg.mxu0
  %2452 = vmatprep.subr.bf16.mxu0 %v1758
  %2453 = vmatpush1.bf16.msra.mxu0 %v1757
  %2454 = vmatprep.subr.bf16.mxu0 %v1760
  %2455 = vmatpush1.bf16.msra.mxu0 %v1759
  %2456 = vmatprep.subr.bf16.mxu0 %v1762
  %2457 = vmatpush1.bf16.msra.mxu0 %v1761
  %2458 = vmatprep.subr.bf16.mxu0 %v1764
  %2459 = vmatpush1.bf16.msra.mxu0 %v1763
  %2460 = vmatprep.subr.bf16.mxu0 %v1766
  %2461 = vmatpush1.bf16.msra.mxu0 %v1765
  %2462 = vmatprep.subr.bf16.mxu0 %v1768
  %2463 = vmatpush1.bf16.msra.mxu0 %v1767
  %2464 = vmatprep.subr.bf16.mxu0 %v1770
  %2465 = vmatpush1.bf16.msra.mxu0 %v1769
  %2466 = vmatprep.subr.bf16.mxu0 %v1772
  %2467 = vmatpush1.bf16.msra.mxu0 %v1771
  %2468 = vmatprep.subr.bf16.mxu0 %v1774
  %2469 = vmatpush1.bf16.msra.mxu0 %v1773
  %2470 = vmatprep.subr.bf16.mxu0 %v1776
  %2471 = vmatpush1.bf16.msra.mxu0 %v1775
  %2472 = vmatprep.subr.bf16.mxu0 %v1778
  %2473 = vmatpush1.bf16.msra.mxu0 %v1777
  %2474 = vmatprep.subr.bf16.mxu0 %v1780
  %2475 = vmatpush1.bf16.msra.mxu0 %v1779
  %2476 = vmatprep.subr.bf16.mxu0 %v1782
  %2477 = vmatpush1.bf16.msra.mxu0 %v1781
  %2478 = vmatprep.subr.bf16.mxu0 %v1784
  %2479 = vmatpush1.bf16.msra.mxu0 %v1783
  %2480 = vmatprep.subr.bf16.mxu0 %v1786
  %2481 = vmatpush1.bf16.msra.mxu0 %v1785
  %2482 = vmatprep.subr.bf16.mxu0 %v1788
  %2483 = vmatpush1.bf16.msra.mxu0 %v1787
  %2484 = vmatprep.mubr.bf16.mxu0 %v650
  %2485 = vmatmul.mubr.bf16.gmra.mrb[0].mxu0 %v649
  %v2486 = vpop.f32.mrb[0].mxu0
  %v2487 = vadd.f32 %v2414, %v2486
  %v2488 = vpop.f32.mrb[0].mxu0
  %v2489 = vadd.f32 %v2416, %v2488
  %v2490 = vpop.f32.mrb[0].mxu0
  %v2491 = vadd.f32 %v2418, %v2490
  %v2492 = vpop.f32.mrb[0].mxu0
  %v2493 = vadd.f32 %v2420, %v2492
  %2494 = vmatprep.mubr.bf16.mxu0 %v669
  %2495 = vmatmul.mubr.bf16.gmra.mrb[0].mxu0 %v668
  %v2496 = vpop.f32.mrb[0].mxu0
  %v2497 = vadd.f32 %v2424, %v2496
  %v2498 = vpop.f32.mrb[0].mxu0
  %v2499 = vadd.f32 %v2426, %v2498
  %v2500 = vpop.f32.mrb[0].mxu0
  %v2501 = vadd.f32 %v2428, %v2500
  %v2502 = vpop.f32.mrb[0].mxu0
  %v2503 = vadd.f32 %v2430, %v2502
  %2504 = vmatprep.mubr.bf16.mxu0 %v688
  %2505 = vmatmul.mubr.bf16.gmra.mrb[0].mxu0 %v687
  %v2506 = vpop.f32.mrb[0].mxu0
  %v2507 = vadd.f32 %v2434, %v2506
  %v2508 = vpop.f32.mrb[0].mxu0
  %v2509 = vadd.f32 %v2436, %v2508
  %v2510 = vpop.f32.mrb[0].mxu0
  %v2511 = vadd.f32 %v2438, %v2510
  %v2512 = vpop.f32.mrb[0].mxu0
  %v2513 = vadd.f32 %v2440, %v2512
  %2514 = vmatprep.mubr.bf16.mxu0 %v707
  %2515 = vmatmul.mubr.bf16.gmra.mrb[0].mxu0 %v706
  %v2516 = vpop.f32.mrb[0].mxu0
  %v2517 = vadd.f32 %v2444, %v2516
  %v2518 = vpop.f32.mrb[0].mxu0
  %v2519 = vadd.f32 %v2446, %v2518
  %v2520 = vpop.f32.mrb[0].mxu0
  %v2521 = vadd.f32 %v2448, %v2520
  %v2522 = vpop.f32.mrb[0].mxu0
  %v2523 = vadd.f32 %v2450, %v2522
  %2524 = vdwg.mxu0
  %2525 = vmatprep.subr.bf16.mxu0 %v1790
  %2526 = vmatpush1.bf16.msra.mxu0 %v1789
  %2527 = vmatprep.subr.bf16.mxu0 %v1792
  %2528 = vmatpush1.bf16.msra.mxu0 %v1791
  %2529 = vmatprep.subr.bf16.mxu0 %v1794
  %2530 = vmatpush1.bf16.msra.mxu0 %v1793
  %2531 = vmatprep.subr.bf16.mxu0 %v1796
  %2532 = vmatpush1.bf16.msra.mxu0 %v1795
  %2533 = vmatprep.subr.bf16.mxu0 %v1798
  %2534 = vmatpush1.bf16.msra.mxu0 %v1797
  %2535 = vmatprep.subr.bf16.mxu0 %v1800
  %2536 = vmatpush1.bf16.msra.mxu0 %v1799
  %2537 = vmatprep.subr.bf16.mxu0 %v1802
  %2538 = vmatpush1.bf16.msra.mxu0 %v1801
  %2539 = vmatprep.subr.bf16.mxu0 %v1804
  %2540 = vmatpush1.bf16.msra.mxu0 %v1803
  %2541 = vmatprep.subr.bf16.mxu0 %v1806
  %2542 = vmatpush1.bf16.msra.mxu0 %v1805
  %2543 = vmatprep.subr.bf16.mxu0 %v1808
  %2544 = vmatpush1.bf16.msra.mxu0 %v1807
  %2545 = vmatprep.subr.bf16.mxu0 %v1810
  %2546 = vmatpush1.bf16.msra.mxu0 %v1809
  %2547 = vmatprep.subr.bf16.mxu0 %v1812
  %2548 = vmatpush1.bf16.msra.mxu0 %v1811
  %2549 = vmatprep.subr.bf16.mxu0 %v1814
  %2550 = vmatpush1.bf16.msra.mxu0 %v1813
  %2551 = vmatprep.subr.bf16.mxu0 %v1816
  %2552 = vmatpush1.bf16.msra.mxu0 %v1815
  %2553 = vmatprep.subr.bf16.mxu0 %v1818
  %2554 = vmatpush1.bf16.msra.mxu0 %v1817
  %2555 = vmatprep.subr.bf16.mxu0 %v1820
  %2556 = vmatpush1.bf16.msra.mxu0 %v1819
  %2557 = vmatprep.mubr.bf16.mxu0 %v652
  %2558 = vmatmul.mubr.bf16.gmra.mrb[0].mxu0 %v651
  %v2559 = vpop.f32.mrb[0].mxu0
  %v2560 = vadd.f32 %v2487, %v2559
  %v2561 = vpop.f32.mrb[0].mxu0
  %v2562 = vadd.f32 %v2489, %v2561
  %v2563 = vpop.f32.mrb[0].mxu0
  %v2564 = vadd.f32 %v2491, %v2563
  %v2565 = vpop.f32.mrb[0].mxu0
  %v2566 = vadd.f32 %v2493, %v2565
  %2567 = vmatprep.mubr.bf16.mxu0 %v671
  %2568 = vmatmul.mubr.bf16.gmra.mrb[0].mxu0 %v670
  %v2569 = vpop.f32.mrb[0].mxu0
  %v2570 = vadd.f32 %v2497, %v2569
  %v2571 = vpop.f32.mrb[0].mxu0
  %v2572 = vadd.f32 %v2499, %v2571
  %v2573 = vpop.f32.mrb[0].mxu0
  %v2574 = vadd.f32 %v2501, %v2573
  %v2575 = vpop.f32.mrb[0].mxu0
  %v2576 = vadd.f32 %v2503, %v2575
  %2577 = vmatprep.mubr.bf16.mxu0 %v690
  %2578 = vmatmul.mubr.bf16.gmra.mrb[0].mxu0 %v689
  %v2579 = vpop.f32.mrb[0].mxu0
  %v2580 = vadd.f32 %v2507, %v2579
  %v2581 = vpop.f32.mrb[0].mxu0
  %v2582 = vadd.f32 %v2509, %v2581
  %v2583 = vpop.f32.mrb[0].mxu0
  %v2584 = vadd.f32 %v2511, %v2583
  %v2585 = vpop.f32.mrb[0].mxu0
  %v2586 = vadd.f32 %v2513, %v2585
  %2587 = vmatprep.mubr.bf16.mxu0 %v709
  %2588 = vmatmul.mubr.bf16.gmra.mrb[0].mxu0 %v708
  %v2589 = vpop.f32.mrb[0].mxu0
  %v2590 = vadd.f32 %v2517, %v2589
  %v2591 = vpop.f32.mrb[0].mxu0
  %v2592 = vadd.f32 %v2519, %v2591
  %v2593 = vpop.f32.mrb[0].mxu0
  %v2594 = vadd.f32 %v2521, %v2593
  %v2595 = vpop.f32.mrb[0].mxu0
  %v2596 = vadd.f32 %v2523, %v2595
  %2597 = vdwg.mxu0
  %2598 = vmatprep.subr.bf16.mxu0 %v1822
  %2599 = vmatpush1.bf16.msra.mxu0 %v1821
  %2600 = vmatprep.subr.bf16.mxu0 %v1824
  %2601 = vmatpush1.bf16.msra.mxu0 %v1823
  %2602 = vmatprep.subr.bf16.mxu0 %v1826
  %2603 = vmatpush1.bf16.msra.mxu0 %v1825
  %2604 = vmatprep.subr.bf16.mxu0 %v1828
  %2605 = vmatpush1.bf16.msra.mxu0 %v1827
  %2606 = vmatprep.subr.bf16.mxu0 %v1830
  %2607 = vmatpush1.bf16.msra.mxu0 %v1829
  %2608 = vmatprep.subr.bf16.mxu0 %v1832
  %2609 = vmatpush1.bf16.msra.mxu0 %v1831
  %2610 = vmatprep.subr.bf16.mxu0 %v1834
  %2611 = vmatpush1.bf16.msra.mxu0 %v1833
  %2612 = vmatprep.subr.bf16.mxu0 %v1836
  %2613 = vmatpush1.bf16.msra.mxu0 %v1835
  %2614 = vmatprep.subr.bf16.mxu0 %v1838
  %2615 = vmatpush1.bf16.msra.mxu0 %v1837
  %2616 = vmatprep.subr.bf16.mxu0 %v1840
  %2617 = vmatpush1.bf16.msra.mxu0 %v1839
  %2618 = vmatprep.subr.bf16.mxu0 %v1842
  %2619 = vmatpush1.bf16.msra.mxu0 %v1841
  %2620 = vmatprep.subr.bf16.mxu0 %v1844
  %2621 = vmatpush1.bf16.msra.mxu0 %v1843
  %2622 = vmatprep.subr.bf16.mxu0 %v1846
  %2623 = vmatpush1.bf16.msra.mxu0 %v1845
  %2624 = vmatprep.subr.bf16.mxu0 %v1848
  %2625 = vmatpush1.bf16.msra.mxu0 %v1847
  %2626 = vmatprep.subr.bf16.mxu0 %v1850
  %2627 = vmatpush1.bf16.msra.mxu0 %v1849
  %2628 = vmatprep.subr.bf16.mxu0 %v1852
  %2629 = vmatpush1.bf16.msra.mxu0 %v1851
  %2630 = vmatprep.mubr.bf16.mxu0 %v654
  %2631 = vmatmul.mubr.bf16.gmra.mrb[0].mxu0 %v653
  %v2632 = vpop.f32.mrb[0].mxu0
  %v2633 = vadd.f32 %v2560, %v2632
  %v2634 = vpop.f32.mrb[0].mxu0
  %v2635 = vadd.f32 %v2562, %v2634
  %v2636 = vpop.f32.mrb[0].mxu0
  %v2637 = vadd.f32 %v2564, %v2636
  %v2638 = vpop.f32.mrb[0].mxu0
  %v2639 = vadd.f32 %v2566, %v2638
  %2640 = vmatprep.mubr.bf16.mxu0 %v673
  %2641 = vmatmul.mubr.bf16.gmra.mrb[0].mxu0 %v672
  %v2642 = vpop.f32.mrb[0].mxu0
  %v2643 = vadd.f32 %v2570, %v2642
  %v2644 = vpop.f32.mrb[0].mxu0
  %v2645 = vadd.f32 %v2572, %v2644
  %v2646 = vpop.f32.mrb[0].mxu0
  %v2647 = vadd.f32 %v2574, %v2646
  %v2648 = vpop.f32.mrb[0].mxu0
  %v2649 = vadd.f32 %v2576, %v2648
  %2650 = vmatprep.mubr.bf16.mxu0 %v692
  %2651 = vmatmul.mubr.bf16.gmra.mrb[0].mxu0 %v691
  %v2652 = vpop.f32.mrb[0].mxu0
  %v2653 = vadd.f32 %v2580, %v2652
  %v2654 = vpop.f32.mrb[0].mxu0
  %v2655 = vadd.f32 %v2582, %v2654
  %v2656 = vpop.f32.mrb[0].mxu0
  %v2657 = vadd.f32 %v2584, %v2656
  %v2658 = vpop.f32.mrb[0].mxu0
  %v2659 = vadd.f32 %v2586, %v2658
  %2660 = vmatprep.mubr.bf16.mxu0 %v711
  %2661 = vmatmul.mubr.bf16.gmra.mrb[0].mxu0 %v710
  %v2662 = vpop.f32.mrb[0].mxu0
  %v2663 = vadd.f32 %v2590, %v2662
  %v2664 = vpop.f32.mrb[0].mxu0
  %v2665 = vadd.f32 %v2592, %v2664
  %v2666 = vpop.f32.mrb[0].mxu0
  %v2667 = vadd.f32 %v2594, %v2666
  %v2668 = vpop.f32.mrb[0].mxu0
  %v2669 = vadd.f32 %v2596, %v2668
  %2670 = vdwg.mxu0
  %2671 = vmatprep.subr.bf16.mxu0 %v1854
  %2672 = vmatpush1.bf16.msra.mxu0 %v1853
  %2673 = vmatprep.subr.bf16.mxu0 %v1856
  %2674 = vmatpush1.bf16.msra.mxu0 %v1855
  %2675 = vmatprep.subr.bf16.mxu0 %v1858
  %2676 = vmatpush1.bf16.msra.mxu0 %v1857
  %2677 = vmatprep.subr.bf16.mxu0 %v1860
  %2678 = vmatpush1.bf16.msra.mxu0 %v1859
  %2679 = vmatprep.subr.bf16.mxu0 %v1862
  %2680 = vmatpush1.bf16.msra.mxu0 %v1861
  %2681 = vmatprep.subr.bf16.mxu0 %v1864
  %2682 = vmatpush1.bf16.msra.mxu0 %v1863
  %2683 = vmatprep.subr.bf16.mxu0 %v1866
  %2684 = vmatpush1.bf16.msra.mxu0 %v1865
  %2685 = vmatprep.subr.bf16.mxu0 %v1868
  %2686 = vmatpush1.bf16.msra.mxu0 %v1867
  %2687 = vmatprep.subr.bf16.mxu0 %v1870
  %2688 = vmatpush1.bf16.msra.mxu0 %v1869
  %2689 = vmatprep.subr.bf16.mxu0 %v1872
  %2690 = vmatpush1.bf16.msra.mxu0 %v1871
  %2691 = vmatprep.subr.bf16.mxu0 %v1874
  %2692 = vmatpush1.bf16.msra.mxu0 %v1873
  %2693 = vmatprep.subr.bf16.mxu0 %v1876
  %2694 = vmatpush1.bf16.msra.mxu0 %v1875
  %2695 = vmatprep.subr.bf16.mxu0 %v1878
  %2696 = vmatpush1.bf16.msra.mxu0 %v1877
  %2697 = vmatprep.subr.bf16.mxu0 %v1880
  %2698 = vmatpush1.bf16.msra.mxu0 %v1879
  %2699 = vmatprep.subr.bf16.mxu0 %v1882
  %2700 = vmatpush1.bf16.msra.mxu0 %v1881
  %2701 = vmatprep.subr.bf16.mxu0 %v1884
  %2702 = vmatpush1.bf16.msra.mxu0 %v1883
  %2703 = vmatprep.mubr.bf16.mxu0 %v656
  %2704 = vmatmul.mubr.bf16.gmra.mrb[0].mxu0 %v655
  %v2705 = vpop.f32.mrb[0].mxu0
  %v2706 = vadd.f32 %v2633, %v2705
  %v2707 = vpop.f32.mrb[0].mxu0
  %v2708 = vadd.f32 %v2635, %v2707
  %v2709 = vpop.f32.mrb[0].mxu0
  %v2710 = vadd.f32 %v2637, %v2709
  %v2711 = vpop.f32.mrb[0].mxu0
  %v2712 = vadd.f32 %v2639, %v2711
  %2713 = vmatprep.mubr.bf16.mxu0 %v675
  %2714 = vmatmul.mubr.bf16.gmra.mrb[0].mxu0 %v674
  %v2715 = vpop.f32.mrb[0].mxu0
  %v2716 = vadd.f32 %v2643, %v2715
  %v2717 = vpop.f32.mrb[0].mxu0
  %v2718 = vadd.f32 %v2645, %v2717
  %v2719 = vpop.f32.mrb[0].mxu0
  %v2720 = vadd.f32 %v2647, %v2719
  %v2721 = vpop.f32.mrb[0].mxu0
  %v2722 = vadd.f32 %v2649, %v2721
  %2723 = vmatprep.mubr.bf16.mxu0 %v694
  %2724 = vmatmul.mubr.bf16.gmra.mrb[0].mxu0 %v693
  %v2725 = vpop.f32.mrb[0].mxu0
  %v2726 = vadd.f32 %v2653, %v2725
  %v2727 = vpop.f32.mrb[0].mxu0
  %v2728 = vadd.f32 %v2655, %v2727
  %v2729 = vpop.f32.mrb[0].mxu0
  %v2730 = vadd.f32 %v2657, %v2729
  %v2731 = vpop.f32.mrb[0].mxu0
  %v2732 = vadd.f32 %v2659, %v2731
  %2733 = vmatprep.mubr.bf16.mxu0 %v713
  %2734 = vmatmul.mubr.bf16.gmra.mrb[0].mxu0 %v712
  %v2735 = vpop.f32.mrb[0].mxu0
  %v2736 = vadd.f32 %v2663, %v2735
  %v2737 = vpop.f32.mrb[0].mxu0
  %v2738 = vadd.f32 %v2665, %v2737
  %v2739 = vpop.f32.mrb[0].mxu0
  %v2740 = vadd.f32 %v2667, %v2739
  %v2741 = vpop.f32.mrb[0].mxu0
  %v2742 = vadd.f32 %v2669, %v2741
  %2743 = vdwg.mxu0
  %2744 = vmatprep.subr.bf16.mxu0 %v1886
  %2745 = vmatpush1.bf16.msra.mxu0 %v1885
  %2746 = vmatprep.subr.bf16.mxu0 %v1888
  %2747 = vmatpush1.bf16.msra.mxu0 %v1887
  %2748 = vmatprep.subr.bf16.mxu0 %v1890
  %2749 = vmatpush1.bf16.msra.mxu0 %v1889
  %2750 = vmatprep.subr.bf16.mxu0 %v1892
  %2751 = vmatpush1.bf16.msra.mxu0 %v1891
  %2752 = vmatprep.subr.bf16.mxu0 %v1894
  %2753 = vmatpush1.bf16.msra.mxu0 %v1893
  %2754 = vmatprep.subr.bf16.mxu0 %v1896
  %2755 = vmatpush1.bf16.msra.mxu0 %v1895
  %2756 = vmatprep.subr.bf16.mxu0 %v1898
  %2757 = vmatpush1.bf16.msra.mxu0 %v1897
  %2758 = vmatprep.subr.bf16.mxu0 %v1900
  %2759 = vmatpush1.bf16.msra.mxu0 %v1899
  %2760 = vmatprep.subr.bf16.mxu0 %v1902
  %2761 = vmatpush1.bf16.msra.mxu0 %v1901
  %2762 = vmatprep.subr.bf16.mxu0 %v1904
  %2763 = vmatpush1.bf16.msra.mxu0 %v1903
  %2764 = vmatprep.subr.bf16.mxu0 %v1906
  %2765 = vmatpush1.bf16.msra.mxu0 %v1905
  %2766 = vmatprep.subr.bf16.mxu0 %v1908
  %2767 = vmatpush1.bf16.msra.mxu0 %v1907
  %2768 = vmatprep.subr.bf16.mxu0 %v1910
  %2769 = vmatpush1.bf16.msra.mxu0 %v1909
  %2770 = vmatprep.subr.bf16.mxu0 %v1912
  %2771 = vmatpush1.bf16.msra.mxu0 %v1911
  %2772 = vmatprep.subr.bf16.mxu0 %v1914
  %2773 = vmatpush1.bf16.msra.mxu0 %v1913
  %2774 = vmatprep.subr.bf16.mxu0 %v1916
  %2775 = vmatpush1.bf16.msra.mxu0 %v1915
  %2776 = vmatprep.mubr.bf16.mxu0 %v658
  %2777 = vmatmul.mubr.bf16.gmra.mrb[0].mxu0 %v657
  %v2778 = vpop.f32.mrb[0].mxu0
  %v2779 = vadd.f32 %v2706, %v2778
  %v2780 = vpop.f32.mrb[0].mxu0
  %v2781 = vadd.f32 %v2708, %v2780
  %v2782 = vpop.f32.mrb[0].mxu0
  %v2783 = vadd.f32 %v2710, %v2782
  %v2784 = vpop.f32.mrb[0].mxu0
  %v2785 = vadd.f32 %v2712, %v2784
  %2786 = vmatprep.mubr.bf16.mxu0 %v677
  %2787 = vmatmul.mubr.bf16.gmra.mrb[0].mxu0 %v676
  %v2788 = vpop.f32.mrb[0].mxu0
  %v2789 = vadd.f32 %v2716, %v2788
  %v2790 = vpop.f32.mrb[0].mxu0
  %v2791 = vadd.f32 %v2718, %v2790
  %v2792 = vpop.f32.mrb[0].mxu0
  %v2793 = vadd.f32 %v2720, %v2792
  %v2794 = vpop.f32.mrb[0].mxu0
  %v2795 = vadd.f32 %v2722, %v2794
  %2796 = vmatprep.mubr.bf16.mxu0 %v696
  %2797 = vmatmul.mubr.bf16.gmra.mrb[0].mxu0 %v695
  %v2798 = vpop.f32.mrb[0].mxu0
  %v2799 = vadd.f32 %v2726, %v2798
  %v2800 = vpop.f32.mrb[0].mxu0
  %v2801 = vadd.f32 %v2728, %v2800
  %v2802 = vpop.f32.mrb[0].mxu0
  %v2803 = vadd.f32 %v2730, %v2802
  %v2804 = vpop.f32.mrb[0].mxu0
  %v2805 = vadd.f32 %v2732, %v2804
  %2806 = vmatprep.mubr.bf16.mxu0 %v715
  %2807 = vmatmul.mubr.bf16.gmra.mrb[0].mxu0 %v714
  %v2808 = vpop.f32.mrb[0].mxu0
  %v2809 = vadd.f32 %v2736, %v2808
  %v2810 = vpop.f32.mrb[0].mxu0
  %v2811 = vadd.f32 %v2738, %v2810
  %v2812 = vpop.f32.mrb[0].mxu0
  %v2813 = vadd.f32 %v2740, %v2812
  %v2814 = vpop.f32.mrb[0].mxu0
  %v2815 = vadd.f32 %v2742, %v2814
  %2816 = vdwg.mxu0
  %2817 = vmatprep.subr.bf16.mxu0 %v1918
  %2818 = vmatpush1.bf16.msra.mxu0 %v1917
  %2819 = vmatprep.subr.bf16.mxu0 %v1920
  %2820 = vmatpush1.bf16.msra.mxu0 %v1919
  %2821 = vmatprep.subr.bf16.mxu0 %v1922
  %2822 = vmatpush1.bf16.msra.mxu0 %v1921
  %2823 = vmatprep.subr.bf16.mxu0 %v1924
  %2824 = vmatpush1.bf16.msra.mxu0 %v1923
  %2825 = vmatprep.subr.bf16.mxu0 %v1926
  %2826 = vmatpush1.bf16.msra.mxu0 %v1925
  %2827 = vmatprep.subr.bf16.mxu0 %v1928
  %2828 = vmatpush1.bf16.msra.mxu0 %v1927
  %2829 = vmatprep.subr.bf16.mxu0 %v1930
  %2830 = vmatpush1.bf16.msra.mxu0 %v1929
  %2831 = vmatprep.subr.bf16.mxu0 %v1932
  %2832 = vmatpush1.bf16.msra.mxu0 %v1931
  %2833 = vmatprep.subr.bf16.mxu0 %v1934
  %2834 = vmatpush1.bf16.msra.mxu0 %v1933
  %2835 = vmatprep.subr.bf16.mxu0 %v1936
  %2836 = vmatpush1.bf16.msra.mxu0 %v1935
  %2837 = vmatprep.subr.bf16.mxu0 %v1938
  %2838 = vmatpush1.bf16.msra.mxu0 %v1937
  %2839 = vmatprep.subr.bf16.mxu0 %v1940
  %2840 = vmatpush1.bf16.msra.mxu0 %v1939
  %2841 = vmatprep.subr.bf16.mxu0 %v1942
  %2842 = vmatpush1.bf16.msra.mxu0 %v1941
  %2843 = vmatprep.subr.bf16.mxu0 %v1944
  %2844 = vmatpush1.bf16.msra.mxu0 %v1943
  %2845 = vmatprep.subr.bf16.mxu0 %v1946
  %2846 = vmatpush1.bf16.msra.mxu0 %v1945
  %2847 = vmatprep.subr.bf16.mxu0 %v1948
  %2848 = vmatpush1.bf16.msra.mxu0 %v1947
  %2849 = vmatprep.mubr.bf16.mxu0 %v660
  %2850 = vmatmul.mubr.bf16.gmra.mrb[0].mxu0 %v659
  %v2851 = vpop.f32.mrb[0].mxu0
  %v2852 = vadd.f32 %v2779, %v2851
  %v2853 = vpop.f32.mrb[0].mxu0
  %v2854 = vadd.f32 %v2781, %v2853
  %v2855 = vpop.f32.mrb[0].mxu0
  %v2856 = vadd.f32 %v2783, %v2855
  %v2857 = vpop.f32.mrb[0].mxu0
  %v2858 = vadd.f32 %v2785, %v2857
  %2859 = vmatprep.mubr.bf16.mxu0 %v679
  %2860 = vmatmul.mubr.bf16.gmra.mrb[0].mxu0 %v678
  %v2861 = vpop.f32.mrb[0].mxu0
  %v2862 = vadd.f32 %v2789, %v2861
  %v2863 = vpop.f32.mrb[0].mxu0
  %v2864 = vadd.f32 %v2791, %v2863
  %v2865 = vpop.f32.mrb[0].mxu0
  %v2866 = vadd.f32 %v2793, %v2865
  %v2867 = vpop.f32.mrb[0].mxu0
  %v2868 = vadd.f32 %v2795, %v2867
  %2869 = vmatprep.mubr.bf16.mxu0 %v698
  %2870 = vmatmul.mubr.bf16.gmra.mrb[0].mxu0 %v697
  %v2871 = vpop.f32.mrb[0].mxu0
  %v2872 = vadd.f32 %v2799, %v2871
  %v2873 = vpop.f32.mrb[0].mxu0
  %v2874 = vadd.f32 %v2801, %v2873
  %v2875 = vpop.f32.mrb[0].mxu0
  %v2876 = vadd.f32 %v2803, %v2875
  %v2877 = vpop.f32.mrb[0].mxu0
  %v2878 = vadd.f32 %v2805, %v2877
  %2879 = vmatprep.mubr.bf16.mxu0 %v717
  %2880 = vmatmul.mubr.bf16.gmra.mrb[0].mxu0 %v716
  %v2881 = vpop.f32.mrb[0].mxu0
  %v2882 = vadd.f32 %v2809, %v2881
  %v2883 = vpop.f32.mrb[0].mxu0
  %v2884 = vadd.f32 %v2811, %v2883
  %v2885 = vpop.f32.mrb[0].mxu0
  %v2886 = vadd.f32 %v2813, %v2885
  %v2887 = vpop.f32.mrb[0].mxu0
  %v2888 = vadd.f32 %v2815, %v2887
  %2889 = vdwg.mxu0
  %2890 = vmatprep.subr.bf16.mxu0 %v1950
  %2891 = vmatpush1.bf16.msra.mxu0 %v1949
  %2892 = vmatprep.subr.bf16.mxu0 %v1952
  %2893 = vmatpush1.bf16.msra.mxu0 %v1951
  %2894 = vmatprep.subr.bf16.mxu0 %v1954
  %2895 = vmatpush1.bf16.msra.mxu0 %v1953
  %2896 = vmatprep.subr.bf16.mxu0 %v1956
  %2897 = vmatpush1.bf16.msra.mxu0 %v1955
  %2898 = vmatprep.subr.bf16.mxu0 %v1958
  %2899 = vmatpush1.bf16.msra.mxu0 %v1957
  %2900 = vmatprep.subr.bf16.mxu0 %v1960
  %2901 = vmatpush1.bf16.msra.mxu0 %v1959
  %2902 = vmatprep.subr.bf16.mxu0 %v1962
  %2903 = vmatpush1.bf16.msra.mxu0 %v1961
  %2904 = vmatprep.subr.bf16.mxu0 %v1964
  %2905 = vmatpush1.bf16.msra.mxu0 %v1963
  %2906 = vmatprep.subr.bf16.mxu0 %v1966
  %2907 = vmatpush1.bf16.msra.mxu0 %v1965
  %2908 = vmatprep.subr.bf16.mxu0 %v1968
  %2909 = vmatpush1.bf16.msra.mxu0 %v1967
  %2910 = vmatprep.subr.bf16.mxu0 %v1970
  %2911 = vmatpush1.bf16.msra.mxu0 %v1969
  %2912 = vmatprep.subr.bf16.mxu0 %v1972
  %2913 = vmatpush1.bf16.msra.mxu0 %v1971
  %2914 = vmatprep.subr.bf16.mxu0 %v1974
  %2915 = vmatpush1.bf16.msra.mxu0 %v1973
  %2916 = vmatprep.subr.bf16.mxu0 %v1976
  %2917 = vmatpush1.bf16.msra.mxu0 %v1975
  %2918 = vmatprep.subr.bf16.mxu0 %v1978
  %2919 = vmatpush1.bf16.msra.mxu0 %v1977
  %2920 = vmatprep.subr.bf16.mxu0 %v1980
  %2921 = vmatpush1.bf16.msra.mxu0 %v1979
  %2922 = vmatprep.mubr.bf16.mxu0 %v662
  %2923 = vmatmul.mubr.bf16.gmra.mrb[0].mxu0 %v661
  %v2924 = vpop.f32.mrb[0].mxu0
  %v2925 = vadd.f32 %v2852, %v2924
  %v2926 = vpop.f32.mrb[0].mxu0
  %v2927 = vadd.f32 %v2854, %v2926
  %v2928 = vpop.f32.mrb[0].mxu0
  %v2929 = vadd.f32 %v2856, %v2928
  %v2930 = vpop.f32.mrb[0].mxu0
  %v2931 = vadd.f32 %v2858, %v2930
  %2932 = vmatprep.mubr.bf16.mxu0 %v681
  %2933 = vmatmul.mubr.bf16.gmra.mrb[0].mxu0 %v680
  %v2934 = vpop.f32.mrb[0].mxu0
  %v2935 = vadd.f32 %v2862, %v2934
  %v2936 = vpop.f32.mrb[0].mxu0
  %v2937 = vadd.f32 %v2864, %v2936
  %v2938 = vpop.f32.mrb[0].mxu0
  %v2939 = vadd.f32 %v2866, %v2938
  %v2940 = vpop.f32.mrb[0].mxu0
  %v2941 = vadd.f32 %v2868, %v2940
  %2942 = vmatprep.mubr.bf16.mxu0 %v700
  %2943 = vmatmul.mubr.bf16.gmra.mrb[0].mxu0 %v699
  %v2944 = vpop.f32.mrb[0].mxu0
  %v2945 = vadd.f32 %v2872, %v2944
  %v2946 = vpop.f32.mrb[0].mxu0
  %v2947 = vadd.f32 %v2874, %v2946
  %v2948 = vpop.f32.mrb[0].mxu0
  %v2949 = vadd.f32 %v2876, %v2948
  %v2950 = vpop.f32.mrb[0].mxu0
  %v2951 = vadd.f32 %v2878, %v2950
  %2952 = vmatprep.mubr.bf16.mxu0 %v719
  %2953 = vmatmul.mubr.bf16.gmra.mrb[0].mxu0 %v718
  %v2954 = vpop.f32.mrb[0].mxu0
  %v2955 = vadd.f32 %v2882, %v2954
  %v2956 = vpop.f32.mrb[0].mxu0
  %v2957 = vadd.f32 %v2884, %v2956
  %v2958 = vpop.f32.mrb[0].mxu0
  %v2959 = vadd.f32 %v2886, %v2958
  %v2960 = vpop.f32.mrb[0].mxu0
  %v2961 = vadd.f32 %v2888, %v2960
  %2962 = vdwg.mxu0
  %2963 = vmatprep.subr.bf16.mxu0 %v1982
  %2964 = vmatpush1.bf16.msra.mxu0 %v1981
  %2965 = vmatprep.subr.bf16.mxu0 %v1984
  %2966 = vmatpush1.bf16.msra.mxu0 %v1983
  %2967 = vmatprep.subr.bf16.mxu0 %v1986
  %2968 = vmatpush1.bf16.msra.mxu0 %v1985
  %2969 = vmatprep.subr.bf16.mxu0 %v1988
  %2970 = vmatpush1.bf16.msra.mxu0 %v1987
  %2971 = vmatprep.subr.bf16.mxu0 %v1990
  %2972 = vmatpush1.bf16.msra.mxu0 %v1989
  %2973 = vmatprep.subr.bf16.mxu0 %v1992
  %2974 = vmatpush1.bf16.msra.mxu0 %v1991
  %2975 = vmatprep.subr.bf16.mxu0 0
  %2976 = vmatpush1.bf16.msra.mxu0 0
  %2977 = vmatprep.subr.bf16.mxu0 0
  %2978 = vmatpush1.bf16.msra.mxu0 0
  %2979 = vmatprep.subr.bf16.mxu0 0
  %2980 = vmatpush1.bf16.msra.mxu0 0
  %2981 = vmatprep.subr.bf16.mxu0 0
  %2982 = vmatpush1.bf16.msra.mxu0 0
  %2983 = vmatprep.subr.bf16.mxu0 0
  %2984 = vmatpush1.bf16.msra.mxu0 0
  %2985 = vmatprep.subr.bf16.mxu0 0
  %2986 = vmatpush1.bf16.msra.mxu0 0
  %2987 = vmatprep.subr.bf16.mxu0 0
  %2988 = vmatpush1.bf16.msra.mxu0 0
  %2989 = vmatprep.subr.bf16.mxu0 0
  %2990 = vmatpush1.bf16.msra.mxu0 0
  %2991 = vmatprep.subr.bf16.mxu0 0
  %2992 = vmatpush1.bf16.msra.mxu0 0
  %2993 = vmatprep.subr.bf16.mxu0 0
  %2994 = vmatpush1.bf16.msra.mxu0 0
  %2995 = vmatprep.mubr.bf16.mxu0 0
  %2996 = vmatmul.mubr.bf16.gmra.mrb[0].mxu0 %v2295
  %v2997 = vpop.f32.mrb[0].mxu0
  %v2998 = vadd.f32 %v2925, %v2997
  %v2999 = vpop.f32.mrb[0].mxu0
  %v3000 = vadd.f32 %v2927, %v2999
  %v3001 = vpop.f32.mrb[0].mxu0
  %v3002 = vadd.f32 %v2929, %v3001
  %v3003 = vpop.f32.mrb[0].mxu0
  %v3004 = vadd.f32 %v2931, %v3003
  %3005 = vmatprep.mubr.bf16.mxu0 0
  %3006 = vmatmul.mubr.bf16.gmra.mrb[0].mxu0 %v2298
  %v3007 = vpop.f32.mrb[0].mxu0
  %v3008 = vadd.f32 %v2935, %v3007
  %v3009 = vpop.f32.mrb[0].mxu0
  %v3010 = vadd.f32 %v2937, %v3009
  %v3011 = vpop.f32.mrb[0].mxu0
  %v3012 = vadd.f32 %v2939, %v3011
  %v3013 = vpop.f32.mrb[0].mxu0
  %v3014 = vadd.f32 %v2941, %v3013
  %3015 = vmatprep.mubr.bf16.mxu0 0
  %3016 = vmatmul.mubr.bf16.gmra.mrb[0].mxu0 %v2301
  %v3017 = vpop.f32.mrb[0].mxu0
  %v3018 = vadd.f32 %v2945, %v3017
  %v3019 = vpop.f32.mrb[0].mxu0
  %v3020 = vadd.f32 %v2947, %v3019
  %v3021 = vpop.f32.mrb[0].mxu0
  %v3022 = vadd.f32 %v2949, %v3021
  %v3023 = vpop.f32.mrb[0].mxu0
  %v3024 = vadd.f32 %v2951, %v3023
  %3025 = vmatprep.mubr.bf16.mxu0 0
  %3026 = vmatmul.mubr.bf16.gmra.mrb[0].mxu0 %v2304
  %v3027 = vpop.f32.mrb[0].mxu0
  %v3028 = vadd.f32 %v2955, %v3027
  %v3029 = vpop.f32.mrb[0].mxu0
  %v3030 = vadd.f32 %v2957, %v3029
  %v3031 = vpop.f32.mrb[0].mxu0
  %v3032 = vadd.f32 %v2959, %v3031
  %v3033 = vpop.f32.mrb[0].mxu0
  %v3034 = vadd.f32 %v2961, %v3033
  %3035 = vdwg.mxu0
  %v3036 = vmax.f32 %v2998, %v3008
  %v3037 = vmax.f32 %v3000, %v3010
  %v3038 = vmax.f32 %v3002, %v3012
  %v3039 = vmax.f32 %v3004, %v3014
  %v3040 = vmax.f32 %v3018, %v3028
  %v3041 = vmax.f32 %v3020, %v3030
  %v3042 = vmax.f32 %v3022, %v3032
  %v3043 = vmax.f32 %v3024, %v3034
  %v3044 = vmax.f32 %v3036, %v3040
  %v3045 = vmax.f32 %v3037, %v3041
  %v3046 = vmax.f32 %v3038, %v3042
  %v3047 = vmax.f32 %v3039, %v3043
  %v3048 = vld [vmem:[%s2] sm:$0x3]
  %v3050 = vlaneseq
  %v3051 = vshrl.u32 %v3050, 7
  %v3052 = vsub.s32 0, %v3051
  %v3053 = vrot.slane %v3048, %v3052
  %v3054 = vlaneseq
  %v3055 = vshrl.u32 %v3054, 7
  %v3056 = vsub.s32 1, %v3055
  %v3057 = vrot.slane %v3048, %v3056
  %v3060 = vadd.f32 %v3044, %v3053
  %v3061 = vadd.f32 %v3045, %v3057
  %v3062 = vadd.f32 %v3046, %v3053
  %v3063 = vadd.f32 %v3047, %v3057
  %v3064 = vmax.f32 %v3060, 0.0
  %v3065 = vmax.f32 %v3061, 0.0
  %v3066 = vmax.f32 %v3062, 0.0
  %v3067 = vmax.f32 %v3063, 0.0
  %v3068 = vpack.c.bf16 %v3066, %v3064
  %v3069 = vpack.c.bf16 %v3067, %v3065
  %v3070 = vld [vmem:[%s3] sm:$0xf]
  %v3071 = vld [vmem:[%s3 + $0x4] sm:$0xf]
  %v3072 = vld [vmem:[%s3 + $0x8] sm:$0xf]
  %v3073 = vld [vmem:[%s3 + $0xc] sm:$0xf]
  %v3074 = vld [vmem:[%s3 + $0x10] sm:$0xf]
  %v3075 = vld [vmem:[%s3 + $0x14] sm:$0xf]
  %v3076 = vld [vmem:[%s3 + $0x18] sm:$0xf]
  %v3077 = vld [vmem:[%s3 + $0x1c] sm:$0xf]
  %v3078 = vld [vmem:[%s3 + $0x20] sm:$0xf]
  %v3079 = vld [vmem:[%s3 + $0x24] sm:$0xf]
  %v3080 = vld [vmem:[%s3 + $0x28] sm:$0xf]
  %v3081 = vld [vmem:[%s3 + $0x2c] sm:$0xf]
  %v3082 = vld [vmem:[%s3 + $0x30] sm:$0xf]
  %v3083 = vld [vmem:[%s3 + $0x34] sm:$0xf]
  %v3084 = vld [vmem:[%s3 + $0x38] sm:$0xf]
  %v3085 = vld [vmem:[%s3 + $0x3c] sm:$0xf]
  %v3086 = vld [vmem:[%s3 + $0x40] sm:$0xf]
  %v3087 = vld [vmem:[%s3 + $0x44] sm:$0xf]
  %v3088 = vld [vmem:[%s3 + $0x48] sm:$0xf]
  %v3089 = vld [vmem:[%s3 + $0x4c] sm:$0xf]
  %v3090 = vld [vmem:[%s3 + $0x50] sm:$0xf]
  %v3091 = vld [vmem:[%s3 + $0x54] sm:$0xf]
  %v3092 = vld [vmem:[%s3 + $0x58] sm:$0xf]
  %v3093 = vld [vmem:[%s3 + $0x5c] sm:$0xf]
  %v3094 = vld [vmem:[%s3 + $0x60] sm:$0xf]
  %v3095 = vld [vmem:[%s3 + $0x64] sm:$0xf]
  %v3096 = vld [vmem:[%s3 + $0x68] sm:$0xf]
  %v3097 = vld [vmem:[%s3 + $0x6c] sm:$0xf]
  %v3098 = vld [vmem:[%s3 + $0x70] sm:$0xf]
  %v3099 = vld [vmem:[%s3 + $0x74] sm:$0xf]
  %v3100 = vld [vmem:[%s3 + $0x78] sm:$0xf]
  %v3101 = vld [vmem:[%s3 + $0x7c] sm:$0xf]
  %v3102 = vld [vmem:[%s4] sm:$0x1]
  %v3104 = vlaneseq
  %v3105 = vshrl.u32 %v3104, 7
  %v3106 = vsub.s32 0, %v3105
  %v3107 = vrot.slane %v3102, %v3106
  %v3141 = vunpack.c.l.b16 %v3070
  %v3142 = vunpack.c.l.b16 %v3071
  %v3143 = vunpack.c.l.b16 %v3072
  %v3144 = vunpack.c.l.b16 %v3073
  %v3145 = vunpack.c.l.b16 %v3074
  %v3146 = vunpack.c.l.b16 %v3075
  %v3147 = vunpack.c.l.b16 %v3076
  %v3148 = vunpack.c.l.b16 %v3077
  %v3149 = vunpack.c.l.b16 %v3078
  %v3150 = vunpack.c.l.b16 %v3079
  %v3151 = vunpack.c.l.b16 %v3080
  %v3152 = vunpack.c.l.b16 %v3081
  %v3153 = vunpack.c.l.b16 %v3082
  %v3154 = vunpack.c.l.b16 %v3083
  %v3155 = vunpack.c.l.b16 %v3084
  %v3156 = vunpack.c.l.b16 %v3085
  %v3157 = vunpack.c.l.b16 %v3086
  %v3158 = vunpack.c.l.b16 %v3087
  %v3159 = vunpack.c.l.b16 %v3088
  %v3160 = vunpack.c.l.b16 %v3089
  %v3161 = vunpack.c.l.b16 %v3090
  %v3162 = vunpack.c.l.b16 %v3091
  %v3163 = vunpack.c.l.b16 %v3092
  %v3164 = vunpack.c.l.b16 %v3093
  %v3165 = vunpack.c.l.b16 %v3094
  %v3166 = vunpack.c.l.b16 %v3095
  %v3167 = vunpack.c.l.b16 %v3096
  %v3168 = vunpack.c.l.b16 %v3097
  %v3169 = vunpack.c.l.b16 %v3098
  %v3170 = vunpack.c.l.b16 %v3099
  %v3171 = vunpack.c.l.b16 %v3100
  %v3172 = vunpack.c.l.b16 %v3101
  %v3173 = vpack.c.b16 %v3142, %v3141
  %v3174 = vpack.c.b16 %v3144, %v3143
  %v3175 = vpack.c.b16 %v3146, %v3145
  %v3176 = vpack.c.b16 %v3148, %v3147
  %v3177 = vpack.c.b16 %v3150, %v3149
  %v3178 = vpack.c.b16 %v3152, %v3151
  %v3179 = vpack.c.b16 %v3154, %v3153
  %v3180 = vpack.c.b16 %v3156, %v3155
  %v3181 = vpack.c.b16 %v3158, %v3157
  %v3182 = vpack.c.b16 %v3160, %v3159
  %v3183 = vpack.c.b16 %v3162, %v3161
  %v3184 = vpack.c.b16 %v3164, %v3163
  %v3185 = vpack.c.b16 %v3166, %v3165
  %v3186 = vpack.c.b16 %v3168, %v3167
  %v3187 = vpack.c.b16 %v3170, %v3169
  %v3188 = vpack.c.b16 %v3172, %v3171
  %3205 = vmatprep.subr.bf16.mxu0 0
  %3206 = vmatpush1.bf16.msra.mxu0 %v3173
  %3207 = vmatprep.subr.bf16.mxu0 0
  %3208 = vmatpush1.bf16.msra.mxu0 %v3174
  %3209 = vmatprep.subr.bf16.mxu0 0
  %3210 = vmatpush1.bf16.msra.mxu0 %v3175
  %3211 = vmatprep.subr.bf16.mxu0 0
  %3212 = vmatpush1.bf16.msra.mxu0 %v3176
  %3213 = vmatprep.subr.bf16.mxu0 0
  %3214 = vmatpush1.bf16.msra.mxu0 %v3177
  %3215 = vmatprep.subr.bf16.mxu0 0
  %3216 = vmatpush1.bf16.msra.mxu0 %v3178
  %3217 = vmatprep.subr.bf16.mxu0 0
  %3218 = vmatpush1.bf16.msra.mxu0 %v3179
  %3219 = vmatprep.subr.bf16.mxu0 0
  %3220 = vmatpush1.bf16.msra.mxu0 %v3180
  %3221 = vmatprep.subr.bf16.mxu0 0
  %3222 = vmatpush1.bf16.msra.mxu0 %v3181
  %3223 = vmatprep.subr.bf16.mxu0 0
  %3224 = vmatpush1.bf16.msra.mxu0 %v3182
  %3225 = vmatprep.subr.bf16.mxu0 0
  %3226 = vmatpush1.bf16.msra.mxu0 %v3183
  %3227 = vmatprep.subr.bf16.mxu0 0
  %3228 = vmatpush1.bf16.msra.mxu0 %v3184
  %3229 = vmatprep.subr.bf16.mxu0 0
  %3230 = vmatpush1.bf16.msra.mxu0 %v3185
  %3231 = vmatprep.subr.bf16.mxu0 0
  %3232 = vmatpush1.bf16.msra.mxu0 %v3186
  %3233 = vmatprep.subr.bf16.mxu0 0
  %3234 = vmatpush1.bf16.msra.mxu0 %v3187
  %3235 = vmatprep.subr.bf16.mxu0 0
  %3236 = vmatpush1.bf16.msra.mxu0 %v3188
  %3237 = vmatprep.mubr.bf16.mxu0 %v3069
  %3238 = vmatmul.mubr.bf16.gmra.mrb[0].mxu0 %v3068
  %v3239 = vpop.f32.mrb[0].mxu0
  %v3240 = vadd.f32 %v3107, %v3239
  %v3241 = vpop.f32.mrb[0].mxu0
  %v3242 = vpop.f32.mrb[0].mxu0
  %v3243 = vadd.f32 %v3107, %v3242
  %v3244 = vpop.f32.mrb[0].mxu0
  %3245 = vdwg.mxu0
  %v3246 = vmax.f32 %v3240, 0.0
  %v3247 = vmax.f32 %v3243, 0.0
  %v3248 = vpack.c.bf16 %v3247, %v3246
  %v3249 = vld [vmem:[%s5] sm:$0xf]
  %v3250 = vld [vmem:[%s5 + $0x4] sm:$0xf]
  %v3251 = vld [vmem:[%s5 + $0x8] sm:$0xf]
  %v3252 = vld [vmem:[%s5 + $0xc] sm:$0xf]
  %v3253 = vld [vmem:[%s5 + $0x10] sm:$0xf]
  %v3254 = vld [vmem:[%s5 + $0x14] sm:$0xf]
  %v3255 = vld [vmem:[%s5 + $0x18] sm:$0xf]
  %v3256 = vld [vmem:[%s5 + $0x1c] sm:$0xf]
  %v3257 = vld [vmem:[%s5 + $0x20] sm:$0xf]
  %v3258 = vld [vmem:[%s5 + $0x24] sm:$0xf]
  %v3259 = vld [vmem:[%s5 + $0x28] sm:$0xf]
  %v3260 = vld [vmem:[%s5 + $0x2c] sm:$0xf]
  %v3261 = vld [vmem:[%s5 + $0x30] sm:$0xf]
  %v3262 = vld [vmem:[%s5 + $0x34] sm:$0xf]
  %v3263 = vld [vmem:[%s5 + $0x38] sm:$0xf]
  %v3264 = vld [vmem:[%s5 + $0x3c] sm:$0xf]
  %v3265 = vld [vmem:[%s6] sm:$0x1]
  %v3267 = vlaneseq
  %v3268 = vshrl.u32 %v3267, 7
  %v3269 = vsub.s32 0, %v3268
  %v3270 = vrot.slane %v3265, %v3269
  %v3288 = vunpack.c.l.b16 %v3249
  %v3289 = vunpack.c.l.b16 %v3250
  %v3290 = vunpack.c.l.b16 %v3251
  %v3291 = vunpack.c.l.b16 %v3252
  %v3292 = vunpack.c.l.b16 %v3253
  %v3293 = vunpack.c.l.b16 %v3254
  %v3294 = vunpack.c.l.b16 %v3255
  %v3295 = vunpack.c.l.b16 %v3256
  %v3296 = vunpack.c.l.b16 %v3257
  %v3297 = vunpack.c.l.b16 %v3258
  %v3298 = vunpack.c.l.b16 %v3259
  %v3299 = vunpack.c.l.b16 %v3260
  %v3300 = vunpack.c.l.b16 %v3261
  %v3301 = vunpack.c.l.b16 %v3262
  %v3302 = vunpack.c.l.b16 %v3263
  %v3303 = vunpack.c.l.b16 %v3264
  %v3304 = vpack.c.b16 %v3289, %v3288
  %v3305 = vpack.c.b16 %v3291, %v3290
  %v3306 = vpack.c.b16 %v3293, %v3292
  %v3307 = vpack.c.b16 %v3295, %v3294
  %v3308 = vpack.c.b16 %v3297, %v3296
  %v3309 = vpack.c.b16 %v3299, %v3298
  %v3310 = vpack.c.b16 %v3301, %v3300
  %v3311 = vpack.c.b16 %v3303, %v3302
  %3320 = vmatprep.subr.bf16.mxu0 0
  %3321 = vmatpush1.bf16.msra.mxu0 %v3304
  %3322 = vmatprep.subr.bf16.mxu0 0
  %3323 = vmatpush1.bf16.msra.mxu0 %v3305
  %3324 = vmatprep.subr.bf16.mxu0 0
  %3325 = vmatpush1.bf16.msra.mxu0 %v3306
  %3326 = vmatprep.subr.bf16.mxu0 0
  %3327 = vmatpush1.bf16.msra.mxu0 %v3307
  %3328 = vmatprep.subr.bf16.mxu0 0
  %3329 = vmatpush1.bf16.msra.mxu0 %v3308
  %3330 = vmatprep.subr.bf16.mxu0 0
  %3331 = vmatpush1.bf16.msra.mxu0 %v3309
  %3332 = vmatprep.subr.bf16.mxu0 0
  %3333 = vmatpush1.bf16.msra.mxu0 %v3310
  %3334 = vmatprep.subr.bf16.mxu0 0
  %3335 = vmatpush1.bf16.msra.mxu0 %v3311
  %3336 = vmatprep.subr.bf16.mxu0 0
  %3337 = vmatpush1.bf16.msra.mxu0 0
  %3338 = vmatprep.subr.bf16.mxu0 0
  %3339 = vmatpush1.bf16.msra.mxu0 0
  %3340 = vmatprep.subr.bf16.mxu0 0
  %3341 = vmatpush1.bf16.msra.mxu0 0
  %3342 = vmatprep.subr.bf16.mxu0 0
  %3343 = vmatpush1.bf16.msra.mxu0 0
  %3344 = vmatprep.subr.bf16.mxu0 0
  %3345 = vmatpush1.bf16.msra.mxu0 0
  %3346 = vmatprep.subr.bf16.mxu0 0
  %3347 = vmatpush1.bf16.msra.mxu0 0
  %3348 = vmatprep.subr.bf16.mxu0 0
  %3349 = vmatpush1.bf16.msra.mxu0 0
  %3350 = vmatprep.subr.bf16.mxu0 0
  %3351 = vmatpush1.bf16.msra.mxu0 0
  %3352 = vmatprep.mubr.bf16.mxu0 0
  %3353 = vmatmul.mubr.bf16.gmra.mrb[0].mxu0 %v3248
  %v3354 = vpop.f32.mrb[0].mxu0
  %v3355 = vadd.f32 %v3270, %v3354
  %v3356 = vpop.f32.mrb[0].mxu0
  %v3357 = vpop.f32.mrb[0].mxu0
  %v3358 = vadd.f32 %v3270, %v3357
  %v3359 = vpop.f32.mrb[0].mxu0
  %3360 = vdwg.mxu0
  %v3361 = vmax.f32 %v3355, 0.0
  %v3362 = vmax.f32 %v3358, 0.0
  %v3363 = vpack.c.bf16 %v3362, %v3361
  %v3364 = vld [vmem:[%s7] sm:$0xf]
  %v3365 = vld [vmem:[%s7 + $0x4] sm:$0xf]
  %v3366 = vld [vmem:[%s7 + $0x8] sm:$0xf]
  %v3367 = vld [vmem:[%s7 + $0xc] sm:$0xf]
  %v3368 = vld [vmem:[%s7 + $0x10] sm:$0xf]
  %v3369 = vld [vmem:[%s7 + $0x14] sm:$0xf]
  %v3370 = vld [vmem:[%s7 + $0x18] sm:$0xf]
  %v3371 = vld [vmem:[%s7 + $0x1c] sm:$0xf]
  %v3372 = vld [vmem:[%s7 + $0x20] sm:$0xf]
  %v3373 = vld [vmem:[%s7 + $0x24] sm:$0xf]
  %v3374 = vld [vmem:[%s7 + $0x28] sm:$0xf]
  %v3375 = vld [vmem:[%s7 + $0x2c] sm:$0xf]
  %v3376 = vld [vmem:[%s7 + $0x30] sm:$0xf]
  %v3377 = vld [vmem:[%s7 + $0x34] sm:$0xf]
  %v3378 = vld [vmem:[%s7 + $0x38] sm:$0xf]
  %v3379 = vld [vmem:[%s7 + $0x3c] sm:$0xf]
  %v3380 = vld [vmem:[%s8] sm:$0x1]
  %v3382 = vlaneseq
  %v3383 = vshrl.u32 %v3382, 7
  %v3384 = vsub.s32 0, %v3383
  %v3385 = vrot.slane %v3380, %v3384
  %v3403 = vunpack.c.l.b16 %v3364
  %v3404 = vunpack.c.l.b16 %v3365
  %v3405 = vunpack.c.l.b16 %v3366
  %v3406 = vunpack.c.l.b16 %v3367
  %v3407 = vunpack.c.l.b16 %v3368
  %v3408 = vunpack.c.l.b16 %v3369
  %v3409 = vunpack.c.l.b16 %v3370
  %v3410 = vunpack.c.l.b16 %v3371
  %v3411 = vunpack.c.l.b16 %v3372
  %v3412 = vunpack.c.l.b16 %v3373
  %v3413 = vunpack.c.l.b16 %v3374
  %v3414 = vunpack.c.l.b16 %v3375
  %v3415 = vunpack.c.l.b16 %v3376
  %v3416 = vunpack.c.l.b16 %v3377
  %v3417 = vunpack.c.l.b16 %v3378
  %v3418 = vunpack.c.l.b16 %v3379
  %v3419 = vpack.c.b16 %v3404, %v3403
  %v3420 = vpack.c.b16 %v3406, %v3405
  %v3421 = vpack.c.b16 %v3408, %v3407
  %v3422 = vpack.c.b16 %v3410, %v3409
  %v3423 = vpack.c.b16 %v3412, %v3411
  %v3424 = vpack.c.b16 %v3414, %v3413
  %v3425 = vpack.c.b16 %v3416, %v3415
  %v3426 = vpack.c.b16 %v3418, %v3417
  %3435 = vmatprep.subr.bf16.mxu0 0
  %3436 = vmatpush1.bf16.msra.mxu0 %v3419
  %3437 = vmatprep.subr.bf16.mxu0 0
  %3438 = vmatpush1.bf16.msra.mxu0 %v3420
  %3439 = vmatprep.subr.bf16.mxu0 0
  %3440 = vmatpush1.bf16.msra.mxu0 %v3421
  %3441 = vmatprep.subr.bf16.mxu0 0
  %3442 = vmatpush1.bf16.msra.mxu0 %v3422
  %3443 = vmatprep.subr.bf16.mxu0 0
  %3444 = vmatpush1.bf16.msra.mxu0 %v3423
  %3445 = vmatprep.subr.bf16.mxu0 0
  %3446 = vmatpush1.bf16.msra.mxu0 %v3424
  %3447 = vmatprep.subr.bf16.mxu0 0
  %3448 = vmatpush1.bf16.msra.mxu0 %v3425
  %3449 = vmatprep.subr.bf16.mxu0 0
  %3450 = vmatpush1.bf16.msra.mxu0 %v3426
  %3451 = vmatprep.subr.bf16.mxu0 0
  %3452 = vmatpush1.bf16.msra.mxu0 0
  %3453 = vmatprep.subr.bf16.mxu0 0
  %3454 = vmatpush1.bf16.msra.mxu0 0
  %3455 = vmatprep.subr.bf16.mxu0 0
  %3456 = vmatpush1.bf16.msra.mxu0 0
  %3457 = vmatprep.subr.bf16.mxu0 0
  %3458 = vmatpush1.bf16.msra.mxu0 0
  %3459 = vmatprep.subr.bf16.mxu0 0
  %3460 = vmatpush1.bf16.msra.mxu0 0
  %3461 = vmatprep.subr.bf16.mxu0 0
  %3462 = vmatpush1.bf16.msra.mxu0 0
  %3463 = vmatprep.subr.bf16.mxu0 0
  %3464 = vmatpush1.bf16.msra.mxu0 0
  %3465 = vmatprep.subr.bf16.mxu0 0
  %3466 = vmatpush1.bf16.msra.mxu0 0
  %3467 = vmatprep.mubr.bf16.mxu0 0
  %3468 = vmatmul.mubr.bf16.gmra.mrb[0].mxu0 %v3363
  %v3469 = vpop.f32.mrb[0].mxu0
  %v3470 = vadd.f32 %v3385, %v3469
  %v3471 = vpop.f32.mrb[0].mxu0
  %v3472 = vpop.f32.mrb[0].mxu0
  %v3473 = vadd.f32 %v3385, %v3472
  %v3474 = vpop.f32.mrb[0].mxu0
  %3475 = vdwg.mxu0
  %3476 = vst [vmem:[%s9] sm:$0xff] %v3470
  %3477 = vst [vmem:[%s9 + $0x8] sm:$0xff] %v3473
  // Predicated region
  $region38: #{lenet5_forward.3} parent=0 // pred_check
    _
  $region39: #{lenet5_forward.3} parent=0 // pred_check_branch
    %3479 = sbr.rel (0) target = $region41
  $region40: #{lenet5_forward.3} parent=0 // pred_region
    _
  $region41: #{lenet5_forward.3} parent=0 // pred_fallthru
    _
  // Predicated region
  $region42: #{lenet5_forward.3} parent=0 // pred_check
    _
  $region43: #{lenet5_forward.3} parent=0 // pred_check_branch
    %3481 = sbr.rel (0) target = $region45
  $region44: #{lenet5_forward.3} parent=0 // pred_region
    _
  $region45: #{lenet5_forward.3} parent=0 // pred_fallthru
    _

</llo_original>
